<compile_context>
chip_gen: v5e
topology: v5e:2x2
jax: 0.10.0
libtpu: 0.0.40
codegen_flags: <defaults>
</compile_context>

<pallas_src>
import functools

import jax
import jax.numpy as jnp
from jax.experimental import pallas as pl
from jax.experimental.pallas import tpu as pltpu


def _round_up(x, m):
    return (x + m - 1) // m * m


def gaussian_backend_kernel(x12_ref, wT_ref, b_ref,
                            mu_t_ref, ci_t_ref, mu_nt_ref, ci_nt_ref,
                            s_ref):
    _, tb, xdim_p = x12_ref.shape

    # ---- fused centering_and_LDA for BOTH utterances in one MXU matmul ----
    # Free leading-dim merge: [2, tb, xdim_p] -> [2*tb, xdim_p]
    # (tb % 8 == 0, last dim unchanged -> no tile-boundary crossing).
    xx = x12_ref[...].reshape(2 * tb, xdim_p)
    # Operands are already in compute dtype (bf16 by default); f32 accumulate.
    y = jnp.dot(xx, wT_ref[...], preferred_element_type=jnp.float32) + b_ref[...]

    # ---- F.normalize(y, p=2, dim=1, eps=1e-12) via rsqrt (EUP slot) ----
    # rsqrt(max(ssq, eps^2)) == 1 / max(||y||, eps)
    ssq = jnp.sum(y * y, axis=1, keepdims=True)
    y = y * jax.lax.rsqrt(jnp.maximum(ssq, 1e-24))

    # ---- paired embedding; concat boundary is 128-lane aligned ----
    x = jnp.concatenate([y[:tb, :], y[tb:, :]], axis=1)        # [tb, 2*lda_p]

    # ---- Gaussian scores: S = St - Snt, St = -d_t C_t d_t^T (rowwise) ----
    qdt = ci_t_ref.dtype                     # f32 by default (see header note)
    d_t = x - mu_t_ref[...]
    q_t = jnp.sum(jnp.dot(d_t.astype(qdt), ci_t_ref[...],
                          preferred_element_type=jnp.float32) * d_t,
                  axis=1, keepdims=True)
    d_n = x - mu_nt_ref[...]
    q_n = jnp.sum(jnp.dot(d_n.astype(qdt), ci_nt_ref[...],
                          preferred_element_type=jnp.float32) * d_n,
                  axis=1, keepdims=True)

    s_ref[...] = q_n - q_t


def gaussian_backend(x1, x2, weight, bias, mu_t, cinv_t, mu_nt, cinv_nt,
                     *, tb=None, compute_dtype=jnp.bfloat16,
                     quad_dtype=jnp.float32, lane=128):
    """x1, x2: [B, xdim] f32.  weight: [LDA, xdim], bias: [LDA].
    mu_*: [2*LDA], cinv_*: [2*LDA, 2*LDA].  Returns S: [B] f32.

    compute_dtype: MXU operand dtype for the projection (output is L2
        normalized -> bf16 safe).  quad_dtype: operand dtype for the two
        covariance dots (keep f32; see header).
    tb: batch rows per grid step (multiple of 8).  Default keeps grid >= 2
        (v7x megacore) and caps at 512 rows."""
    B, xdim = x1.shape
    lda = weight.shape[0]
    f32 = jnp.float32

    xdim_p = _round_up(xdim, lane)
    lda_p = _round_up(lda, lane)
    two_lda_p = 2 * lda_p

    if tb is None:
        tb = min(512, _round_up(max(pl.cdiv(B, 2), 8), 8))
    tb = _round_up(max(8, min(tb, max(B, 8))), 8)
    b_p = _round_up(B, tb)
    grid = b_p // tb

    # ---- inputs: pad + stack host-side, already in projection compute dtype
    # (same rounding as casting inside the kernel, but halves the dominant
    #  HBM->VMEM stream and drops the per-step VPU cast).
    x1_p = jnp.pad(x1.astype(f32), ((0, b_p - B), (0, xdim_p - xdim)))
    x2_p = jnp.pad(x2.astype(f32), ((0, b_p - B), (0, xdim_p - xdim)))
    x12 = jnp.stack([x1_p, x2_p], axis=0).astype(compute_dtype)   # [2,b_p,xdim_p]

    # ---- constants, zero-padded (exact) and pre-cast to compute dtypes ----
    wT_p = jnp.pad(weight.astype(f32).T,
                   ((0, xdim_p - xdim), (0, lda_p - lda))).astype(compute_dtype)
    b_row = jnp.pad(bias.astype(f32), (0, lda_p - lda)).reshape(1, lda_p)

    pad_l = lda_p - lda

    def pad_paired_vec(v):
        v = v.astype(f32)
        return jnp.concatenate([jnp.pad(v[:lda], (0, pad_l)),
                                jnp.pad(v[lda:], (0, pad_l))]).reshape(1, two_lda_p)

    def pad_paired_mat(c):
        c = c.astype(f32)
        top = jnp.concatenate(
            [jnp.pad(c[:lda, :lda], ((0, pad_l), (0, pad_l))),
             jnp.pad(c[:lda, lda:], ((0, pad_l), (0, pad_l)))], axis=1)
        bot = jnp.concatenate(
            [jnp.pad(c[lda:, :lda], ((0, pad_l), (0, pad_l))),
             jnp.pad(c[lda:, lda:], ((0, pad_l), (0, pad_l)))], axis=1)
        return jnp.concatenate([top, bot], axis=0).astype(quad_dtype)

    mu_t_p, mu_nt_p = pad_paired_vec(mu_t), pad_paired_vec(mu_nt)
    ci_t_p, ci_nt_p = pad_paired_mat(cinv_t), pad_paired_mat(cinv_nt)

    const = lambda i: (0, 0)          # resident parameter blocks (never move)
    single = pl.Buffered(1)           # so single-buffer them

    out = pl.pallas_call(
        gaussian_backend_kernel,
        out_shape=jax.ShapeDtypeStruct((b_p, 1), jnp.float32),
        grid_spec=pltpu.PrefetchScalarGridSpec(
            num_scalar_prefetch=0,
            grid=(grid,),
            in_specs=[
                pl.BlockSpec((2, tb, xdim_p), lambda i: (0, i, 0)),   # x1|x2 tile
                pl.BlockSpec((xdim_p, lda_p), const, pipeline_mode=single),     # W^T
                pl.BlockSpec((1, lda_p), const, pipeline_mode=single),          # bias
                pl.BlockSpec((1, two_lda_p), const, pipeline_mode=single),      # mu_t
                pl.BlockSpec((two_lda_p, two_lda_p), const, pipeline_mode=single),  # C_t^-1
                pl.BlockSpec((1, two_lda_p), const, pipeline_mode=single),      # mu_nt
                pl.BlockSpec((two_lda_p, two_lda_p), const, pipeline_mode=single),  # C_nt^-1
            ],
            out_specs=pl.BlockSpec((tb, 1), lambda i: (i, 0)),
        ),
        compiler_params=pltpu.CompilerParams(
            dimension_semantics=("parallel",),
            vmem_limit_bytes=32 * 1024 * 1024),
    )(x12, wT_p, b_row, mu_t_p, ci_t_p, mu_nt_p, ci_nt_p)
    return out[:B, 0]


def gaussian_backend_ref(x1, x2, weight, bias, mu_t, cinv_t, mu_nt, cinv_nt):
    y1 = x1 @ weight.T + bias
    y2 = x2 @ weight.T + bias
    y1 = y1 / jnp.maximum(jnp.linalg.norm(y1, axis=1, keepdims=True), 1e-12)
    y2 = y2 / jnp.maximum(jnp.linalg.norm(y2, axis=1, keepdims=True), 1e-12)
    x = jnp.concatenate([y1, y2], axis=1)
    st = jnp.sum(-((x - mu_t) @ cinv_t) * (x - mu_t), axis=1)
    snt = jnp.sum(-((x - mu_nt) @ cinv_nt) * (x - mu_nt), axis=1)
    return st - snt


if __name__ == "__main__":
    # Module default dims (xdim=512, LDA_dim=170): exercises the 170 -> 256
    # lane padding.  B=100 -> tb=56, grid=2: exercises batch padding and a
    # pipelined / two-TensorCore-shardable grid while staying small.
    XDIM, LDA = 512, 170
    B = 100

    key = jax.random.PRNGKey(0)
    k = jax.random.split(key, 8)

    x1 = jax.random.normal(k[0], (B, XDIM), dtype=jnp.float32)
    x2 = jax.random.normal(k[1], (B, XDIM), dtype=jnp.float32)

    # Deterministic synthetic parameters matching the module's __init__ shapes.
    weight = jax.random.normal(k[2], (LDA, XDIM), dtype=jnp.float32) * 0.05
    bias = jax.random.normal(k[3], (LDA,), dtype=jnp.float32) * 0.05
    mu_t = jax.random.uniform(k[4], (2 * LDA,), dtype=jnp.float32)
    cinv_t = jax.random.uniform(k[5], (2 * LDA, 2 * LDA), dtype=jnp.float32)
    mu_nt = jax.random.uniform(k[6], (2 * LDA,), dtype=jnp.float32)
    cinv_nt = jax.random.uniform(k[7], (2 * LDA, 2 * LDA), dtype=jnp.float32)

    s_ref = gaussian_backend_ref(x1, x2, weight, bias, mu_t, cinv_t,
                                 mu_nt, cinv_nt)

    # 1) Exact-numerics path (f32 MXU operands): tight check vs f32 reference.
    #    The quadratic forms are O(1e4) and S is their difference, so ~1e-6
    #    relative f32 matmul rounding appears as O(1e-2) absolute noise in S.
    s_f32 = gaussian_backend(x1, x2, weight, bias, mu_t, cinv_t, mu_nt, cinv_nt,
                             compute_dtype=jnp.float32)
    s_f32 = jax.block_until_ready(s_f32)
    assert s_f32.shape == (B,)
    assert jnp.allclose(s_f32, s_ref, rtol=2e-4, atol=1e-1), (
        float(jnp.max(jnp.abs(s_f32 - s_ref))))

    # 2) Default fast path: bf16 projection operands on the MXU with f32
    #    accumulation, f32 covariance dots.  bf16 rounding of the (immediately
    #    L2-normalized) projection propagates through two O(1e4) quadratic
    #    forms, so allow ~2^-9 of their magnitude as absolute slack in S.
    s_fast = gaussian_backend(x1, x2, weight, bias, mu_t, cinv_t, mu_nt, cinv_nt)
    s_fast = jax.block_until_ready(s_fast)
    assert s_fast.shape == (B,)
    assert jnp.allclose(s_fast, s_ref, rtol=2e-3, atol=6.0), (
        float(jnp.max(jnp.abs(s_fast - s_ref))))

    print("KERNEL_OK")
</pallas_src>

<mosaic_0001>
module attributes {stable_mosaic.version = 11 : i64} {
  func.func @gaussian_backend_kernel(%arg0: i32, %arg1: memref<2x56x512xf32, #tpu.memory_space<vmem>>, %arg2: memref<512x256xf32, #tpu.memory_space<vmem>>, %arg3: memref<1x256xf32, #tpu.memory_space<vmem>>, %arg4: memref<1x512xf32, #tpu.memory_space<vmem>>, %arg5: memref<512x512xf32, #tpu.memory_space<vmem>>, %arg6: memref<1x512xf32, #tpu.memory_space<vmem>>, %arg7: memref<512x512xf32, #tpu.memory_space<vmem>>, %arg8: memref<56x1xf32, #tpu.memory_space<vmem>>) attributes {dimension_semantics = [#tpu.dimension_semantics<parallel>], iteration_bounds = array<i64: 2>, scalar_prefetch = 0 : i64, scratch_operands = 0 : i64, tpu.core_type = #tpu.core_type<tc>, window_params = [{transform_indices = @transform_0, window_bounds = array<i64: 2, 56, 512>}, {pipeline_mode = #tpu.pipeline_mode<synchronous>, transform_indices = @transform_1, window_bounds = array<i64: 512, 256>}, {pipeline_mode = #tpu.pipeline_mode<synchronous>, transform_indices = @transform_2, window_bounds = array<i64: 1, 256>}, {pipeline_mode = #tpu.pipeline_mode<synchronous>, transform_indices = @transform_3, window_bounds = array<i64: 1, 512>}, {pipeline_mode = #tpu.pipeline_mode<synchronous>, transform_indices = @transform_4, window_bounds = array<i64: 512, 512>}, {pipeline_mode = #tpu.pipeline_mode<synchronous>, transform_indices = @transform_5, window_bounds = array<i64: 1, 512>}, {pipeline_mode = #tpu.pipeline_mode<synchronous>, transform_indices = @transform_6, window_bounds = array<i64: 512, 512>}, {transform_indices = @transform_7, window_bounds = array<i64: 56, 1>}]} {
    %c0 = arith.constant 0 : index
    %c0_0 = arith.constant 0 : index
    %c0_1 = arith.constant 0 : index
    %0 = vector.load %arg1[%c0, %c0_0, %c0_1] : memref<2x56x512xf32, #tpu.memory_space<vmem>>, vector<2x56x512xf32>
    %1 = vector.shape_cast %0 : vector<2x56x512xf32> to vector<112x512xf32>
    %c0_2 = arith.constant 0 : index
    %c0_3 = arith.constant 0 : index
    %2 = vector.load %arg2[%c0_2, %c0_3] : memref<512x256xf32, #tpu.memory_space<vmem>>, vector<512x256xf32>
    %cst = arith.constant dense<0.000000e+00> : vector<112x256xf32>
    %3 = tpu.matmul %1, %2, %cst {dimension_numbers = #tpu.dot_dimension_numbers<[1], [0], [0], [1], [0, 0, 1, 1], [], []>} : vector<112x512xf32>, vector<512x256xf32>, vector<112x256xf32> -> vector<112x256xf32>
    %c0_4 = arith.constant 0 : index
    %c0_5 = arith.constant 0 : index
    %4 = vector.load %arg3[%c0_4, %c0_5] : memref<1x256xf32, #tpu.memory_space<vmem>>, vector<1x256xf32>
    %5 = vector.broadcast %4 : vector<1x256xf32> to vector<112x256xf32>
    %6 = arith.addf %3, %5 : vector<112x256xf32>
    %7 = arith.mulf %6, %6 : vector<112x256xf32>
    %cst_6 = arith.constant dense<0.000000e+00> : vector<112xf32>
    %8 = vector.multi_reduction <add>, %7, %cst_6 [1] : vector<112x256xf32> to vector<112xf32>
    %9 = vector.shape_cast %8 : vector<112xf32> to vector<112x1xf32>
    %cst_7 = arith.constant 1.000000e-24 : f32
    %10 = vector.broadcast %cst_7 : f32 to vector<112x1xf32>
    %11 = arith.maximumf %9, %10 : vector<112x1xf32>
    %12 = math.rsqrt %11 : vector<112x1xf32>
    %13 = vector.broadcast %12 : vector<112x1xf32> to vector<112x256xf32>
    %14 = arith.mulf %6, %13 : vector<112x256xf32>
    %15 = vector.extract_strided_slice %14 {offsets = [0, 0], sizes = [56, 256], strides = [1, 1]} : vector<112x256xf32> to vector<56x256xf32>
    %16 = vector.extract_strided_slice %14 {offsets = [56, 0], sizes = [56, 256], strides = [1, 1]} : vector<112x256xf32> to vector<56x256xf32>
    %17 = tpu.concatenate %15, %16 in 1 : vector<56x256xf32>, vector<56x256xf32> -> vector<56x512xf32>
    %c0_8 = arith.constant 0 : index
    %c0_9 = arith.constant 0 : index
    %18 = vector.load %arg4[%c0_8, %c0_9] : memref<1x512xf32, #tpu.memory_space<vmem>>, vector<1x512xf32>
    %19 = vector.broadcast %18 : vector<1x512xf32> to vector<56x512xf32>
    %20 = arith.subf %17, %19 : vector<56x512xf32>
    %c0_10 = arith.constant 0 : index
    %c0_11 = arith.constant 0 : index
    %21 = vector.load %arg5[%c0_10, %c0_11] : memref<512x512xf32, #tpu.memory_space<vmem>>, vector<512x512xf32>
    %cst_12 = arith.constant dense<0.000000e+00> : vector<56x512xf32>
    %22 = tpu.matmul %20, %21, %cst_12 {dimension_numbers = #tpu.dot_dimension_numbers<[1], [0], [0], [1], [0, 0, 1, 1], [], []>} : vector<56x512xf32>, vector<512x512xf32>, vector<56x512xf32> -> vector<56x512xf32>
    %23 = arith.mulf %22, %20 : vector<56x512xf32>
    %cst_13 = arith.constant dense<0.000000e+00> : vector<56xf32>
    %24 = vector.multi_reduction <add>, %23, %cst_13 [1] : vector<56x512xf32> to vector<56xf32>
    %25 = vector.shape_cast %24 : vector<56xf32> to vector<56x1xf32>
    %c0_14 = arith.constant 0 : index
    %c0_15 = arith.constant 0 : index
    %26 = vector.load %arg6[%c0_14, %c0_15] : memref<1x512xf32, #tpu.memory_space<vmem>>, vector<1x512xf32>
    %27 = vector.broadcast %26 : vector<1x512xf32> to vector<56x512xf32>
    %28 = arith.subf %17, %27 : vector<56x512xf32>
    %c0_16 = arith.constant 0 : index
    %c0_17 = arith.constant 0 : index
    %29 = vector.load %arg7[%c0_16, %c0_17] : memref<512x512xf32, #tpu.memory_space<vmem>>, vector<512x512xf32>
    %cst_18 = arith.constant dense<0.000000e+00> : vector<56x512xf32>
    %30 = tpu.matmul %28, %29, %cst_18 {dimension_numbers = #tpu.dot_dimension_numbers<[1], [0], [0], [1], [0, 0, 1, 1], [], []>} : vector<56x512xf32>, vector<512x512xf32>, vector<56x512xf32> -> vector<56x512xf32>
    %31 = arith.mulf %30, %28 : vector<56x512xf32>
    %cst_19 = arith.constant dense<0.000000e+00> : vector<56xf32>
    %32 = vector.multi_reduction <add>, %31, %cst_19 [1] : vector<56x512xf32> to vector<56xf32>
    %33 = vector.shape_cast %32 : vector<56xf32> to vector<56x1xf32>
    %34 = arith.subf %33, %25 : vector<56x1xf32>
    %c0_20 = arith.constant 0 : index
    %c0_21 = arith.constant 0 : index
    %35 = vector.load %arg8[%c0_20, %c0_21] : memref<56x1xf32, #tpu.memory_space<vmem>>, vector<56x1xf32>
    tpu.vector_store %arg8[%c0_20, %c0_21], %34 {strides = array<i32>} : memref<56x1xf32, #tpu.memory_space<vmem>>, vector<56x1xf32>,
    return
  }
  func.func @transform_0(%arg0: i32) -> (i32, i32, i32) {
    %c0_i32 = arith.constant 0 : i32
    %c0_i32_0 = arith.constant 0 : i32
    %c0_i32_1 = arith.constant 0 : i32
    return %c0_i32, %arg0, %c0_i32_0 : i32, i32, i32
  }
  func.func @transform_1(%arg0: i32) -> (i32, i32) {
    %c0_i32 = arith.constant 0 : i32
    %c0_i32_0 = arith.constant 0 : i32
    %c0_i32_1 = arith.constant 0 : i32
    return %c0_i32, %c0_i32_0 : i32, i32
  }
  func.func @transform_2(%arg0: i32) -> (i32, i32) {
    %c0_i32 = arith.constant 0 : i32
    %c0_i32_0 = arith.constant 0 : i32
    %c0_i32_1 = arith.constant 0 : i32
    return %c0_i32, %c0_i32_0 : i32, i32
  }
  func.func @transform_3(%arg0: i32) -> (i32, i32) {
    %c0_i32 = arith.constant 0 : i32
    %c0_i32_0 = arith.constant 0 : i32
    %c0_i32_1 = arith.constant 0 : i32
    return %c0_i32, %c0_i32_0 : i32, i32
  }
  func.func @transform_4(%arg0: i32) -> (i32, i32) {
    %c0_i32 = arith.constant 0 : i32
    %c0_i32_0 = arith.constant 0 : i32
    %c0_i32_1 = arith.constant 0 : i32
    return %c0_i32, %c0_i32_0 : i32, i32
  }
  func.func @transform_5(%arg0: i32) -> (i32, i32) {
    %c0_i32 = arith.constant 0 : i32
    %c0_i32_0 = arith.constant 0 : i32
    %c0_i32_1 = arith.constant 0 : i32
    return %c0_i32, %c0_i32_0 : i32, i32
  }
  func.func @transform_6(%arg0: i32) -> (i32, i32) {
    %c0_i32 = arith.constant 0 : i32
    %c0_i32_0 = arith.constant 0 : i32
    %c0_i32_1 = arith.constant 0 : i32
    return %c0_i32, %c0_i32_0 : i32, i32
  }
  func.func @transform_7(%arg0: i32) -> (i32, i32) {
    %c0_i32 = arith.constant 0 : i32
    %c0_i32_0 = arith.constant 0 : i32
    return %arg0, %c0_i32 : i32, i32
  }
}

</mosaic_0001>

<llo_original>
// kernel: tpu_custom_call.1
$region0: #{tpu_custom_call.1}
  #allocation0 [shape = 'u32[]', space=smem, size = 0x4, offset = 0x4, fixed_abs, tag = 'smem constant byte address 0x4 - core index']
  #allocation1 [shape = 'u32[72,128]{1,0:T(1,128)}', space=vmem, size = 0x9000, scoped, tag = 'internal scratch']
  #allocation12 [shape = 's32[]', space=sflag, size = 0x4, offset = 0, fixed_abs, tag = 'sflag constant byte address 0x0 - dummy sync flag']
  %s0 = inlined_call_operand.hbm [shape: f32[2,112,512], index: 0, kind: input, shape index: {}]
  %s1 = inlined_call_operand.hbm [shape: f32[512,256], index: 1, kind: input, shape index: {}]
  %s2 = inlined_call_operand.hbm [shape: f32[1,256], index: 2, kind: input, shape index: {}]
  %s3 = inlined_call_operand.hbm [shape: f32[1,512], index: 3, kind: input, shape index: {}]
  %s4 = inlined_call_operand.hbm [shape: f32[512,512], index: 4, kind: input, shape index: {}]
  %s5 = inlined_call_operand.vmem [shape: f32[1,512], index: 5, kind: input, shape index: {}]
  %s6 = inlined_call_operand.hbm [shape: f32[512,512], index: 6, kind: input, shape index: {}]
  %s7 = inlined_call_operand.vmem [shape: f32[112,1], index: 7, kind: output, shape index: {}]
  %s8 = sld [smem:[#allocation0]]
  $region85: #{tpu_custom_call.1} parent=0
    _
  %s10 = ssub.s32 1, %s8
  %s11 = scalar_select 0, %s10, %s8
  $region1: #{tpu_custom_call.1} parent=0
    #allocation2 [shape = 'u8[458752]{0}', space=vmem, size = 0x70000, scoped, tag = 'input window, operand 0']
    #allocation3 [shape = 's32[2]{0}', space=sflag, size = 0x8, scoped, tag = 'scoped memory for tpu_custom_call.1']
    #allocation4 [shape = 'u8[524288]{0}', space=vmem, size = 0x80000, scoped, tag = 'input window, operand 1, single buffered']
    #allocation5 [shape = 's32[1]{0}', space=sflag, size = 0x4, scoped, tag = 'scoped memory for tpu_custom_call.1']
    #allocation6 [shape = 'u8[1024]{0}', space=vmem, size = 0x400, scoped, tag = 'input window, operand 2, single buffered']
    #allocation7 [shape = 'u8[2048]{0}', space=vmem, size = 0x800, scoped, tag = 'input window, operand 3, single buffered']
    #allocation8 [shape = 's32[1]{0}', space=sflag, size = 0x4, scoped, tag = 'scoped memory for tpu_custom_call.1']
    #allocation9 [shape = 'u8[1048576]{0}', space=vmem, size = 0x100000, scoped, tag = 'input window, operand 4, single buffered']
    #allocation10 [shape = 'u8[1048576]{0}', space=vmem, size = 0x100000, scoped, tag = 'input window, operand 6, single buffered']
    #allocation11 [shape = 's32[1]{0}', space=sflag, size = 0x4, scoped, tag = 'scoped memory for tpu_custom_call.1']
    %12 = vsyncpa [#allocation3], 0
    %s13 = scalar_lea.sflag [#allocation3], 1
    %14 = vsyncpa %s13, 0
    %15 = vsyncpa [#allocation5], 0
    %16 = vsyncpa [#allocation8], 0
    %17 = vsyncpa [#allocation11], 0
    loop: start=0, step=1, limit=4
    $region2: #{tpu_custom_call.1} parent=1 // loop_pre_header
      _
    $region3: #{tpu_custom_call.1} parent=1 // loop_header
      %s19 = sphi 0, %s23
      %p20 = scmp.ge.s32.totalorder %s19, 4
      %s29 = sphi 0, %s31
      %s32 = sphi 0, %s29
      %s33 = sphi 0, %s32
      %s49 = sphi 0, %s33
      %s53 = sphi 0, %s53
      %s55 = sphi 0, %s53
      %s56 = sphi 0, %s55
      %s70 = sphi 0, %s56
      %s74 = sphi 0, %s74
      %s76 = sphi 0, %s74
      %s77 = sphi 0, %s76
      %s91 = sphi 0, %s77
      %s95 = sphi 0, %s95
      %s97 = sphi 0, %s95
      %s98 = sphi 0, %s97
      %s112 = sphi 0, %s98
      %s116 = sphi 0, %s116
      %s118 = sphi 0, %s116
      %s119 = sphi 0, %s118
      %s133 = sphi 0, %s119
      %s137 = sphi 0, %s137
      %s139 = sphi 0, %s137
      %s140 = sphi 0, %s139
      %s154 = sphi 0, %s140
      %s158 = sphi 0, %s158
      %s160 = sphi 0, %s158
      %s161 = sphi 0, %s160
      %s175 = sphi 0, %s161
      %s181 = sphi 0, %s183
      %s184 = sphi 0, %s181
      %s185 = sphi 0, %s184
      %s201 = sphi 0, %s185
    $region4: #{tpu_custom_call.1} parent=1 // loop_header_branch
      %22 = sbr.rel (%p20) target = $region8
    $region5: #{tpu_custom_call.1} parent=1 // loop_body
      %s24 = ssub.s32 %s19, 1
      %s25 = ssub.s32 %s19, 2
      %s26 = sadd.s32 %s19, 1
      %s27 = ssub.s32 %s19, %s26
      %p28 = scmp.eq.s32.totalorder %s27, 0
      %s30 = sadd.s32 %s29, 1
      %s31 = scalar_select %p28, %s29, %s30
      %p34 = pneg %p28
      %p35 = scmp.eq.s32.totalorder %s19, 1
      %p36 = por %p34, %p35
      %p37 = scmp.ne.s32.totalorder %s29, %s32
      %p38 = scmp.eq.s32.totalorder %s19, 0
      %p39 = por %p37, %p38
      %p40 = scmp.ne.s32.totalorder %s29, %s32
      %p41 = scmp.eq.s32.totalorder %s24, 1
      %p42 = por %p40, %p41
      %p43 = scmp.ne.s32.totalorder %s32, %s33
      %p44 = scmp.eq.s32.totalorder %s24, 0
      %p45 = por %p43, %p44
      %p46 = scmp.ne.s32.totalorder %s32, %s33
      %p47 = scmp.eq.s32.totalorder %s25, 1
      %p48 = por %p46, %p47
      %p50 = scmp.ne.s32.totalorder %s33, %s49
      %p51 = scmp.eq.s32.totalorder %s25, 0
      %p52 = por %p50, %p51
      %s54 = sadd.s32 %s53, 1
      %p57 = scmp.eq.s32.totalorder %s19, 1
      %p58 = scmp.ne.s32.totalorder %s53, %s55
      %p59 = scmp.eq.s32.totalorder %s19, 0
      %p60 = por %p58, %p59
      %p61 = scmp.ne.s32.totalorder %s53, %s55
      %p62 = scmp.eq.s32.totalorder %s24, 1
      %p63 = por %p61, %p62
      %p64 = scmp.ne.s32.totalorder %s55, %s56
      %p65 = scmp.eq.s32.totalorder %s24, 0
      %p66 = por %p64, %p65
      %p67 = scmp.ne.s32.totalorder %s55, %s56
      %p68 = scmp.eq.s32.totalorder %s25, 1
      %p69 = por %p67, %p68
      %p71 = scmp.ne.s32.totalorder %s56, %s70
      %p72 = scmp.eq.s32.totalorder %s25, 0
      %p73 = por %p71, %p72
      %s75 = sadd.s32 %s74, 1
      %p78 = scmp.eq.s32.totalorder %s19, 1
      %p79 = scmp.ne.s32.totalorder %s74, %s76
      %p80 = scmp.eq.s32.totalorder %s19, 0
      %p81 = por %p79, %p80
      %p82 = scmp.ne.s32.totalorder %s74, %s76
      %p83 = scmp.eq.s32.totalorder %s24, 1
      %p84 = por %p82, %p83
      %p85 = scmp.ne.s32.totalorder %s76, %s77
      %p86 = scmp.eq.s32.totalorder %s24, 0
      %p87 = por %p85, %p86
      %p88 = scmp.ne.s32.totalorder %s76, %s77
      %p89 = scmp.eq.s32.totalorder %s25, 1
      %p90 = por %p88, %p89
      %p92 = scmp.ne.s32.totalorder %s77, %s91
      %p93 = scmp.eq.s32.totalorder %s25, 0
      %p94 = por %p92, %p93
      %s96 = sadd.s32 %s95, 1
      %p99 = scmp.eq.s32.totalorder %s19, 1
      %p100 = scmp.ne.s32.totalorder %s95, %s97
      %p101 = scmp.eq.s32.totalorder %s19, 0
      %p102 = por %p100, %p101
      %p103 = scmp.ne.s32.totalorder %s95, %s97
      %p104 = scmp.eq.s32.totalorder %s24, 1
      %p105 = por %p103, %p104
      %p106 = scmp.ne.s32.totalorder %s97, %s98
      %p107 = scmp.eq.s32.totalorder %s24, 0
      %p108 = por %p106, %p107
      %p109 = scmp.ne.s32.totalorder %s97, %s98
      %p110 = scmp.eq.s32.totalorder %s25, 1
      %p111 = por %p109, %p110
      %p113 = scmp.ne.s32.totalorder %s98, %s112
      %p114 = scmp.eq.s32.totalorder %s25, 0
      %p115 = por %p113, %p114
      %s117 = sadd.s32 %s116, 1
      %p120 = scmp.eq.s32.totalorder %s19, 1
      %p121 = scmp.ne.s32.totalorder %s116, %s118
      %p122 = scmp.eq.s32.totalorder %s19, 0
      %p123 = por %p121, %p122
      %p124 = scmp.ne.s32.totalorder %s116, %s118
      %p125 = scmp.eq.s32.totalorder %s24, 1
      %p126 = por %p124, %p125
      %p127 = scmp.ne.s32.totalorder %s118, %s119
      %p128 = scmp.eq.s32.totalorder %s24, 0
      %p129 = por %p127, %p128
      %p130 = scmp.ne.s32.totalorder %s118, %s119
      %p131 = scmp.eq.s32.totalorder %s25, 1
      %p132 = por %p130, %p131
      %p134 = scmp.ne.s32.totalorder %s119, %s133
      %p135 = scmp.eq.s32.totalorder %s25, 0
      %p136 = por %p134, %p135
      %s138 = sadd.s32 %s137, 1
      %p141 = scmp.eq.s32.totalorder %s19, 1
      %p142 = scmp.ne.s32.totalorder %s137, %s139
      %p143 = scmp.eq.s32.totalorder %s19, 0
      %p144 = por %p142, %p143
      %p145 = scmp.ne.s32.totalorder %s137, %s139
      %p146 = scmp.eq.s32.totalorder %s24, 1
      %p147 = por %p145, %p146
      %p148 = scmp.ne.s32.totalorder %s139, %s140
      %p149 = scmp.eq.s32.totalorder %s24, 0
      %p150 = por %p148, %p149
      %p151 = scmp.ne.s32.totalorder %s139, %s140
      %p152 = scmp.eq.s32.totalorder %s25, 1
      %p153 = por %p151, %p152
      %p155 = scmp.ne.s32.totalorder %s140, %s154
      %p156 = scmp.eq.s32.totalorder %s25, 0
      %p157 = por %p155, %p156
      %s159 = sadd.s32 %s158, 1
      %p162 = scmp.eq.s32.totalorder %s19, 1
      %p163 = scmp.ne.s32.totalorder %s158, %s160
      %p164 = scmp.eq.s32.totalorder %s19, 0
      %p165 = por %p163, %p164
      %p166 = scmp.ne.s32.totalorder %s158, %s160
      %p167 = scmp.eq.s32.totalorder %s24, 1
      %p168 = por %p166, %p167
      %p169 = scmp.ne.s32.totalorder %s160, %s161
      %p170 = scmp.eq.s32.totalorder %s24, 0
      %p171 = por %p169, %p170
      %p172 = scmp.ne.s32.totalorder %s160, %s161
      %p173 = scmp.eq.s32.totalorder %s25, 1
      %p174 = por %p172, %p173
      %p176 = scmp.ne.s32.totalorder %s161, %s175
      %p177 = scmp.eq.s32.totalorder %s25, 0
      %p178 = por %p176, %p177
      %s179 = ssub.s32 %s19, %s26
      %p180 = scmp.eq.s32.totalorder %s179, 0
      %s182 = sadd.s32 %s181, 1
      %s183 = scalar_select %p180, %s181, %s182
      %p186 = pneg %p180
      %p187 = scmp.eq.s32.totalorder %s19, 1
      %p188 = por %p186, %p187
      %p189 = scmp.ne.s32.totalorder %s181, %s184
      %p190 = scmp.eq.s32.totalorder %s19, 0
      %p191 = por %p189, %p190
      %p192 = scmp.ne.s32.totalorder %s181, %s184
      %p193 = scmp.eq.s32.totalorder %s24, 1
      %p194 = por %p192, %p193
      %p195 = scmp.ne.s32.totalorder %s184, %s185
      %p196 = scmp.eq.s32.totalorder %s24, 0
      %p197 = por %p195, %p196
      %p198 = scmp.ne.s32.totalorder %s184, %s185
      %p199 = scmp.eq.s32.totalorder %s25, 1
      %p200 = por %p198, %p199
      %p202 = scmp.ne.s32.totalorder %s185, %s201
      %p203 = scmp.eq.s32.totalorder %s25, 0
      %p204 = por %p202, %p203
      %p205 = scmp.le.s32.totalorder 1, %s19
      %p206 = scmp.lt.s32.totalorder %s19, 3
      %p207 = pnand %p205, %p206
      %p208 = pneg %p207
      // Predicated region
      $region9: #{tpu_custom_call.1} parent=5 // pred_check
        _
      $region10: #{tpu_custom_call.1} parent=5 // pred_check_branch
        %210 = sbr.rel (%p207) target = $region12
      $region11: #{tpu_custom_call.1} parent=5 // pred_region
        %s211 = ssub.s32 %s19, 1
        // Predicated region
        $region13: #{tpu_custom_call.1} parent=11 // pred_check
          %p212 = pneg %p66
        $region14: #{tpu_custom_call.1} parent=11 // pred_check_branch
          %214 = sbr.rel (%p212) target = $region16
        $region15: #{tpu_custom_call.1} parent=11 // pred_region
          %216 = vsyncadd [#allocation5], 0
          %s217 = sshll.u32 %s1, 4
          %s218 = int_to_ptr.hbm [resolvable:$true] %s217
          %s219 = sshll.u32 [#allocation4], 4
          %s220 = int_to_ptr.vmem [resolvable:$true] %s219
          %225 = dma.hbm_to_vmem [thread:$0]  %s218, 16384, %s220, [#allocation5], 256, 256, 16
        $region16: #{tpu_custom_call.1} parent=11 // pred_fallthru
          _
        // Predicated region
        $region17: #{tpu_custom_call.1} parent=11 // pred_check
          %p226 = pneg %p87
        $region18: #{tpu_custom_call.1} parent=11 // pred_check_branch
          %228 = sbr.rel (%p226) target = $region20
        $region19: #{tpu_custom_call.1} parent=11 // pred_region
          %230 = vsyncadd [#allocation5], 0
          %s232 = sshll.u32 %s2, 4
          %s233 = int_to_ptr.hbm [resolvable:$true] %s232
          %s234 = sshll.u32 [#allocation6], 4
          %s235 = int_to_ptr.vmem [resolvable:$true] %s234
          %237 = dma.hbm_to_vmem [thread:$0]  %s233, 32, %s235, [#allocation5]
        $region20: #{tpu_custom_call.1} parent=11 // pred_fallthru
          _
        // Predicated region
        $region21: #{tpu_custom_call.1} parent=11 // pred_check
          %p238 = pneg %p108
        $region22: #{tpu_custom_call.1} parent=11 // pred_check_branch
          %240 = sbr.rel (%p238) target = $region24
        $region23: #{tpu_custom_call.1} parent=11 // pred_region
          %242 = vsyncadd [#allocation8], 0
          %s244 = sshll.u32 %s3, 4
          %s245 = int_to_ptr.hbm [resolvable:$true] %s244
          %s246 = sshll.u32 [#allocation7], 4
          %s247 = int_to_ptr.vmem [resolvable:$true] %s246
          %249 = dma.hbm_to_vmem [thread:$0]  %s245, 64, %s247, [#allocation8]
        $region24: #{tpu_custom_call.1} parent=11 // pred_fallthru
          _
        // Predicated region
        $region25: #{tpu_custom_call.1} parent=11 // pred_check
          %p250 = pneg %p129
        $region26: #{tpu_custom_call.1} parent=11 // pred_check_branch
          %252 = sbr.rel (%p250) target = $region28
        $region27: #{tpu_custom_call.1} parent=11 // pred_region
          %254 = vsyncadd [#allocation8], 0
          %s255 = sshll.u32 %s4, 4
          %s256 = int_to_ptr.hbm [resolvable:$true] %s255
          %s257 = sshll.u32 [#allocation9], 4
          %s258 = int_to_ptr.vmem [resolvable:$true] %s257
          %263 = dma.hbm_to_vmem [thread:$0]  %s256, 32768, %s258, [#allocation8], 512, 512, 32
        $region28: #{tpu_custom_call.1} parent=11 // pred_fallthru
          _
        // Predicated region
        $region29: #{tpu_custom_call.1} parent=11 // pred_check
          %p264 = pneg %p150
        $region30: #{tpu_custom_call.1} parent=11 // pred_check_branch
          %266 = sbr.rel (%p264) target = $region32
        $region31: #{tpu_custom_call.1} parent=11 // pred_region
          _
        $region32: #{tpu_custom_call.1} parent=11 // pred_fallthru
          _
        // Predicated region
        $region33: #{tpu_custom_call.1} parent=11 // pred_check
          %p267 = pneg %p171
        $region34: #{tpu_custom_call.1} parent=11 // pred_check_branch
          %269 = sbr.rel (%p267) target = $region36
        $region35: #{tpu_custom_call.1} parent=11 // pred_region
          %271 = vsyncadd [#allocation11], 0
          %s272 = sshll.u32 %s6, 4
          %s273 = int_to_ptr.hbm [resolvable:$true] %s272
          %s274 = sshll.u32 [#allocation10], 4
          %s275 = int_to_ptr.vmem [resolvable:$true] %s274
          %280 = dma.hbm_to_vmem [thread:$0]  %s273, 32768, %s275, [#allocation11], 512, 512, 32
        $region36: #{tpu_custom_call.1} parent=11 // pred_fallthru
          _
      $region12: #{tpu_custom_call.1} parent=5 // pred_fallthru
        _
      %p281 = scmp.lt.s32.totalorder %s19, 2
      // Predicated region
      $region37: #{tpu_custom_call.1} parent=5 // pred_check
        %p282 = pneg %p281
      $region38: #{tpu_custom_call.1} parent=5 // pred_check_branch
        %284 = sbr.rel (%p282) target = $region40
      $region39: #{tpu_custom_call.1} parent=5 // pred_region
        // Predicated region
        $region41: #{tpu_custom_call.1} parent=39 // pred_check
          %p285 = pneg %p39
        $region42: #{tpu_custom_call.1} parent=39 // pred_check_branch
          %287 = sbr.rel (%p285) target = $region44
        $region43: #{tpu_custom_call.1} parent=39 // pred_region
          #allocation13 [shape = 'u32[6]{0}', space=smem, size = 0x18, scoped, tag = 'DMA stride descriptor']
          %s288 = sand.u32 %s29, 1
          %s289 = scalar_lea.sflag [#allocation3], %s288
          %s290 = sand.u32 %s29, 1
          %s291 = smul.addr %s290, 448
          %s292 = scalar_lea.vmem [#allocation2], %s291
          %s293 = smul.u32 7, %s19
          %295 = vsyncadd %s289, 0
          %s296 = smul.addr %s293, 4
          %s297 = smul.addr %s296, 8
          %s298 = scalar_lea.hbm %s0, %s297
          %s300 = sshll.u32 1, 14
          %s301 = sxor.u32 4294967295, %s300
          %s303 = sld [smem:[#allocation0]]
          %s304 = sadd.s32 2, %s303
          %s306 = sshll.u32 7, 26
          %s307 = sxor.u32 4294967295, %s306
          %s308 = sand.u32 0, %s307
          %s309 = sshll.u32 %s304, 26
          %s310 = sor.u32 %s308, %s309
          %s311 = sshll.u32 %s298, 4
          %s312 = int_to_ptr.hbm [resolvable:$true] %s311
          %s313 = sshll.u32 %s292, 4
          %s314 = int_to_ptr.vmem [resolvable:$true] %s313
          %320 = sst [smem:[#allocation13]] 7168
          %s321 = scalar_lea.smem [#allocation13], 1
          %322 = sst [smem:[%s321]] 3584
          %s323 = scalar_lea.smem [#allocation13], 2
          %324 = sst [smem:[%s323]] 7
          %s325 = scalar_lea.smem [#allocation13], 3
          %326 = sst [smem:[%s325]] 512
          %s327 = scalar_lea.smem [#allocation13], 4
          %328 = sst [smem:[%s327]] 512
          %s329 = scalar_lea.smem [#allocation13], 5
          %330 = sst [smem:[%s329]] 32
          %332 = dma.general %s312, 7168, %s314, %s289, [#allocation12], [#allocation13], %s310, 0
        $region44: #{tpu_custom_call.1} parent=39 // pred_fallthru
          _
      $region40: #{tpu_custom_call.1} parent=5 // pred_fallthru
        _
      %p333 = scmp.le.s32.totalorder 1, %s19
      %p334 = scmp.lt.s32.totalorder %s19, 3
      %p335 = pnand %p333, %p334
      %p336 = pneg %p335
      // Predicated region
      $region45: #{tpu_custom_call.1} parent=5 // pred_check
        _
      $region46: #{tpu_custom_call.1} parent=5 // pred_check_branch
        %338 = sbr.rel (%p335) target = $region48
      $region47: #{tpu_custom_call.1} parent=5 // pred_region
        %s339 = ssub.s32 %s19, 1
        %s340 = sand.u32 %s32, 1
        %s341 = scalar_lea.sflag [#allocation3], %s340
        %s342 = sand.u32 %s32, 1
        %s343 = smul.addr %s342, 448
        %s344 = scalar_lea.vmem [#allocation2], %s343
        // Predicated region
        $region49: #{tpu_custom_call.1} parent=47 // pred_check
          %p345 = pneg %p45
        $region50: #{tpu_custom_call.1} parent=47 // pred_check_branch
          %347 = sbr.rel (%p345) target = $region52
        $region51: #{tpu_custom_call.1} parent=47 // pred_region
          %349 = dma.done %s341, 7168
        $region52: #{tpu_custom_call.1} parent=47 // pred_fallthru
          _
        // Predicated region
        $region53: #{tpu_custom_call.1} parent=47 // pred_check
          %p350 = pneg %p66
        $region54: #{tpu_custom_call.1} parent=47 // pred_check_branch
          %352 = sbr.rel (%p350) target = $region56
        $region55: #{tpu_custom_call.1} parent=47 // pred_region
          %354 = dma.done [#allocation5], 16384
        $region56: #{tpu_custom_call.1} parent=47 // pred_fallthru
          _
        // Predicated region
        $region57: #{tpu_custom_call.1} parent=47 // pred_check
          %p355 = pneg %p87
        $region58: #{tpu_custom_call.1} parent=47 // pred_check_branch
          %357 = sbr.rel (%p355) target = $region60
        $region59: #{tpu_custom_call.1} parent=47 // pred_region
          %359 = dma.done [#allocation5], 32
        $region60: #{tpu_custom_call.1} parent=47 // pred_fallthru
          _
        // Predicated region
        $region61: #{tpu_custom_call.1} parent=47 // pred_check
          %p360 = pneg %p108
        $region62: #{tpu_custom_call.1} parent=47 // pred_check_branch
          %362 = sbr.rel (%p360) target = $region64
        $region63: #{tpu_custom_call.1} parent=47 // pred_region
          %364 = dma.done [#allocation8], 64
        $region64: #{tpu_custom_call.1} parent=47 // pred_fallthru
          _
        // Predicated region
        $region65: #{tpu_custom_call.1} parent=47 // pred_check
          %p365 = pneg %p129
        $region66: #{tpu_custom_call.1} parent=47 // pred_check_branch
          %367 = sbr.rel (%p365) target = $region68
        $region67: #{tpu_custom_call.1} parent=47 // pred_region
          %369 = dma.done [#allocation8], 32768
        $region68: #{tpu_custom_call.1} parent=47 // pred_fallthru
          _
        // Predicated region
        $region69: #{tpu_custom_call.1} parent=47 // pred_check
          %p370 = pneg %p171
        $region70: #{tpu_custom_call.1} parent=47 // pred_check_branch
          %372 = sbr.rel (%p370) target = $region72
        $region71: #{tpu_custom_call.1} parent=47 // pred_region
          %374 = dma.done [#allocation11], 32768
        $region72: #{tpu_custom_call.1} parent=47 // pred_fallthru
          _
        %s375 = sand.u32 %s32, 1
        %s376 = scalar_lea.sflag [#allocation3], %s375
        %s377 = sand.u32 %s32, 1
        %s378 = smul.addr %s377, 448
        %s379 = scalar_lea.vmem [#allocation2], %s378
        %p380 = pneg %p45
        %p381 = pneg %p42
        %p382 = pneg %p66
        %p383 = pneg %p63
        %p384 = pneg %p87
        %p385 = pneg %p84
        %p386 = pneg %p108
        %p387 = pneg %p105
        %p388 = pneg %p129
        %p389 = pneg %p126
        %p390 = pneg %p150
        %p391 = pneg %p147
        %p392 = pneg %p171
        %p393 = pneg %p168
        %p394 = pneg %p197
        %p395 = pneg %p194
        %s396 = smul.u32 7, %s24
        %p397 = scmp.lt.s32.totalorder %s396, 13
        %s398 = scalar_select %p397, %s396, 13
        %s399 = smul.addr %s398, 8
        %s400 = scalar_lea.vmem %s7, %s399
        %s401 = smul.u32 7, %s24
        %s402 = smul.u32 7, %s24
        %p403 = scmp.lt.s32.totalorder %s402, 13
        %s404 = scalar_select %p403, %s402, 13
        %s405 = smul.addr %s404, 8
        %s406 = scalar_lea.vmem %s7, %s405
        %s407 = smul.u32 7, %s24
        %v408 = vld [vmem:[%s344] sm:$0xff]
        %v409 = vld [vmem:[%s344 + $0x8] sm:$0xff]
        %v410 = vld [vmem:[%s344 + $0x10] sm:$0xff]
        %v411 = vld [vmem:[%s344 + $0x18] sm:$0xff]
        %v412 = vld [vmem:[%s344 + $0x20] sm:$0xff]
        %v413 = vld [vmem:[%s344 + $0x28] sm:$0xff]
        %v414 = vld [vmem:[%s344 + $0x30] sm:$0xff]
        %v415 = vld [vmem:[%s344 + $0x38] sm:$0xff]
        %v416 = vld [vmem:[%s344 + $0x40] sm:$0xff]
        %v417 = vld [vmem:[%s344 + $0x48] sm:$0xff]
        %v418 = vld [vmem:[%s344 + $0x50] sm:$0xff]
        %v419 = vld [vmem:[%s344 + $0x58] sm:$0xff]
        %v420 = vld [vmem:[%s344 + $0x60] sm:$0xff]
        %v421 = vld [vmem:[%s344 + $0x68] sm:$0xff]
        %v422 = vld [vmem:[%s344 + $0x70] sm:$0xff]
        %v423 = vld [vmem:[%s344 + $0x78] sm:$0xff]
        %v424 = vld [vmem:[%s344 + $0x80] sm:$0xff]
        %v425 = vld [vmem:[%s344 + $0x88] sm:$0xff]
        %v426 = vld [vmem:[%s344 + $0x90] sm:$0xff]
        %v427 = vld [vmem:[%s344 + $0x98] sm:$0xff]
        %v428 = vld [vmem:[%s344 + $0xa0] sm:$0xff]
        %v429 = vld [vmem:[%s344 + $0xa8] sm:$0xff]
        %v430 = vld [vmem:[%s344 + $0xb0] sm:$0xff]
        %v431 = vld [vmem:[%s344 + $0xb8] sm:$0xff]
        %v432 = vld [vmem:[%s344 + $0xc0] sm:$0xff]
        %v433 = vld [vmem:[%s344 + $0xc8] sm:$0xff]
        %v434 = vld [vmem:[%s344 + $0xd0] sm:$0xff]
        %v435 = vld [vmem:[%s344 + $0xd8] sm:$0xff]
        %v436 = vld [vmem:[%s344 + $0xe0] sm:$0xff]
        %v437 = vld [vmem:[%s344 + $0xe8] sm:$0xff]
        %v438 = vld [vmem:[%s344 + $0xf0] sm:$0xff]
        %v439 = vld [vmem:[%s344 + $0xf8] sm:$0xff]
        %v440 = vld [vmem:[%s344 + $0x100] sm:$0xff]
        %v441 = vld [vmem:[%s344 + $0x108] sm:$0xff]
        %v442 = vld [vmem:[%s344 + $0x110] sm:$0xff]
        %v443 = vld [vmem:[%s344 + $0x118] sm:$0xff]
        %v444 = vld [vmem:[%s344 + $0x120] sm:$0xff]
        %v445 = vld [vmem:[%s344 + $0x128] sm:$0xff]
        %v446 = vld [vmem:[%s344 + $0x130] sm:$0xff]
        %v447 = vld [vmem:[%s344 + $0x138] sm:$0xff]
        %v448 = vld [vmem:[%s344 + $0x140] sm:$0xff]
        %v449 = vld [vmem:[%s344 + $0x148] sm:$0xff]
        %v450 = vld [vmem:[%s344 + $0x150] sm:$0xff]
        %v451 = vld [vmem:[%s344 + $0x158] sm:$0xff]
        %v452 = vld [vmem:[%s344 + $0x160] sm:$0xff]
        %v453 = vld [vmem:[%s344 + $0x168] sm:$0xff]
        %v454 = vld [vmem:[%s344 + $0x170] sm:$0xff]
        %v455 = vld [vmem:[%s344 + $0x178] sm:$0xff]
        %v456 = vld [vmem:[%s344 + $0x180] sm:$0xff]
        %v457 = vld [vmem:[%s344 + $0x188] sm:$0xff]
        %v458 = vld [vmem:[%s344 + $0x190] sm:$0xff]
        %v459 = vld [vmem:[%s344 + $0x198] sm:$0xff]
        %v460 = vld [vmem:[%s344 + $0x1a0] sm:$0xff]
        %v461 = vld [vmem:[%s344 + $0x1a8] sm:$0xff]
        %v462 = vld [vmem:[%s344 + $0x1b0] sm:$0xff]
        %v463 = vld [vmem:[%s344 + $0x1b8] sm:$0xff]
        %v464 = vld [vmem:[#allocation4] sm:$0xff]
        %v465 = vld [vmem:[#allocation4 + $0x8] sm:$0xff]
        %v466 = vld [vmem:[#allocation4 + $0x10] sm:$0xff]
        %v467 = vld [vmem:[#allocation4 + $0x18] sm:$0xff]
        %v468 = vld [vmem:[#allocation4 + $0x20] sm:$0xff]
        %v469 = vld [vmem:[#allocation4 + $0x28] sm:$0xff]
        %v470 = vld [vmem:[#allocation4 + $0x30] sm:$0xff]
        %v471 = vld [vmem:[#allocation4 + $0x38] sm:$0xff]
        %v472 = vld [vmem:[#allocation4 + $0x40] sm:$0xff]
        %v473 = vld [vmem:[#allocation4 + $0x48] sm:$0xff]
        %v474 = vld [vmem:[#allocation4 + $0x50] sm:$0xff]
        %v475 = vld [vmem:[#allocation4 + $0x58] sm:$0xff]
        %v476 = vld [vmem:[#allocation4 + $0x60] sm:$0xff]
        %v477 = vld [vmem:[#allocation4 + $0x68] sm:$0xff]
        %v478 = vld [vmem:[#allocation4 + $0x70] sm:$0xff]
        %v479 = vld [vmem:[#allocation4 + $0x78] sm:$0xff]
        %v480 = vld [vmem:[#allocation4 + $0x80] sm:$0xff]
        %v481 = vld [vmem:[#allocation4 + $0x88] sm:$0xff]
        %v482 = vld [vmem:[#allocation4 + $0x90] sm:$0xff]
        %v483 = vld [vmem:[#allocation4 + $0x98] sm:$0xff]
        %v484 = vld [vmem:[#allocation4 + $0xa0] sm:$0xff]
        %v485 = vld [vmem:[#allocation4 + $0xa8] sm:$0xff]
        %v486 = vld [vmem:[#allocation4 + $0xb0] sm:$0xff]
        %v487 = vld [vmem:[#allocation4 + $0xb8] sm:$0xff]
        %v488 = vld [vmem:[#allocation4 + $0xc0] sm:$0xff]
        %v489 = vld [vmem:[#allocation4 + $0xc8] sm:$0xff]
        %v490 = vld [vmem:[#allocation4 + $0xd0] sm:$0xff]
        %v491 = vld [vmem:[#allocation4 + $0xd8] sm:$0xff]
        %v492 = vld [vmem:[#allocation4 + $0xe0] sm:$0xff]
        %v493 = vld [vmem:[#allocation4 + $0xe8] sm:$0xff]
        %v494 = vld [vmem:[#allocation4 + $0xf0] sm:$0xff]
        %v495 = vld [vmem:[#allocation4 + $0xf8] sm:$0xff]
        %v496 = vld [vmem:[#allocation4 + $0x100] sm:$0xff]
        %v497 = vld [vmem:[#allocation4 + $0x108] sm:$0xff]
        %v498 = vld [vmem:[#allocation4 + $0x110] sm:$0xff]
        %v499 = vld [vmem:[#allocation4 + $0x118] sm:$0xff]
        %v500 = vld [vmem:[#allocation4 + $0x120] sm:$0xff]
        %v501 = vld [vmem:[#allocation4 + $0x128] sm:$0xff]
        %v502 = vld [vmem:[#allocation4 + $0x130] sm:$0xff]
        %v503 = vld [vmem:[#allocation4 + $0x138] sm:$0xff]
        %v504 = vld [vmem:[#allocation4 + $0x140] sm:$0xff]
        %v505 = vld [vmem:[#allocation4 + $0x148] sm:$0xff]
        %v506 = vld [vmem:[#allocation4 + $0x150] sm:$0xff]
        %v507 = vld [vmem:[#allocation4 + $0x158] sm:$0xff]
        %v508 = vld [vmem:[#allocation4 + $0x160] sm:$0xff]
        %v509 = vld [vmem:[#allocation4 + $0x168] sm:$0xff]
        %v510 = vld [vmem:[#allocation4 + $0x170] sm:$0xff]
        %v511 = vld [vmem:[#allocation4 + $0x178] sm:$0xff]
        %v512 = vld [vmem:[#allocation4 + $0x180] sm:$0xff]
        %v513 = vld [vmem:[#allocation4 + $0x188] sm:$0xff]
        %v514 = vld [vmem:[#allocation4 + $0x190] sm:$0xff]
        %v515 = vld [vmem:[#allocation4 + $0x198] sm:$0xff]
        %v516 = vld [vmem:[#allocation4 + $0x1a0] sm:$0xff]
        %v517 = vld [vmem:[#allocation4 + $0x1a8] sm:$0xff]
        %v518 = vld [vmem:[#allocation4 + $0x1b0] sm:$0xff]
        %v519 = vld [vmem:[#allocation4 + $0x1b8] sm:$0xff]
        %v520 = vld [vmem:[#allocation4 + $0x1c0] sm:$0xff]
        %v521 = vld [vmem:[#allocation4 + $0x1c8] sm:$0xff]
        %v522 = vld [vmem:[#allocation4 + $0x1d0] sm:$0xff]
        %v523 = vld [vmem:[#allocation4 + $0x1d8] sm:$0xff]
        %v524 = vld [vmem:[#allocation4 + $0x1e0] sm:$0xff]
        %v525 = vld [vmem:[#allocation4 + $0x1e8] sm:$0xff]
        %v526 = vld [vmem:[#allocation4 + $0x1f0] sm:$0xff]
        %v527 = vld [vmem:[#allocation4 + $0x1f8] sm:$0xff]
        %v528 = vld [vmem:[#allocation4 + $0x200] sm:$0xff]
        %v529 = vld [vmem:[#allocation4 + $0x208] sm:$0xff]
        %v530 = vld [vmem:[#allocation4 + $0x210] sm:$0xff]
        %v531 = vld [vmem:[#allocation4 + $0x218] sm:$0xff]
        %v532 = vld [vmem:[#allocation4 + $0x220] sm:$0xff]
        %v533 = vld [vmem:[#allocation4 + $0x228] sm:$0xff]
        %v534 = vld [vmem:[#allocation4 + $0x230] sm:$0xff]
        %v535 = vld [vmem:[#allocation4 + $0x238] sm:$0xff]
        %v536 = vld [vmem:[#allocation4 + $0x240] sm:$0xff]
        %v537 = vld [vmem:[#allocation4 + $0x248] sm:$0xff]
        %v538 = vld [vmem:[#allocation4 + $0x250] sm:$0xff]
        %v539 = vld [vmem:[#allocation4 + $0x258] sm:$0xff]
        %v540 = vld [vmem:[#allocation4 + $0x260] sm:$0xff]
        %v541 = vld [vmem:[#allocation4 + $0x268] sm:$0xff]
        %v542 = vld [vmem:[#allocation4 + $0x270] sm:$0xff]
        %v543 = vld [vmem:[#allocation4 + $0x278] sm:$0xff]
        %v544 = vld [vmem:[#allocation4 + $0x280] sm:$0xff]
        %v545 = vld [vmem:[#allocation4 + $0x288] sm:$0xff]
        %v546 = vld [vmem:[#allocation4 + $0x290] sm:$0xff]
        %v547 = vld [vmem:[#allocation4 + $0x298] sm:$0xff]
        %v548 = vld [vmem:[#allocation4 + $0x2a0] sm:$0xff]
        %v549 = vld [vmem:[#allocation4 + $0x2a8] sm:$0xff]
        %v550 = vld [vmem:[#allocation4 + $0x2b0] sm:$0xff]
        %v551 = vld [vmem:[#allocation4 + $0x2b8] sm:$0xff]
        %v552 = vld [vmem:[#allocation4 + $0x2c0] sm:$0xff]
        %v553 = vld [vmem:[#allocation4 + $0x2c8] sm:$0xff]
        %v554 = vld [vmem:[#allocation4 + $0x2d0] sm:$0xff]
        %v555 = vld [vmem:[#allocation4 + $0x2d8] sm:$0xff]
        %v556 = vld [vmem:[#allocation4 + $0x2e0] sm:$0xff]
        %v557 = vld [vmem:[#allocation4 + $0x2e8] sm:$0xff]
        %v558 = vld [vmem:[#allocation4 + $0x2f0] sm:$0xff]
        %v559 = vld [vmem:[#allocation4 + $0x2f8] sm:$0xff]
        %v560 = vld [vmem:[#allocation4 + $0x300] sm:$0xff]
        %v561 = vld [vmem:[#allocation4 + $0x308] sm:$0xff]
        %v562 = vld [vmem:[#allocation4 + $0x310] sm:$0xff]
        %v563 = vld [vmem:[#allocation4 + $0x318] sm:$0xff]
        %v564 = vld [vmem:[#allocation4 + $0x320] sm:$0xff]
        %v565 = vld [vmem:[#allocation4 + $0x328] sm:$0xff]
        %v566 = vld [vmem:[#allocation4 + $0x330] sm:$0xff]
        %v567 = vld [vmem:[#allocation4 + $0x338] sm:$0xff]
        %v568 = vld [vmem:[#allocation4 + $0x340] sm:$0xff]
        %v569 = vld [vmem:[#allocation4 + $0x348] sm:$0xff]
        %v570 = vld [vmem:[#allocation4 + $0x350] sm:$0xff]
        %v571 = vld [vmem:[#allocation4 + $0x358] sm:$0xff]
        %v572 = vld [vmem:[#allocation4 + $0x360] sm:$0xff]
        %v573 = vld [vmem:[#allocation4 + $0x368] sm:$0xff]
        %v574 = vld [vmem:[#allocation4 + $0x370] sm:$0xff]
        %v575 = vld [vmem:[#allocation4 + $0x378] sm:$0xff]
        %v576 = vld [vmem:[#allocation4 + $0x380] sm:$0xff]
        %v577 = vld [vmem:[#allocation4 + $0x388] sm:$0xff]
        %v578 = vld [vmem:[#allocation4 + $0x390] sm:$0xff]
        %v579 = vld [vmem:[#allocation4 + $0x398] sm:$0xff]
        %v580 = vld [vmem:[#allocation4 + $0x3a0] sm:$0xff]
        %v581 = vld [vmem:[#allocation4 + $0x3a8] sm:$0xff]
        %v582 = vld [vmem:[#allocation4 + $0x3b0] sm:$0xff]
        %v583 = vld [vmem:[#allocation4 + $0x3b8] sm:$0xff]
        %v584 = vld [vmem:[#allocation4 + $0x3c0] sm:$0xff]
        %v585 = vld [vmem:[#allocation4 + $0x3c8] sm:$0xff]
        %v586 = vld [vmem:[#allocation4 + $0x3d0] sm:$0xff]
        %v587 = vld [vmem:[#allocation4 + $0x3d8] sm:$0xff]
        %v588 = vld [vmem:[#allocation4 + $0x3e0] sm:$0xff]
        %v589 = vld [vmem:[#allocation4 + $0x3e8] sm:$0xff]
        %v590 = vld [vmem:[#allocation4 + $0x3f0] sm:$0xff]
        %v591 = vld [vmem:[#allocation4 + $0x3f8] sm:$0xff]
        %v592 = vld [vmem:[#allocation6] sm:$0x3]
        %v594 = vperm.slane %v592, 0
        %v595 = vperm.slane %v592, 1
        %598 = vmatpush.msra.mxu0 %v494
        %599 = vmatpush.msra.mxu0 %v492
        %600 = vmatpush.msra.mxu0 %v490
        %601 = vmatpush.msra.mxu0 %v488
        %602 = vmatpush.msra.mxu0 %v486
        %603 = vmatpush.msra.mxu0 %v484
        %604 = vmatpush.msra.mxu0 %v482
        %605 = vmatpush.msra.mxu0 %v480
        %606 = vmatpush.msra.mxu0 %v478
        %607 = vmatpush.msra.mxu0 %v476
        %608 = vmatpush.msra.mxu0 %v474
        %609 = vmatpush.msra.mxu0 %v472
        %610 = vmatpush.msra.mxu0 %v470
        %611 = vmatpush.msra.mxu0 %v468
        %612 = vmatpush.msra.mxu0 %v466
        %613 = vmatpush.msra.mxu0 %v464
        %614 = vmatmul.f32.gmra.mxu0 %v408
        %v615 = vpop.f32.mrf.mxu0
        %v616 = vadd.f32 %v594, %v615
        %617 = vmatmul.f32.gmra.mxu0 %v412
        %v618 = vpop.f32.mrf.mxu0
        %v619 = vadd.f32 %v594, %v618
        %620 = vmatmul.f32.gmra.mxu0 %v416
        %v621 = vpop.f32.mrf.mxu0
        %v622 = vadd.f32 %v594, %v621
        %623 = vmatmul.f32.gmra.mxu0 %v420
        %v624 = vpop.f32.mrf.mxu0
        %v625 = vadd.f32 %v594, %v624
        %626 = vmatmul.f32.gmra.mxu0 %v424
        %v627 = vpop.f32.mrf.mxu0
        %v628 = vadd.f32 %v594, %v627
        %629 = vmatmul.f32.gmra.mxu0 %v428
        %v630 = vpop.f32.mrf.mxu0
        %v631 = vadd.f32 %v594, %v630
        %632 = vmatmul.f32.gmra.mxu0 %v432
        %v633 = vpop.f32.mrf.mxu0
        %v634 = vadd.f32 %v594, %v633
        %635 = vmatmul.f32.gmra.mxu0 %v436
        %v636 = vpop.f32.mrf.mxu0
        %v637 = vadd.f32 %v594, %v636
        %638 = vmatmul.f32.gmra.mxu0 %v440
        %v639 = vpop.f32.mrf.mxu0
        %v640 = vadd.f32 %v594, %v639
        %641 = vmatmul.f32.gmra.mxu0 %v444
        %v642 = vpop.f32.mrf.mxu0
        %v643 = vadd.f32 %v594, %v642
        %644 = vmatmul.f32.gmra.mxu0 %v448
        %v645 = vpop.f32.mrf.mxu0
        %v646 = vadd.f32 %v594, %v645
        %647 = vmatmul.f32.gmra.mxu0 %v452
        %v648 = vpop.f32.mrf.mxu0
        %v649 = vadd.f32 %v594, %v648
        %650 = vmatmul.f32.gmra.mxu0 %v456
        %v651 = vpop.f32.mrf.mxu0
        %v652 = vadd.f32 %v594, %v651
        %653 = vmatmul.f32.gmra.mxu0 %v460
        %v654 = vpop.f32.mrf.mxu0
        %v655 = vadd.f32 %v594, %v654
        %656 = vdwg.mxu0
        %657 = vmatpush.msra.mxu0 %v526
        %658 = vmatpush.msra.mxu0 %v524
        %659 = vmatpush.msra.mxu0 %v522
        %660 = vmatpush.msra.mxu0 %v520
        %661 = vmatpush.msra.mxu0 %v518
        %662 = vmatpush.msra.mxu0 %v516
        %663 = vmatpush.msra.mxu0 %v514
        %664 = vmatpush.msra.mxu0 %v512
        %665 = vmatpush.msra.mxu0 %v510
        %666 = vmatpush.msra.mxu0 %v508
        %667 = vmatpush.msra.mxu0 %v506
        %668 = vmatpush.msra.mxu0 %v504
        %669 = vmatpush.msra.mxu0 %v502
        %670 = vmatpush.msra.mxu0 %v500
        %671 = vmatpush.msra.mxu0 %v498
        %672 = vmatpush.msra.mxu0 %v496
        %673 = vmatmul.f32.gmra.mxu0 %v409
        %v674 = vpop.f32.mrf.mxu0
        %v675 = vadd.f32 %v616, %v674
        %676 = vmatmul.f32.gmra.mxu0 %v413
        %v677 = vpop.f32.mrf.mxu0
        %v678 = vadd.f32 %v619, %v677
        %679 = vmatmul.f32.gmra.mxu0 %v417
        %v680 = vpop.f32.mrf.mxu0
        %v681 = vadd.f32 %v622, %v680
        %682 = vmatmul.f32.gmra.mxu0 %v421
        %v683 = vpop.f32.mrf.mxu0
        %v684 = vadd.f32 %v625, %v683
        %685 = vmatmul.f32.gmra.mxu0 %v425
        %v686 = vpop.f32.mrf.mxu0
        %v687 = vadd.f32 %v628, %v686
        %688 = vmatmul.f32.gmra.mxu0 %v429
        %v689 = vpop.f32.mrf.mxu0
        %v690 = vadd.f32 %v631, %v689
        %691 = vmatmul.f32.gmra.mxu0 %v433
        %v692 = vpop.f32.mrf.mxu0
        %v693 = vadd.f32 %v634, %v692
        %694 = vmatmul.f32.gmra.mxu0 %v437
        %v695 = vpop.f32.mrf.mxu0
        %v696 = vadd.f32 %v637, %v695
        %697 = vmatmul.f32.gmra.mxu0 %v441
        %v698 = vpop.f32.mrf.mxu0
        %v699 = vadd.f32 %v640, %v698
        %700 = vmatmul.f32.gmra.mxu0 %v445
        %v701 = vpop.f32.mrf.mxu0
        %v702 = vadd.f32 %v643, %v701
        %703 = vmatmul.f32.gmra.mxu0 %v449
        %v704 = vpop.f32.mrf.mxu0
        %v705 = vadd.f32 %v646, %v704
        %706 = vmatmul.f32.gmra.mxu0 %v453
        %v707 = vpop.f32.mrf.mxu0
        %v708 = vadd.f32 %v649, %v707
        %709 = vmatmul.f32.gmra.mxu0 %v457
        %v710 = vpop.f32.mrf.mxu0
        %v711 = vadd.f32 %v652, %v710
        %712 = vmatmul.f32.gmra.mxu0 %v461
        %v713 = vpop.f32.mrf.mxu0
        %v714 = vadd.f32 %v655, %v713
        %715 = vdwg.mxu0
        %716 = vmatpush.msra.mxu0 %v558
        %717 = vmatpush.msra.mxu0 %v556
        %718 = vmatpush.msra.mxu0 %v554
        %719 = vmatpush.msra.mxu0 %v552
        %720 = vmatpush.msra.mxu0 %v550
        %721 = vmatpush.msra.mxu0 %v548
        %722 = vmatpush.msra.mxu0 %v546
        %723 = vmatpush.msra.mxu0 %v544
        %724 = vmatpush.msra.mxu0 %v542
        %725 = vmatpush.msra.mxu0 %v540
        %726 = vmatpush.msra.mxu0 %v538
        %727 = vmatpush.msra.mxu0 %v536
        %728 = vmatpush.msra.mxu0 %v534
        %729 = vmatpush.msra.mxu0 %v532
        %730 = vmatpush.msra.mxu0 %v530
        %731 = vmatpush.msra.mxu0 %v528
        %732 = vmatmul.f32.gmra.mxu0 %v410
        %v733 = vpop.f32.mrf.mxu0
        %v734 = vadd.f32 %v675, %v733
        %735 = vmatmul.f32.gmra.mxu0 %v414
        %v736 = vpop.f32.mrf.mxu0
        %v737 = vadd.f32 %v678, %v736
        %738 = vmatmul.f32.gmra.mxu0 %v418
        %v739 = vpop.f32.mrf.mxu0
        %v740 = vadd.f32 %v681, %v739
        %741 = vmatmul.f32.gmra.mxu0 %v422
        %v742 = vpop.f32.mrf.mxu0
        %v743 = vadd.f32 %v684, %v742
        %744 = vmatmul.f32.gmra.mxu0 %v426
        %v745 = vpop.f32.mrf.mxu0
        %v746 = vadd.f32 %v687, %v745
        %747 = vmatmul.f32.gmra.mxu0 %v430
        %v748 = vpop.f32.mrf.mxu0
        %v749 = vadd.f32 %v690, %v748
        %750 = vmatmul.f32.gmra.mxu0 %v434
        %v751 = vpop.f32.mrf.mxu0
        %v752 = vadd.f32 %v693, %v751
        %753 = vmatmul.f32.gmra.mxu0 %v438
        %v754 = vpop.f32.mrf.mxu0
        %v755 = vadd.f32 %v696, %v754
        %756 = vmatmul.f32.gmra.mxu0 %v442
        %v757 = vpop.f32.mrf.mxu0
        %v758 = vadd.f32 %v699, %v757
        %759 = vmatmul.f32.gmra.mxu0 %v446
        %v760 = vpop.f32.mrf.mxu0
        %v761 = vadd.f32 %v702, %v760
        %762 = vmatmul.f32.gmra.mxu0 %v450
        %v763 = vpop.f32.mrf.mxu0
        %v764 = vadd.f32 %v705, %v763
        %765 = vmatmul.f32.gmra.mxu0 %v454
        %v766 = vpop.f32.mrf.mxu0
        %v767 = vadd.f32 %v708, %v766
        %768 = vmatmul.f32.gmra.mxu0 %v458
        %v769 = vpop.f32.mrf.mxu0
        %v770 = vadd.f32 %v711, %v769
        %771 = vmatmul.f32.gmra.mxu0 %v462
        %v772 = vpop.f32.mrf.mxu0
        %v773 = vadd.f32 %v714, %v772
        %774 = vdwg.mxu0
        %775 = vmatpush.msra.mxu0 %v590
        %776 = vmatpush.msra.mxu0 %v588
        %777 = vmatpush.msra.mxu0 %v586
        %778 = vmatpush.msra.mxu0 %v584
        %779 = vmatpush.msra.mxu0 %v582
        %780 = vmatpush.msra.mxu0 %v580
        %781 = vmatpush.msra.mxu0 %v578
        %782 = vmatpush.msra.mxu0 %v576
        %783 = vmatpush.msra.mxu0 %v574
        %784 = vmatpush.msra.mxu0 %v572
        %785 = vmatpush.msra.mxu0 %v570
        %786 = vmatpush.msra.mxu0 %v568
        %787 = vmatpush.msra.mxu0 %v566
        %788 = vmatpush.msra.mxu0 %v564
        %789 = vmatpush.msra.mxu0 %v562
        %790 = vmatpush.msra.mxu0 %v560
        %791 = vmatmul.f32.gmra.mxu0 %v411
        %v792 = vpop.f32.mrf.mxu0
        %v793 = vadd.f32 %v734, %v792
        %794 = vmatmul.f32.gmra.mxu0 %v415
        %v795 = vpop.f32.mrf.mxu0
        %v796 = vadd.f32 %v737, %v795
        %797 = vmatmul.f32.gmra.mxu0 %v419
        %v798 = vpop.f32.mrf.mxu0
        %v799 = vadd.f32 %v740, %v798
        %800 = vmatmul.f32.gmra.mxu0 %v423
        %v801 = vpop.f32.mrf.mxu0
        %v802 = vadd.f32 %v743, %v801
        %803 = vmatmul.f32.gmra.mxu0 %v427
        %v804 = vpop.f32.mrf.mxu0
        %v805 = vadd.f32 %v746, %v804
        %806 = vmatmul.f32.gmra.mxu0 %v431
        %v807 = vpop.f32.mrf.mxu0
        %v808 = vadd.f32 %v749, %v807
        %809 = vmatmul.f32.gmra.mxu0 %v435
        %v810 = vpop.f32.mrf.mxu0
        %v811 = vadd.f32 %v752, %v810
        %812 = vmatmul.f32.gmra.mxu0 %v439
        %v813 = vpop.f32.mrf.mxu0
        %v814 = vadd.f32 %v755, %v813
        %815 = vmatmul.f32.gmra.mxu0 %v443
        %v816 = vpop.f32.mrf.mxu0
        %v817 = vadd.f32 %v758, %v816
        %818 = vmatmul.f32.gmra.mxu0 %v447
        %v819 = vpop.f32.mrf.mxu0
        %v820 = vadd.f32 %v761, %v819
        %821 = vmatmul.f32.gmra.mxu0 %v451
        %v822 = vpop.f32.mrf.mxu0
        %v823 = vadd.f32 %v764, %v822
        %824 = vmatmul.f32.gmra.mxu0 %v455
        %v825 = vpop.f32.mrf.mxu0
        %v826 = vadd.f32 %v767, %v825
        %827 = vmatmul.f32.gmra.mxu0 %v459
        %v828 = vpop.f32.mrf.mxu0
        %v829 = vadd.f32 %v770, %v828
        %830 = vmatmul.f32.gmra.mxu0 %v463
        %v831 = vpop.f32.mrf.mxu0
        %v832 = vadd.f32 %v773, %v831
        %833 = vdwg.mxu0
        %834 = vmatpush.msra.mxu0 %v495
        %835 = vmatpush.msra.mxu0 %v493
        %836 = vmatpush.msra.mxu0 %v491
        %837 = vmatpush.msra.mxu0 %v489
        %838 = vmatpush.msra.mxu0 %v487
        %839 = vmatpush.msra.mxu0 %v485
        %840 = vmatpush.msra.mxu0 %v483
        %841 = vmatpush.msra.mxu0 %v481
        %842 = vmatpush.msra.mxu0 %v479
        %843 = vmatpush.msra.mxu0 %v477
        %844 = vmatpush.msra.mxu0 %v475
        %845 = vmatpush.msra.mxu0 %v473
        %846 = vmatpush.msra.mxu0 %v471
        %847 = vmatpush.msra.mxu0 %v469
        %848 = vmatpush.msra.mxu0 %v467
        %849 = vmatpush.msra.mxu0 %v465
        %850 = vmatmul.f32.gmra.mxu0 %v408
        %v851 = vpop.f32.mrf.mxu0
        %v852 = vadd.f32 %v595, %v851
        %853 = vmatmul.f32.gmra.mxu0 %v412
        %v854 = vpop.f32.mrf.mxu0
        %v855 = vadd.f32 %v595, %v854
        %856 = vmatmul.f32.gmra.mxu0 %v416
        %v857 = vpop.f32.mrf.mxu0
        %v858 = vadd.f32 %v595, %v857
        %859 = vmatmul.f32.gmra.mxu0 %v420
        %v860 = vpop.f32.mrf.mxu0
        %v861 = vadd.f32 %v595, %v860
        %862 = vmatmul.f32.gmra.mxu0 %v424
        %v863 = vpop.f32.mrf.mxu0
        %v864 = vadd.f32 %v595, %v863
        %865 = vmatmul.f32.gmra.mxu0 %v428
        %v866 = vpop.f32.mrf.mxu0
        %v867 = vadd.f32 %v595, %v866
        %868 = vmatmul.f32.gmra.mxu0 %v432
        %v869 = vpop.f32.mrf.mxu0
        %v870 = vadd.f32 %v595, %v869
        %871 = vmatmul.f32.gmra.mxu0 %v436
        %v872 = vpop.f32.mrf.mxu0
        %v873 = vadd.f32 %v595, %v872
        %874 = vmatmul.f32.gmra.mxu0 %v440
        %v875 = vpop.f32.mrf.mxu0
        %v876 = vadd.f32 %v595, %v875
        %877 = vmatmul.f32.gmra.mxu0 %v444
        %v878 = vpop.f32.mrf.mxu0
        %v879 = vadd.f32 %v595, %v878
        %880 = vmatmul.f32.gmra.mxu0 %v448
        %v881 = vpop.f32.mrf.mxu0
        %v882 = vadd.f32 %v595, %v881
        %883 = vmatmul.f32.gmra.mxu0 %v452
        %v884 = vpop.f32.mrf.mxu0
        %v885 = vadd.f32 %v595, %v884
        %886 = vmatmul.f32.gmra.mxu0 %v456
        %v887 = vpop.f32.mrf.mxu0
        %v888 = vadd.f32 %v595, %v887
        %889 = vmatmul.f32.gmra.mxu0 %v460
        %v890 = vpop.f32.mrf.mxu0
        %v891 = vadd.f32 %v595, %v890
        %892 = vdwg.mxu0
        %893 = vmatpush.msra.mxu0 %v527
        %894 = vmatpush.msra.mxu0 %v525
        %895 = vmatpush.msra.mxu0 %v523
        %896 = vmatpush.msra.mxu0 %v521
        %897 = vmatpush.msra.mxu0 %v519
        %898 = vmatpush.msra.mxu0 %v517
        %899 = vmatpush.msra.mxu0 %v515
        %900 = vmatpush.msra.mxu0 %v513
        %901 = vmatpush.msra.mxu0 %v511
        %902 = vmatpush.msra.mxu0 %v509
        %903 = vmatpush.msra.mxu0 %v507
        %904 = vmatpush.msra.mxu0 %v505
        %905 = vmatpush.msra.mxu0 %v503
        %906 = vmatpush.msra.mxu0 %v501
        %907 = vmatpush.msra.mxu0 %v499
        %908 = vmatpush.msra.mxu0 %v497
        %909 = vmatmul.f32.gmra.mxu0 %v409
        %v910 = vpop.f32.mrf.mxu0
        %v911 = vadd.f32 %v852, %v910
        %912 = vmatmul.f32.gmra.mxu0 %v413
        %v913 = vpop.f32.mrf.mxu0
        %v914 = vadd.f32 %v855, %v913
        %915 = vmatmul.f32.gmra.mxu0 %v417
        %v916 = vpop.f32.mrf.mxu0
        %v917 = vadd.f32 %v858, %v916
        %918 = vmatmul.f32.gmra.mxu0 %v421
        %v919 = vpop.f32.mrf.mxu0
        %v920 = vadd.f32 %v861, %v919
        %921 = vmatmul.f32.gmra.mxu0 %v425
        %v922 = vpop.f32.mrf.mxu0
        %v923 = vadd.f32 %v864, %v922
        %924 = vmatmul.f32.gmra.mxu0 %v429
        %v925 = vpop.f32.mrf.mxu0
        %v926 = vadd.f32 %v867, %v925
        %927 = vmatmul.f32.gmra.mxu0 %v433
        %v928 = vpop.f32.mrf.mxu0
        %v929 = vadd.f32 %v870, %v928
        %930 = vmatmul.f32.gmra.mxu0 %v437
        %v931 = vpop.f32.mrf.mxu0
        %v932 = vadd.f32 %v873, %v931
        %933 = vmatmul.f32.gmra.mxu0 %v441
        %v934 = vpop.f32.mrf.mxu0
        %v935 = vadd.f32 %v876, %v934
        %936 = vmatmul.f32.gmra.mxu0 %v445
        %v937 = vpop.f32.mrf.mxu0
        %v938 = vadd.f32 %v879, %v937
        %939 = vmatmul.f32.gmra.mxu0 %v449
        %v940 = vpop.f32.mrf.mxu0
        %v941 = vadd.f32 %v882, %v940
        %942 = vmatmul.f32.gmra.mxu0 %v453
        %v943 = vpop.f32.mrf.mxu0
        %v944 = vadd.f32 %v885, %v943
        %945 = vmatmul.f32.gmra.mxu0 %v457
        %v946 = vpop.f32.mrf.mxu0
        %v947 = vadd.f32 %v888, %v946
        %948 = vmatmul.f32.gmra.mxu0 %v461
        %v949 = vpop.f32.mrf.mxu0
        %v950 = vadd.f32 %v891, %v949
        %951 = vdwg.mxu0
        %952 = vmatpush.msra.mxu0 %v559
        %953 = vmatpush.msra.mxu0 %v557
        %954 = vmatpush.msra.mxu0 %v555
        %955 = vmatpush.msra.mxu0 %v553
        %956 = vmatpush.msra.mxu0 %v551
        %957 = vmatpush.msra.mxu0 %v549
        %958 = vmatpush.msra.mxu0 %v547
        %959 = vmatpush.msra.mxu0 %v545
        %960 = vmatpush.msra.mxu0 %v543
        %961 = vmatpush.msra.mxu0 %v541
        %962 = vmatpush.msra.mxu0 %v539
        %963 = vmatpush.msra.mxu0 %v537
        %964 = vmatpush.msra.mxu0 %v535
        %965 = vmatpush.msra.mxu0 %v533
        %966 = vmatpush.msra.mxu0 %v531
        %967 = vmatpush.msra.mxu0 %v529
        %968 = vmatmul.f32.gmra.mxu0 %v410
        %v969 = vpop.f32.mrf.mxu0
        %v970 = vadd.f32 %v911, %v969
        %971 = vmatmul.f32.gmra.mxu0 %v414
        %v972 = vpop.f32.mrf.mxu0
        %v973 = vadd.f32 %v914, %v972
        %974 = vmatmul.f32.gmra.mxu0 %v418
        %v975 = vpop.f32.mrf.mxu0
        %v976 = vadd.f32 %v917, %v975
        %977 = vmatmul.f32.gmra.mxu0 %v422
        %v978 = vpop.f32.mrf.mxu0
        %v979 = vadd.f32 %v920, %v978
        %980 = vmatmul.f32.gmra.mxu0 %v426
        %v981 = vpop.f32.mrf.mxu0
        %v982 = vadd.f32 %v923, %v981
        %983 = vmatmul.f32.gmra.mxu0 %v430
        %v984 = vpop.f32.mrf.mxu0
        %v985 = vadd.f32 %v926, %v984
        %986 = vmatmul.f32.gmra.mxu0 %v434
        %v987 = vpop.f32.mrf.mxu0
        %v988 = vadd.f32 %v929, %v987
        %989 = vmatmul.f32.gmra.mxu0 %v438
        %v990 = vpop.f32.mrf.mxu0
        %v991 = vadd.f32 %v932, %v990
        %992 = vmatmul.f32.gmra.mxu0 %v442
        %v993 = vpop.f32.mrf.mxu0
        %v994 = vadd.f32 %v935, %v993
        %995 = vmatmul.f32.gmra.mxu0 %v446
        %v996 = vpop.f32.mrf.mxu0
        %v997 = vadd.f32 %v938, %v996
        %998 = vmatmul.f32.gmra.mxu0 %v450
        %v999 = vpop.f32.mrf.mxu0
        %v1000 = vadd.f32 %v941, %v999
        %1001 = vmatmul.f32.gmra.mxu0 %v454
        %v1002 = vpop.f32.mrf.mxu0
        %v1003 = vadd.f32 %v944, %v1002
        %1004 = vmatmul.f32.gmra.mxu0 %v458
        %v1005 = vpop.f32.mrf.mxu0
        %v1006 = vadd.f32 %v947, %v1005
        %1007 = vmatmul.f32.gmra.mxu0 %v462
        %v1008 = vpop.f32.mrf.mxu0
        %v1009 = vadd.f32 %v950, %v1008
        %1010 = vdwg.mxu0
        %1011 = vmatpush.msra.mxu0 %v591
        %1012 = vmatpush.msra.mxu0 %v589
        %1013 = vmatpush.msra.mxu0 %v587
        %1014 = vmatpush.msra.mxu0 %v585
        %1015 = vmatpush.msra.mxu0 %v583
        %1016 = vmatpush.msra.mxu0 %v581
        %1017 = vmatpush.msra.mxu0 %v579
        %1018 = vmatpush.msra.mxu0 %v577
        %1019 = vmatpush.msra.mxu0 %v575
        %1020 = vmatpush.msra.mxu0 %v573
        %1021 = vmatpush.msra.mxu0 %v571
        %1022 = vmatpush.msra.mxu0 %v569
        %1023 = vmatpush.msra.mxu0 %v567
        %1024 = vmatpush.msra.mxu0 %v565
        %1025 = vmatpush.msra.mxu0 %v563
        %1026 = vmatpush.msra.mxu0 %v561
        %1027 = vmatmul.f32.gmra.mxu0 %v411
        %v1028 = vpop.f32.mrf.mxu0
        %v1029 = vadd.f32 %v970, %v1028
        %1030 = vmatmul.f32.gmra.mxu0 %v415
        %v1031 = vpop.f32.mrf.mxu0
        %v1032 = vadd.f32 %v973, %v1031
        %1033 = vmatmul.f32.gmra.mxu0 %v419
        %v1034 = vpop.f32.mrf.mxu0
        %v1035 = vadd.f32 %v976, %v1034
        %1036 = vmatmul.f32.gmra.mxu0 %v423
        %v1037 = vpop.f32.mrf.mxu0
        %v1038 = vadd.f32 %v979, %v1037
        %1039 = vmatmul.f32.gmra.mxu0 %v427
        %v1040 = vpop.f32.mrf.mxu0
        %v1041 = vadd.f32 %v982, %v1040
        %1042 = vmatmul.f32.gmra.mxu0 %v431
        %v1043 = vpop.f32.mrf.mxu0
        %v1044 = vadd.f32 %v985, %v1043
        %1045 = vmatmul.f32.gmra.mxu0 %v435
        %v1046 = vpop.f32.mrf.mxu0
        %v1047 = vadd.f32 %v988, %v1046
        %1048 = vmatmul.f32.gmra.mxu0 %v439
        %v1049 = vpop.f32.mrf.mxu0
        %v1050 = vadd.f32 %v991, %v1049
        %1051 = vmatmul.f32.gmra.mxu0 %v443
        %v1052 = vpop.f32.mrf.mxu0
        %v1053 = vadd.f32 %v994, %v1052
        %1054 = vmatmul.f32.gmra.mxu0 %v447
        %v1055 = vpop.f32.mrf.mxu0
        %v1056 = vadd.f32 %v997, %v1055
        %1057 = vmatmul.f32.gmra.mxu0 %v451
        %v1058 = vpop.f32.mrf.mxu0
        %v1059 = vadd.f32 %v1000, %v1058
        %1060 = vmatmul.f32.gmra.mxu0 %v455
        %v1061 = vpop.f32.mrf.mxu0
        %v1062 = vadd.f32 %v1003, %v1061
        %1063 = vmatmul.f32.gmra.mxu0 %v459
        %v1064 = vpop.f32.mrf.mxu0
        %v1065 = vadd.f32 %v1006, %v1064
        %1066 = vmatmul.f32.gmra.mxu0 %v463
        %v1067 = vpop.f32.mrf.mxu0
        %v1068 = vadd.f32 %v1009, %v1067
        %1069 = vdwg.mxu0
        %v1070 = vmul.f32 %v793, %v793
        %v1071 = vmul.f32 %v1029, %v1029
        %v1072 = vmul.f32 %v796, %v796
        %v1073 = vmul.f32 %v1032, %v1032
        %v1074 = vmul.f32 %v799, %v799
        %v1075 = vmul.f32 %v1035, %v1035
        %v1076 = vmul.f32 %v802, %v802
        %v1077 = vmul.f32 %v1038, %v1038
        %v1078 = vmul.f32 %v805, %v805
        %v1079 = vmul.f32 %v1041, %v1041
        %v1080 = vmul.f32 %v808, %v808
        %v1081 = vmul.f32 %v1044, %v1044
        %v1082 = vmul.f32 %v811, %v811
        %v1083 = vmul.f32 %v1047, %v1047
        %v1084 = vmul.f32 %v814, %v814
        %v1085 = vmul.f32 %v1050, %v1050
        %v1086 = vmul.f32 %v817, %v817
        %v1087 = vmul.f32 %v1053, %v1053
        %v1088 = vmul.f32 %v820, %v820
        %v1089 = vmul.f32 %v1056, %v1056
        %v1090 = vmul.f32 %v823, %v823
        %v1091 = vmul.f32 %v1059, %v1059
        %v1092 = vmul.f32 %v826, %v826
        %v1093 = vmul.f32 %v1062, %v1062
        %v1094 = vmul.f32 %v829, %v829
        %v1095 = vmul.f32 %v1065, %v1065
        %v1096 = vmul.f32 %v832, %v832
        %v1097 = vmul.f32 %v1068, %v1068
        %v1098 = vadd.f32 %v1070, %v1071
        %1099 = vadd.xlane.f32.xlu0 %v1098
        %v1100 = vpop.xlane.xlu0 %1099
        %v1101 = vadd.f32 %v1072, %v1073
        %1102 = vadd.xlane.f32.xlu0 %v1101
        %v1103 = vpop.xlane.xlu0 %1102
        %v1104 = vadd.f32 %v1074, %v1075
        %1105 = vadd.xlane.f32.xlu0 %v1104
        %v1106 = vpop.xlane.xlu0 %1105
        %v1107 = vadd.f32 %v1076, %v1077
        %1108 = vadd.xlane.f32.xlu0 %v1107
        %v1109 = vpop.xlane.xlu0 %1108
        %v1110 = vadd.f32 %v1078, %v1079
        %1111 = vadd.xlane.f32.xlu0 %v1110
        %v1112 = vpop.xlane.xlu0 %1111
        %v1113 = vadd.f32 %v1080, %v1081
        %1114 = vadd.xlane.f32.xlu0 %v1113
        %v1115 = vpop.xlane.xlu0 %1114
        %v1116 = vadd.f32 %v1082, %v1083
        %1117 = vadd.xlane.f32.xlu0 %v1116
        %v1118 = vpop.xlane.xlu0 %1117
        %v1119 = vadd.f32 %v1084, %v1085
        %1120 = vadd.xlane.f32.xlu0 %v1119
        %v1121 = vpop.xlane.xlu0 %1120
        %v1122 = vadd.f32 %v1086, %v1087
        %1123 = vadd.xlane.f32.xlu0 %v1122
        %v1124 = vpop.xlane.xlu0 %1123
        %v1125 = vadd.f32 %v1088, %v1089
        %1126 = vadd.xlane.f32.xlu0 %v1125
        %v1127 = vpop.xlane.xlu0 %1126
        %v1128 = vadd.f32 %v1090, %v1091
        %1129 = vadd.xlane.f32.xlu0 %v1128
        %v1130 = vpop.xlane.xlu0 %1129
        %v1131 = vadd.f32 %v1092, %v1093
        %1132 = vadd.xlane.f32.xlu0 %v1131
        %v1133 = vpop.xlane.xlu0 %1132
        %v1134 = vadd.f32 %v1094, %v1095
        %1135 = vadd.xlane.f32.xlu0 %v1134
        %v1136 = vpop.xlane.xlu0 %1135
        %v1137 = vadd.f32 %v1096, %v1097
        %1138 = vadd.xlane.f32.xlu0 %v1137
        %v1139 = vpop.xlane.xlu0 %1138
        %v1140 = vmax.f32 %v1100, 1e-24
        %v1141 = vmax.f32 %v1103, 1e-24
        %v1142 = vmax.f32 %v1106, 1e-24
        %v1143 = vmax.f32 %v1109, 1e-24
        %v1144 = vmax.f32 %v1112, 1e-24
        %v1145 = vmax.f32 %v1115, 1e-24
        %v1146 = vmax.f32 %v1118, 1e-24
        %v1147 = vmax.f32 %v1121, 1e-24
        %v1148 = vmax.f32 %v1124, 1e-24
        %v1149 = vmax.f32 %v1127, 1e-24
        %v1150 = vmax.f32 %v1130, 1e-24
        %v1151 = vmax.f32 %v1133, 1e-24
        %v1152 = vmax.f32 %v1136, 1e-24
        %v1153 = vmax.f32 %v1139, 1e-24
        %v1154 = vrsqrt.pop %v1140
        %v1155 = vmul.f32 %v1154, %v1140
        %v1156 = vmul.f32 %v1155, %v1154
        %v1157 = vmul.f32 0.5, %v1156
        %v1158 = vsub.f32 1.5, %v1157
        %v1159 = vmul.f32 %v1154, %v1158
        %vm1160 = vweird.f32 %v1140
        %vm1161 = vweird.f32 %v1154
        %vm1162 = vmor %vm1160, %vm1161
        %v1163 = vsel %vm1162, %v1154, %v1159
        %v1164 = vrsqrt.pop %v1141
        %v1165 = vmul.f32 %v1164, %v1141
        %v1166 = vmul.f32 %v1165, %v1164
        %v1167 = vmul.f32 0.5, %v1166
        %v1168 = vsub.f32 1.5, %v1167
        %v1169 = vmul.f32 %v1164, %v1168
        %vm1170 = vweird.f32 %v1141
        %vm1171 = vweird.f32 %v1164
        %vm1172 = vmor %vm1170, %vm1171
        %v1173 = vsel %vm1172, %v1164, %v1169
        %v1174 = vrsqrt.pop %v1142
        %v1175 = vmul.f32 %v1174, %v1142
        %v1176 = vmul.f32 %v1175, %v1174
        %v1177 = vmul.f32 0.5, %v1176
        %v1178 = vsub.f32 1.5, %v1177
        %v1179 = vmul.f32 %v1174, %v1178
        %vm1180 = vweird.f32 %v1142
        %vm1181 = vweird.f32 %v1174
        %vm1182 = vmor %vm1180, %vm1181
        %v1183 = vsel %vm1182, %v1174, %v1179
        %v1184 = vrsqrt.pop %v1143
        %v1185 = vmul.f32 %v1184, %v1143
        %v1186 = vmul.f32 %v1185, %v1184
        %v1187 = vmul.f32 0.5, %v1186
        %v1188 = vsub.f32 1.5, %v1187
        %v1189 = vmul.f32 %v1184, %v1188
        %vm1190 = vweird.f32 %v1143
        %vm1191 = vweird.f32 %v1184
        %vm1192 = vmor %vm1190, %vm1191
        %v1193 = vsel %vm1192, %v1184, %v1189
        %v1194 = vrsqrt.pop %v1144
        %v1195 = vmul.f32 %v1194, %v1144
        %v1196 = vmul.f32 %v1195, %v1194
        %v1197 = vmul.f32 0.5, %v1196
        %v1198 = vsub.f32 1.5, %v1197
        %v1199 = vmul.f32 %v1194, %v1198
        %vm1200 = vweird.f32 %v1144
        %vm1201 = vweird.f32 %v1194
        %vm1202 = vmor %vm1200, %vm1201
        %v1203 = vsel %vm1202, %v1194, %v1199
        %v1204 = vrsqrt.pop %v1145
        %v1205 = vmul.f32 %v1204, %v1145
        %v1206 = vmul.f32 %v1205, %v1204
        %v1207 = vmul.f32 0.5, %v1206
        %v1208 = vsub.f32 1.5, %v1207
        %v1209 = vmul.f32 %v1204, %v1208
        %vm1210 = vweird.f32 %v1145
        %vm1211 = vweird.f32 %v1204
        %vm1212 = vmor %vm1210, %vm1211
        %v1213 = vsel %vm1212, %v1204, %v1209
        %v1214 = vrsqrt.pop %v1146
        %v1215 = vmul.f32 %v1214, %v1146
        %v1216 = vmul.f32 %v1215, %v1214
        %v1217 = vmul.f32 0.5, %v1216
        %v1218 = vsub.f32 1.5, %v1217
        %v1219 = vmul.f32 %v1214, %v1218
        %vm1220 = vweird.f32 %v1146
        %vm1221 = vweird.f32 %v1214
        %vm1222 = vmor %vm1220, %vm1221
        %v1223 = vsel %vm1222, %v1214, %v1219
        %v1224 = vrsqrt.pop %v1147
        %v1225 = vmul.f32 %v1224, %v1147
        %v1226 = vmul.f32 %v1225, %v1224
        %v1227 = vmul.f32 0.5, %v1226
        %v1228 = vsub.f32 1.5, %v1227
        %v1229 = vmul.f32 %v1224, %v1228
        %vm1230 = vweird.f32 %v1147
        %vm1231 = vweird.f32 %v1224
        %vm1232 = vmor %vm1230, %vm1231
        %v1233 = vsel %vm1232, %v1224, %v1229
        %v1234 = vrsqrt.pop %v1148
        %v1235 = vmul.f32 %v1234, %v1148
        %v1236 = vmul.f32 %v1235, %v1234
        %v1237 = vmul.f32 0.5, %v1236
        %v1238 = vsub.f32 1.5, %v1237
        %v1239 = vmul.f32 %v1234, %v1238
        %vm1240 = vweird.f32 %v1148
        %vm1241 = vweird.f32 %v1234
        %vm1242 = vmor %vm1240, %vm1241
        %v1243 = vsel %vm1242, %v1234, %v1239
        %v1244 = vrsqrt.pop %v1149
        %v1245 = vmul.f32 %v1244, %v1149
        %v1246 = vmul.f32 %v1245, %v1244
        %v1247 = vmul.f32 0.5, %v1246
        %v1248 = vsub.f32 1.5, %v1247
        %v1249 = vmul.f32 %v1244, %v1248
        %vm1250 = vweird.f32 %v1149
        %vm1251 = vweird.f32 %v1244
        %vm1252 = vmor %vm1250, %vm1251
        %v1253 = vsel %vm1252, %v1244, %v1249
        %v1254 = vrsqrt.pop %v1150
        %v1255 = vmul.f32 %v1254, %v1150
        %v1256 = vmul.f32 %v1255, %v1254
        %v1257 = vmul.f32 0.5, %v1256
        %v1258 = vsub.f32 1.5, %v1257
        %v1259 = vmul.f32 %v1254, %v1258
        %vm1260 = vweird.f32 %v1150
        %vm1261 = vweird.f32 %v1254
        %vm1262 = vmor %vm1260, %vm1261
        %v1263 = vsel %vm1262, %v1254, %v1259
        %v1264 = vrsqrt.pop %v1151
        %v1265 = vmul.f32 %v1264, %v1151
        %v1266 = vmul.f32 %v1265, %v1264
        %v1267 = vmul.f32 0.5, %v1266
        %v1268 = vsub.f32 1.5, %v1267
        %v1269 = vmul.f32 %v1264, %v1268
        %vm1270 = vweird.f32 %v1151
        %vm1271 = vweird.f32 %v1264
        %vm1272 = vmor %vm1270, %vm1271
        %v1273 = vsel %vm1272, %v1264, %v1269
        %v1274 = vrsqrt.pop %v1152
        %v1275 = vmul.f32 %v1274, %v1152
        %v1276 = vmul.f32 %v1275, %v1274
        %v1277 = vmul.f32 0.5, %v1276
        %v1278 = vsub.f32 1.5, %v1277
        %v1279 = vmul.f32 %v1274, %v1278
        %vm1280 = vweird.f32 %v1152
        %vm1281 = vweird.f32 %v1274
        %vm1282 = vmor %vm1280, %vm1281
        %v1283 = vsel %vm1282, %v1274, %v1279
        %v1284 = vrsqrt.pop %v1153
        %v1285 = vmul.f32 %v1284, %v1153
        %v1286 = vmul.f32 %v1285, %v1284
        %v1287 = vmul.f32 0.5, %v1286
        %v1288 = vsub.f32 1.5, %v1287
        %v1289 = vmul.f32 %v1284, %v1288
        %vm1290 = vweird.f32 %v1153
        %vm1291 = vweird.f32 %v1284
        %vm1292 = vmor %vm1290, %vm1291
        %v1293 = vsel %vm1292, %v1284, %v1289
        %v1294 = vmul.f32 %v793, %v1163
        %v1295 = vmul.f32 %v1029, %v1163
        %v1296 = vmul.f32 %v796, %v1173
        %v1297 = vmul.f32 %v1032, %v1173
        %v1298 = vmul.f32 %v799, %v1183
        %v1299 = vmul.f32 %v1035, %v1183
        %v1300 = vmul.f32 %v802, %v1193
        %v1301 = vmul.f32 %v1038, %v1193
        %v1302 = vmul.f32 %v805, %v1203
        %v1303 = vmul.f32 %v1041, %v1203
        %v1304 = vmul.f32 %v808, %v1213
        %v1305 = vmul.f32 %v1044, %v1213
        %v1306 = vmul.f32 %v811, %v1223
        %v1307 = vmul.f32 %v1047, %v1223
        %v1308 = vmul.f32 %v814, %v1233
        %v1309 = vmul.f32 %v1050, %v1233
        %v1310 = vmul.f32 %v817, %v1243
        %v1311 = vmul.f32 %v1053, %v1243
        %v1312 = vmul.f32 %v820, %v1253
        %v1313 = vmul.f32 %v1056, %v1253
        %v1314 = vmul.f32 %v823, %v1263
        %v1315 = vmul.f32 %v1059, %v1263
        %v1316 = vmul.f32 %v826, %v1273
        %v1317 = vmul.f32 %v1062, %v1273
        %v1318 = vmul.f32 %v829, %v1283
        %v1319 = vmul.f32 %v1065, %v1283
        %v1320 = vmul.f32 %v832, %v1293
        %v1321 = vmul.f32 %v1068, %v1293
        %v1322 = vld [vmem:[#allocation7] sm:$0xf]
        %v1324 = vperm.slane %v1322, 0
        %v1325 = vperm.slane %v1322, 1
        %v1326 = vperm.slane %v1322, 2
        %v1327 = vperm.slane %v1322, 3
        %v1332 = vsub.f32 %v1294, %v1324
        %v1333 = vsub.f32 %v1295, %v1325
        %v1334 = vsub.f32 %v1308, %v1326
        %v1335 = vsub.f32 %v1309, %v1327
        %v1336 = vsub.f32 %v1296, %v1324
        %v1337 = vsub.f32 %v1297, %v1325
        %v1338 = vsub.f32 %v1310, %v1326
        %v1339 = vsub.f32 %v1311, %v1327
        %v1340 = vsub.f32 %v1298, %v1324
        %v1341 = vsub.f32 %v1299, %v1325
        %v1342 = vsub.f32 %v1312, %v1326
        %v1343 = vsub.f32 %v1313, %v1327
        %v1344 = vsub.f32 %v1300, %v1324
        %v1345 = vsub.f32 %v1301, %v1325
        %v1346 = vsub.f32 %v1314, %v1326
        %v1347 = vsub.f32 %v1315, %v1327
        %v1348 = vsub.f32 %v1302, %v1324
        %v1349 = vsub.f32 %v1303, %v1325
        %v1350 = vsub.f32 %v1316, %v1326
        %v1351 = vsub.f32 %v1317, %v1327
        %v1352 = vsub.f32 %v1304, %v1324
        %v1353 = vsub.f32 %v1305, %v1325
        %v1354 = vsub.f32 %v1318, %v1326
        %v1355 = vsub.f32 %v1319, %v1327
        %v1356 = vsub.f32 %v1306, %v1324
        %v1357 = vsub.f32 %v1307, %v1325
        %v1358 = vsub.f32 %v1320, %v1326
        %v1359 = vsub.f32 %v1321, %v1327
        %v1360 = vld [vmem:[#allocation9] sm:$0xff]
        %v1361 = vld [vmem:[#allocation9 + $0x8] sm:$0xff]
        %v1362 = vld [vmem:[#allocation9 + $0x10] sm:$0xff]
        %v1363 = vld [vmem:[#allocation9 + $0x18] sm:$0xff]
        %v1364 = vld [vmem:[#allocation9 + $0x20] sm:$0xff]
        %v1365 = vld [vmem:[#allocation9 + $0x28] sm:$0xff]
        %v1366 = vld [vmem:[#allocation9 + $0x30] sm:$0xff]
        %v1367 = vld [vmem:[#allocation9 + $0x38] sm:$0xff]
        %v1368 = vld [vmem:[#allocation9 + $0x40] sm:$0xff]
        %v1369 = vld [vmem:[#allocation9 + $0x48] sm:$0xff]
        %v1370 = vld [vmem:[#allocation9 + $0x50] sm:$0xff]
        %v1371 = vld [vmem:[#allocation9 + $0x58] sm:$0xff]
        %v1372 = vld [vmem:[#allocation9 + $0x60] sm:$0xff]
        %v1373 = vld [vmem:[#allocation9 + $0x68] sm:$0xff]
        %v1374 = vld [vmem:[#allocation9 + $0x70] sm:$0xff]
        %v1375 = vld [vmem:[#allocation9 + $0x78] sm:$0xff]
        %v1376 = vld [vmem:[#allocation9 + $0x80] sm:$0xff]
        %v1377 = vld [vmem:[#allocation9 + $0x88] sm:$0xff]
        %v1378 = vld [vmem:[#allocation9 + $0x90] sm:$0xff]
        %v1379 = vld [vmem:[#allocation9 + $0x98] sm:$0xff]
        %v1380 = vld [vmem:[#allocation9 + $0xa0] sm:$0xff]
        %v1381 = vld [vmem:[#allocation9 + $0xa8] sm:$0xff]
        %v1382 = vld [vmem:[#allocation9 + $0xb0] sm:$0xff]
        %v1383 = vld [vmem:[#allocation9 + $0xb8] sm:$0xff]
        %v1384 = vld [vmem:[#allocation9 + $0xc0] sm:$0xff]
        %v1385 = vld [vmem:[#allocation9 + $0xc8] sm:$0xff]
        %v1386 = vld [vmem:[#allocation9 + $0xd0] sm:$0xff]
        %v1387 = vld [vmem:[#allocation9 + $0xd8] sm:$0xff]
        %v1388 = vld [vmem:[#allocation9 + $0xe0] sm:$0xff]
        %v1389 = vld [vmem:[#allocation9 + $0xe8] sm:$0xff]
        %v1390 = vld [vmem:[#allocation9 + $0xf0] sm:$0xff]
        %v1391 = vld [vmem:[#allocation9 + $0xf8] sm:$0xff]
        %v1392 = vld [vmem:[#allocation9 + $0x100] sm:$0xff]
        %v1393 = vld [vmem:[#allocation9 + $0x108] sm:$0xff]
        %v1394 = vld [vmem:[#allocation9 + $0x110] sm:$0xff]
        %v1395 = vld [vmem:[#allocation9 + $0x118] sm:$0xff]
        %v1396 = vld [vmem:[#allocation9 + $0x120] sm:$0xff]
        %v1397 = vld [vmem:[#allocation9 + $0x128] sm:$0xff]
        %v1398 = vld [vmem:[#allocation9 + $0x130] sm:$0xff]
        %v1399 = vld [vmem:[#allocation9 + $0x138] sm:$0xff]
        %v1400 = vld [vmem:[#allocation9 + $0x140] sm:$0xff]
        %v1401 = vld [vmem:[#allocation9 + $0x148] sm:$0xff]
        %v1402 = vld [vmem:[#allocation9 + $0x150] sm:$0xff]
        %v1403 = vld [vmem:[#allocation9 + $0x158] sm:$0xff]
        %v1404 = vld [vmem:[#allocation9 + $0x160] sm:$0xff]
        %v1405 = vld [vmem:[#allocation9 + $0x168] sm:$0xff]
        %v1406 = vld [vmem:[#allocation9 + $0x170] sm:$0xff]
        %v1407 = vld [vmem:[#allocation9 + $0x178] sm:$0xff]
        %v1408 = vld [vmem:[#allocation9 + $0x180] sm:$0xff]
        %v1409 = vld [vmem:[#allocation9 + $0x188] sm:$0xff]
        %v1410 = vld [vmem:[#allocation9 + $0x190] sm:$0xff]
        %v1411 = vld [vmem:[#allocation9 + $0x198] sm:$0xff]
        %v1412 = vld [vmem:[#allocation9 + $0x1a0] sm:$0xff]
        %v1413 = vld [vmem:[#allocation9 + $0x1a8] sm:$0xff]
        %v1414 = vld [vmem:[#allocation9 + $0x1b0] sm:$0xff]
        %v1415 = vld [vmem:[#allocation9 + $0x1b8] sm:$0xff]
        %v1416 = vld [vmem:[#allocation9 + $0x1c0] sm:$0xff]
        %v1417 = vld [vmem:[#allocation9 + $0x1c8] sm:$0xff]
        %v1418 = vld [vmem:[#allocation9 + $0x1d0] sm:$0xff]
        %v1419 = vld [vmem:[#allocation9 + $0x1d8] sm:$0xff]
        %v1420 = vld [vmem:[#allocation9 + $0x1e0] sm:$0xff]
        %v1421 = vld [vmem:[#allocation9 + $0x1e8] sm:$0xff]
        %v1422 = vld [vmem:[#allocation9 + $0x1f0] sm:$0xff]
        %v1423 = vld [vmem:[#allocation9 + $0x1f8] sm:$0xff]
        %v1424 = vld [vmem:[#allocation9 + $0x200] sm:$0xff]
        %v1425 = vld [vmem:[#allocation9 + $0x208] sm:$0xff]
        %v1426 = vld [vmem:[#allocation9 + $0x210] sm:$0xff]
        %v1427 = vld [vmem:[#allocation9 + $0x218] sm:$0xff]
        %v1428 = vld [vmem:[#allocation9 + $0x220] sm:$0xff]
        %v1429 = vld [vmem:[#allocation9 + $0x228] sm:$0xff]
        %v1430 = vld [vmem:[#allocation9 + $0x230] sm:$0xff]
        %v1431 = vld [vmem:[#allocation9 + $0x238] sm:$0xff]
        %v1432 = vld [vmem:[#allocation9 + $0x240] sm:$0xff]
        %v1433 = vld [vmem:[#allocation9 + $0x248] sm:$0xff]
        %v1434 = vld [vmem:[#allocation9 + $0x250] sm:$0xff]
        %v1435 = vld [vmem:[#allocation9 + $0x258] sm:$0xff]
        %v1436 = vld [vmem:[#allocation9 + $0x260] sm:$0xff]
        %v1437 = vld [vmem:[#allocation9 + $0x268] sm:$0xff]
        %v1438 = vld [vmem:[#allocation9 + $0x270] sm:$0xff]
        %v1439 = vld [vmem:[#allocation9 + $0x278] sm:$0xff]
        %v1440 = vld [vmem:[#allocation9 + $0x280] sm:$0xff]
        %v1441 = vld [vmem:[#allocation9 + $0x288] sm:$0xff]
        %v1442 = vld [vmem:[#allocation9 + $0x290] sm:$0xff]
        %v1443 = vld [vmem:[#allocation9 + $0x298] sm:$0xff]
        %v1444 = vld [vmem:[#allocation9 + $0x2a0] sm:$0xff]
        %v1445 = vld [vmem:[#allocation9 + $0x2a8] sm:$0xff]
        %v1446 = vld [vmem:[#allocation9 + $0x2b0] sm:$0xff]
        %v1447 = vld [vmem:[#allocation9 + $0x2b8] sm:$0xff]
        %v1448 = vld [vmem:[#allocation9 + $0x2c0] sm:$0xff]
        %v1449 = vld [vmem:[#allocation9 + $0x2c8] sm:$0xff]
        %v1450 = vld [vmem:[#allocation9 + $0x2d0] sm:$0xff]
        %v1451 = vld [vmem:[#allocation9 + $0x2d8] sm:$0xff]
        %v1452 = vld [vmem:[#allocation9 + $0x2e0] sm:$0xff]
        %v1453 = vld [vmem:[#allocation9 + $0x2e8] sm:$0xff]
        %v1454 = vld [vmem:[#allocation9 + $0x2f0] sm:$0xff]
        %v1455 = vld [vmem:[#allocation9 + $0x2f8] sm:$0xff]
        %v1456 = vld [vmem:[#allocation9 + $0x300] sm:$0xff]
        %v1457 = vld [vmem:[#allocation9 + $0x308] sm:$0xff]
        %v1458 = vld [vmem:[#allocation9 + $0x310] sm:$0xff]
        %v1459 = vld [vmem:[#allocation9 + $0x318] sm:$0xff]
        %v1460 = vld [vmem:[#allocation9 + $0x320] sm:$0xff]
        %v1461 = vld [vmem:[#allocation9 + $0x328] sm:$0xff]
        %v1462 = vld [vmem:[#allocation9 + $0x330] sm:$0xff]
        %v1463 = vld [vmem:[#allocation9 + $0x338] sm:$0xff]
        %v1464 = vld [vmem:[#allocation9 + $0x340] sm:$0xff]
        %v1465 = vld [vmem:[#allocation9 + $0x348] sm:$0xff]
        %v1466 = vld [vmem:[#allocation9 + $0x350] sm:$0xff]
        %v1467 = vld [vmem:[#allocation9 + $0x358] sm:$0xff]
        %v1468 = vld [vmem:[#allocation9 + $0x360] sm:$0xff]
        %v1469 = vld [vmem:[#allocation9 + $0x368] sm:$0xff]
        %v1470 = vld [vmem:[#allocation9 + $0x370] sm:$0xff]
        %v1471 = vld [vmem:[#allocation9 + $0x378] sm:$0xff]
        %v1472 = vld [vmem:[#allocation9 + $0x380] sm:$0xff]
        %v1473 = vld [vmem:[#allocation9 + $0x388] sm:$0xff]
        %v1474 = vld [vmem:[#allocation9 + $0x390] sm:$0xff]
        %v1475 = vld [vmem:[#allocation9 + $0x398] sm:$0xff]
        %v1476 = vld [vmem:[#allocation9 + $0x3a0] sm:$0xff]
        %v1477 = vld [vmem:[#allocation9 + $0x3a8] sm:$0xff]
        %v1478 = vld [vmem:[#allocation9 + $0x3b0] sm:$0xff]
        %v1479 = vld [vmem:[#allocation9 + $0x3b8] sm:$0xff]
        %v1480 = vld [vmem:[#allocation9 + $0x3c0] sm:$0xff]
        %v1481 = vld [vmem:[#allocation9 + $0x3c8] sm:$0xff]
        %v1482 = vld [vmem:[#allocation9 + $0x3d0] sm:$0xff]
        %v1483 = vld [vmem:[#allocation9 + $0x3d8] sm:$0xff]
        %v1484 = vld [vmem:[#allocation9 + $0x3e0] sm:$0xff]
        %v1485 = vld [vmem:[#allocation9 + $0x3e8] sm:$0xff]
        %v1486 = vld [vmem:[#allocation9 + $0x3f0] sm:$0xff]
        %v1487 = vld [vmem:[#allocation9 + $0x3f8] sm:$0xff]
        %v1488 = vld [vmem:[#allocation9 + $0x400] sm:$0xff]
        %v1489 = vld [vmem:[#allocation9 + $0x408] sm:$0xff]
        %v1490 = vld [vmem:[#allocation9 + $0x410] sm:$0xff]
        %v1491 = vld [vmem:[#allocation9 + $0x418] sm:$0xff]
        %v1492 = vld [vmem:[#allocation9 + $0x420] sm:$0xff]
        %v1493 = vld [vmem:[#allocation9 + $0x428] sm:$0xff]
        %v1494 = vld [vmem:[#allocation9 + $0x430] sm:$0xff]
        %v1495 = vld [vmem:[#allocation9 + $0x438] sm:$0xff]
        %v1496 = vld [vmem:[#allocation9 + $0x440] sm:$0xff]
        %v1497 = vld [vmem:[#allocation9 + $0x448] sm:$0xff]
        %v1498 = vld [vmem:[#allocation9 + $0x450] sm:$0xff]
        %v1499 = vld [vmem:[#allocation9 + $0x458] sm:$0xff]
        %v1500 = vld [vmem:[#allocation9 + $0x460] sm:$0xff]
        %v1501 = vld [vmem:[#allocation9 + $0x468] sm:$0xff]
        %v1502 = vld [vmem:[#allocation9 + $0x470] sm:$0xff]
        %v1503 = vld [vmem:[#allocation9 + $0x478] sm:$0xff]
        %v1504 = vld [vmem:[#allocation9 + $0x480] sm:$0xff]
        %v1505 = vld [vmem:[#allocation9 + $0x488] sm:$0xff]
        %v1506 = vld [vmem:[#allocation9 + $0x490] sm:$0xff]
        %v1507 = vld [vmem:[#allocation9 + $0x498] sm:$0xff]
        %v1508 = vld [vmem:[#allocation9 + $0x4a0] sm:$0xff]
        %v1509 = vld [vmem:[#allocation9 + $0x4a8] sm:$0xff]
        %v1510 = vld [vmem:[#allocation9 + $0x4b0] sm:$0xff]
        %v1511 = vld [vmem:[#allocation9 + $0x4b8] sm:$0xff]
        %v1512 = vld [vmem:[#allocation9 + $0x4c0] sm:$0xff]
        %v1513 = vld [vmem:[#allocation9 + $0x4c8] sm:$0xff]
        %v1514 = vld [vmem:[#allocation9 + $0x4d0] sm:$0xff]
        %v1515 = vld [vmem:[#allocation9 + $0x4d8] sm:$0xff]
        %v1516 = vld [vmem:[#allocation9 + $0x4e0] sm:$0xff]
        %v1517 = vld [vmem:[#allocation9 + $0x4e8] sm:$0xff]
        %v1518 = vld [vmem:[#allocation9 + $0x4f0] sm:$0xff]
        %v1519 = vld [vmem:[#allocation9 + $0x4f8] sm:$0xff]
        %v1520 = vld [vmem:[#allocation9 + $0x500] sm:$0xff]
        %v1521 = vld [vmem:[#allocation9 + $0x508] sm:$0xff]
        %v1522 = vld [vmem:[#allocation9 + $0x510] sm:$0xff]
        %v1523 = vld [vmem:[#allocation9 + $0x518] sm:$0xff]
        %v1524 = vld [vmem:[#allocation9 + $0x520] sm:$0xff]
        %v1525 = vld [vmem:[#allocation9 + $0x528] sm:$0xff]
        %v1526 = vld [vmem:[#allocation9 + $0x530] sm:$0xff]
        %v1527 = vld [vmem:[#allocation9 + $0x538] sm:$0xff]
        %v1528 = vld [vmem:[#allocation9 + $0x540] sm:$0xff]
        %v1529 = vld [vmem:[#allocation9 + $0x548] sm:$0xff]
        %v1530 = vld [vmem:[#allocation9 + $0x550] sm:$0xff]
        %v1531 = vld [vmem:[#allocation9 + $0x558] sm:$0xff]
        %v1532 = vld [vmem:[#allocation9 + $0x560] sm:$0xff]
        %v1533 = vld [vmem:[#allocation9 + $0x568] sm:$0xff]
        %v1534 = vld [vmem:[#allocation9 + $0x570] sm:$0xff]
        %v1535 = vld [vmem:[#allocation9 + $0x578] sm:$0xff]
        %v1536 = vld [vmem:[#allocation9 + $0x580] sm:$0xff]
        %v1537 = vld [vmem:[#allocation9 + $0x588] sm:$0xff]
        %v1538 = vld [vmem:[#allocation9 + $0x590] sm:$0xff]
        %v1539 = vld [vmem:[#allocation9 + $0x598] sm:$0xff]
        %v1540 = vld [vmem:[#allocation9 + $0x5a0] sm:$0xff]
        %v1541 = vld [vmem:[#allocation9 + $0x5a8] sm:$0xff]
        %v1542 = vld [vmem:[#allocation9 + $0x5b0] sm:$0xff]
        %v1543 = vld [vmem:[#allocation9 + $0x5b8] sm:$0xff]
        %v1544 = vld [vmem:[#allocation9 + $0x5c0] sm:$0xff]
        %v1545 = vld [vmem:[#allocation9 + $0x5c8] sm:$0xff]
        %v1546 = vld [vmem:[#allocation9 + $0x5d0] sm:$0xff]
        %v1547 = vld [vmem:[#allocation9 + $0x5d8] sm:$0xff]
        %v1548 = vld [vmem:[#allocation9 + $0x5e0] sm:$0xff]
        %v1549 = vld [vmem:[#allocation9 + $0x5e8] sm:$0xff]
        %v1550 = vld [vmem:[#allocation9 + $0x5f0] sm:$0xff]
        %v1551 = vld [vmem:[#allocation9 + $0x5f8] sm:$0xff]
        %v1552 = vld [vmem:[#allocation9 + $0x600] sm:$0xff]
        %v1553 = vld [vmem:[#allocation9 + $0x608] sm:$0xff]
        %v1554 = vld [vmem:[#allocation9 + $0x610] sm:$0xff]
        %v1555 = vld [vmem:[#allocation9 + $0x618] sm:$0xff]
        %v1556 = vld [vmem:[#allocation9 + $0x620] sm:$0xff]
        %v1557 = vld [vmem:[#allocation9 + $0x628] sm:$0xff]
        %v1558 = vld [vmem:[#allocation9 + $0x630] sm:$0xff]
        %v1559 = vld [vmem:[#allocation9 + $0x638] sm:$0xff]
        %v1560 = vld [vmem:[#allocation9 + $0x640] sm:$0xff]
        %v1561 = vld [vmem:[#allocation9 + $0x648] sm:$0xff]
        %v1562 = vld [vmem:[#allocation9 + $0x650] sm:$0xff]
        %v1563 = vld [vmem:[#allocation9 + $0x658] sm:$0xff]
        %v1564 = vld [vmem:[#allocation9 + $0x660] sm:$0xff]
        %v1565 = vld [vmem:[#allocation9 + $0x668] sm:$0xff]
        %v1566 = vld [vmem:[#allocation9 + $0x670] sm:$0xff]
        %v1567 = vld [vmem:[#allocation9 + $0x678] sm:$0xff]
        %v1568 = vld [vmem:[#allocation9 + $0x680] sm:$0xff]
        %v1569 = vld [vmem:[#allocation9 + $0x688] sm:$0xff]
        %v1570 = vld [vmem:[#allocation9 + $0x690] sm:$0xff]
        %v1571 = vld [vmem:[#allocation9 + $0x698] sm:$0xff]
        %v1572 = vld [vmem:[#allocation9 + $0x6a0] sm:$0xff]
        %v1573 = vld [vmem:[#allocation9 + $0x6a8] sm:$0xff]
        %v1574 = vld [vmem:[#allocation9 + $0x6b0] sm:$0xff]
        %v1575 = vld [vmem:[#allocation9 + $0x6b8] sm:$0xff]
        %v1576 = vld [vmem:[#allocation9 + $0x6c0] sm:$0xff]
        %v1577 = vld [vmem:[#allocation9 + $0x6c8] sm:$0xff]
        %v1578 = vld [vmem:[#allocation9 + $0x6d0] sm:$0xff]
        %v1579 = vld [vmem:[#allocation9 + $0x6d8] sm:$0xff]
        %v1580 = vld [vmem:[#allocation9 + $0x6e0] sm:$0xff]
        %v1581 = vld [vmem:[#allocation9 + $0x6e8] sm:$0xff]
        %v1582 = vld [vmem:[#allocation9 + $0x6f0] sm:$0xff]
        %v1583 = vld [vmem:[#allocation9 + $0x6f8] sm:$0xff]
        %v1584 = vld [vmem:[#allocation9 + $0x700] sm:$0xff]
        %v1585 = vld [vmem:[#allocation9 + $0x708] sm:$0xff]
        %v1586 = vld [vmem:[#allocation9 + $0x710] sm:$0xff]
        %v1587 = vld [vmem:[#allocation9 + $0x718] sm:$0xff]
        %v1588 = vld [vmem:[#allocation9 + $0x720] sm:$0xff]
        %v1589 = vld [vmem:[#allocation9 + $0x728] sm:$0xff]
        %v1590 = vld [vmem:[#allocation9 + $0x730] sm:$0xff]
        %v1591 = vld [vmem:[#allocation9 + $0x738] sm:$0xff]
        %v1592 = vld [vmem:[#allocation9 + $0x740] sm:$0xff]
        %v1593 = vld [vmem:[#allocation9 + $0x748] sm:$0xff]
        %v1594 = vld [vmem:[#allocation9 + $0x750] sm:$0xff]
        %v1595 = vld [vmem:[#allocation9 + $0x758] sm:$0xff]
        %v1596 = vld [vmem:[#allocation9 + $0x760] sm:$0xff]
        %v1597 = vld [vmem:[#allocation9 + $0x768] sm:$0xff]
        %v1598 = vld [vmem:[#allocation9 + $0x770] sm:$0xff]
        %v1599 = vld [vmem:[#allocation9 + $0x778] sm:$0xff]
        %v1600 = vld [vmem:[#allocation9 + $0x780] sm:$0xff]
        %v1601 = vld [vmem:[#allocation9 + $0x788] sm:$0xff]
        %v1602 = vld [vmem:[#allocation9 + $0x790] sm:$0xff]
        %v1603 = vld [vmem:[#allocation9 + $0x798] sm:$0xff]
        %v1604 = vld [vmem:[#allocation9 + $0x7a0] sm:$0xff]
        %v1605 = vld [vmem:[#allocation9 + $0x7a8] sm:$0xff]
        %v1606 = vld [vmem:[#allocation9 + $0x7b0] sm:$0xff]
        %v1607 = vld [vmem:[#allocation9 + $0x7b8] sm:$0xff]
        %v1608 = vld [vmem:[#allocation9 + $0x7c0] sm:$0xff]
        %v1609 = vld [vmem:[#allocation9 + $0x7c8] sm:$0xff]
        %v1610 = vld [vmem:[#allocation9 + $0x7d0] sm:$0xff]
        %v1611 = vld [vmem:[#allocation9 + $0x7d8] sm:$0xff]
        %v1612 = vld [vmem:[#allocation9 + $0x7e0] sm:$0xff]
        %v1613 = vld [vmem:[#allocation9 + $0x7e8] sm:$0xff]
        %v1614 = vld [vmem:[#allocation9 + $0x7f0] sm:$0xff]
        %v1615 = vld [vmem:[#allocation9 + $0x7f8] sm:$0xff]
        %1616 = vmatpush.msra.mxu0 %v1420
        %1617 = vmatpush.msra.mxu0 %v1416
        %1618 = vmatpush.msra.mxu0 %v1412
        %1619 = vmatpush.msra.mxu0 %v1408
        %1620 = vmatpush.msra.mxu0 %v1404
        %1621 = vmatpush.msra.mxu0 %v1400
        %1622 = vmatpush.msra.mxu0 %v1396
        %1623 = vmatpush.msra.mxu0 %v1392
        %1624 = vmatpush.msra.mxu0 %v1388
        %1625 = vmatpush.msra.mxu0 %v1384
        %1626 = vmatpush.msra.mxu0 %v1380
        %1627 = vmatpush.msra.mxu0 %v1376
        %1628 = vmatpush.msra.mxu0 %v1372
        %1629 = vmatpush.msra.mxu0 %v1368
        %1630 = vmatpush.msra.mxu0 %v1364
        %1631 = vmatpush.msra.mxu0 %v1360
        %1632 = vmatmul.f32.gmra.mxu0 %v1332
        %v1633 = vpop.f32.mrf.mxu0
        %v1634 = vadd.f32 0.0, %v1633
        %1635 = vmatmul.f32.gmra.mxu0 %v1336
        %v1636 = vpop.f32.mrf.mxu0
        %v1637 = vadd.f32 0.0, %v1636
        %1638 = vmatmul.f32.gmra.mxu0 %v1340
        %v1639 = vpop.f32.mrf.mxu0
        %v1640 = vadd.f32 0.0, %v1639
        %1641 = vmatmul.f32.gmra.mxu0 %v1344
        %v1642 = vpop.f32.mrf.mxu0
        %v1643 = vadd.f32 0.0, %v1642
        %1644 = vmatmul.f32.gmra.mxu0 %v1348
        %v1645 = vpop.f32.mrf.mxu0
        %v1646 = vadd.f32 0.0, %v1645
        %1647 = vmatmul.f32.gmra.mxu0 %v1352
        %v1648 = vpop.f32.mrf.mxu0
        %v1649 = vadd.f32 0.0, %v1648
        %1650 = vmatmul.f32.gmra.mxu0 %v1356
        %v1651 = vpop.f32.mrf.mxu0
        %v1652 = vadd.f32 0.0, %v1651
        %1653 = vdwg.mxu0
        %1654 = vmatpush.msra.mxu0 %v1484
        %1655 = vmatpush.msra.mxu0 %v1480
        %1656 = vmatpush.msra.mxu0 %v1476
        %1657 = vmatpush.msra.mxu0 %v1472
        %1658 = vmatpush.msra.mxu0 %v1468
        %1659 = vmatpush.msra.mxu0 %v1464
        %1660 = vmatpush.msra.mxu0 %v1460
        %1661 = vmatpush.msra.mxu0 %v1456
        %1662 = vmatpush.msra.mxu0 %v1452
        %1663 = vmatpush.msra.mxu0 %v1448
        %1664 = vmatpush.msra.mxu0 %v1444
        %1665 = vmatpush.msra.mxu0 %v1440
        %1666 = vmatpush.msra.mxu0 %v1436
        %1667 = vmatpush.msra.mxu0 %v1432
        %1668 = vmatpush.msra.mxu0 %v1428
        %1669 = vmatpush.msra.mxu0 %v1424
        %1670 = vmatmul.f32.gmra.mxu0 %v1333
        %v1671 = vpop.f32.mrf.mxu0
        %v1672 = vadd.f32 %v1634, %v1671
        %1673 = vmatmul.f32.gmra.mxu0 %v1337
        %v1674 = vpop.f32.mrf.mxu0
        %v1675 = vadd.f32 %v1637, %v1674
        %1676 = vmatmul.f32.gmra.mxu0 %v1341
        %v1677 = vpop.f32.mrf.mxu0
        %v1678 = vadd.f32 %v1640, %v1677
        %1679 = vmatmul.f32.gmra.mxu0 %v1345
        %v1680 = vpop.f32.mrf.mxu0
        %v1681 = vadd.f32 %v1643, %v1680
        %1682 = vmatmul.f32.gmra.mxu0 %v1349
        %v1683 = vpop.f32.mrf.mxu0
        %v1684 = vadd.f32 %v1646, %v1683
        %1685 = vmatmul.f32.gmra.mxu0 %v1353
        %v1686 = vpop.f32.mrf.mxu0
        %v1687 = vadd.f32 %v1649, %v1686
        %1688 = vmatmul.f32.gmra.mxu0 %v1357
        %v1689 = vpop.f32.mrf.mxu0
        %v1690 = vadd.f32 %v1652, %v1689
        %1691 = vdwg.mxu0
        %1692 = vmatpush.msra.mxu0 %v1548
        %1693 = vmatpush.msra.mxu0 %v1544
        %1694 = vmatpush.msra.mxu0 %v1540
        %1695 = vmatpush.msra.mxu0 %v1536
        %1696 = vmatpush.msra.mxu0 %v1532
        %1697 = vmatpush.msra.mxu0 %v1528
        %1698 = vmatpush.msra.mxu0 %v1524
        %1699 = vmatpush.msra.mxu0 %v1520
        %1700 = vmatpush.msra.mxu0 %v1516
        %1701 = vmatpush.msra.mxu0 %v1512
        %1702 = vmatpush.msra.mxu0 %v1508
        %1703 = vmatpush.msra.mxu0 %v1504
        %1704 = vmatpush.msra.mxu0 %v1500
        %1705 = vmatpush.msra.mxu0 %v1496
        %1706 = vmatpush.msra.mxu0 %v1492
        %1707 = vmatpush.msra.mxu0 %v1488
        %1708 = vmatmul.f32.gmra.mxu0 %v1334
        %v1709 = vpop.f32.mrf.mxu0
        %v1710 = vadd.f32 %v1672, %v1709
        %1711 = vmatmul.f32.gmra.mxu0 %v1338
        %v1712 = vpop.f32.mrf.mxu0
        %v1713 = vadd.f32 %v1675, %v1712
        %1714 = vmatmul.f32.gmra.mxu0 %v1342
        %v1715 = vpop.f32.mrf.mxu0
        %v1716 = vadd.f32 %v1678, %v1715
        %1717 = vmatmul.f32.gmra.mxu0 %v1346
        %v1718 = vpop.f32.mrf.mxu0
        %v1719 = vadd.f32 %v1681, %v1718
        %1720 = vmatmul.f32.gmra.mxu0 %v1350
        %v1721 = vpop.f32.mrf.mxu0
        %v1722 = vadd.f32 %v1684, %v1721
        %1723 = vmatmul.f32.gmra.mxu0 %v1354
        %v1724 = vpop.f32.mrf.mxu0
        %v1725 = vadd.f32 %v1687, %v1724
        %1726 = vmatmul.f32.gmra.mxu0 %v1358
        %v1727 = vpop.f32.mrf.mxu0
        %v1728 = vadd.f32 %v1690, %v1727
        %1729 = vdwg.mxu0
        %1730 = vmatpush.msra.mxu0 %v1612
        %1731 = vmatpush.msra.mxu0 %v1608
        %1732 = vmatpush.msra.mxu0 %v1604
        %1733 = vmatpush.msra.mxu0 %v1600
        %1734 = vmatpush.msra.mxu0 %v1596
        %1735 = vmatpush.msra.mxu0 %v1592
        %1736 = vmatpush.msra.mxu0 %v1588
        %1737 = vmatpush.msra.mxu0 %v1584
        %1738 = vmatpush.msra.mxu0 %v1580
        %1739 = vmatpush.msra.mxu0 %v1576
        %1740 = vmatpush.msra.mxu0 %v1572
        %1741 = vmatpush.msra.mxu0 %v1568
        %1742 = vmatpush.msra.mxu0 %v1564
        %1743 = vmatpush.msra.mxu0 %v1560
        %1744 = vmatpush.msra.mxu0 %v1556
        %1745 = vmatpush.msra.mxu0 %v1552
        %1746 = vmatmul.f32.gmra.mxu0 %v1335
        %v1747 = vpop.f32.mrf.mxu0
        %v1748 = vadd.f32 %v1710, %v1747
        %1749 = vmatmul.f32.gmra.mxu0 %v1339
        %v1750 = vpop.f32.mrf.mxu0
        %v1751 = vadd.f32 %v1713, %v1750
        %1752 = vmatmul.f32.gmra.mxu0 %v1343
        %v1753 = vpop.f32.mrf.mxu0
        %v1754 = vadd.f32 %v1716, %v1753
        %1755 = vmatmul.f32.gmra.mxu0 %v1347
        %v1756 = vpop.f32.mrf.mxu0
        %v1757 = vadd.f32 %v1719, %v1756
        %1758 = vmatmul.f32.gmra.mxu0 %v1351
        %v1759 = vpop.f32.mrf.mxu0
        %v1760 = vadd.f32 %v1722, %v1759
        %1761 = vmatmul.f32.gmra.mxu0 %v1355
        %v1762 = vpop.f32.mrf.mxu0
        %v1763 = vadd.f32 %v1725, %v1762
        %1764 = vmatmul.f32.gmra.mxu0 %v1359
        %v1765 = vpop.f32.mrf.mxu0
        %v1766 = vadd.f32 %v1728, %v1765
        %1767 = vdwg.mxu0
        %1768 = vmatpush.msra.mxu0 %v1421
        %1769 = vmatpush.msra.mxu0 %v1417
        %1770 = vmatpush.msra.mxu0 %v1413
        %1771 = vmatpush.msra.mxu0 %v1409
        %1772 = vmatpush.msra.mxu0 %v1405
        %1773 = vmatpush.msra.mxu0 %v1401
        %1774 = vmatpush.msra.mxu0 %v1397
        %1775 = vmatpush.msra.mxu0 %v1393
        %1776 = vmatpush.msra.mxu0 %v1389
        %1777 = vmatpush.msra.mxu0 %v1385
        %1778 = vmatpush.msra.mxu0 %v1381
        %1779 = vmatpush.msra.mxu0 %v1377
        %1780 = vmatpush.msra.mxu0 %v1373
        %1781 = vmatpush.msra.mxu0 %v1369
        %1782 = vmatpush.msra.mxu0 %v1365
        %1783 = vmatpush.msra.mxu0 %v1361
        %1784 = vmatmul.f32.gmra.mxu0 %v1332
        %v1785 = vpop.f32.mrf.mxu0
        %v1786 = vadd.f32 0.0, %v1785
        %1787 = vmatmul.f32.gmra.mxu0 %v1336
        %v1788 = vpop.f32.mrf.mxu0
        %v1789 = vadd.f32 0.0, %v1788
        %1790 = vmatmul.f32.gmra.mxu0 %v1340
        %v1791 = vpop.f32.mrf.mxu0
        %v1792 = vadd.f32 0.0, %v1791
        %1793 = vmatmul.f32.gmra.mxu0 %v1344
        %v1794 = vpop.f32.mrf.mxu0
        %v1795 = vadd.f32 0.0, %v1794
        %1796 = vmatmul.f32.gmra.mxu0 %v1348
        %v1797 = vpop.f32.mrf.mxu0
        %v1798 = vadd.f32 0.0, %v1797
        %1799 = vmatmul.f32.gmra.mxu0 %v1352
        %v1800 = vpop.f32.mrf.mxu0
        %v1801 = vadd.f32 0.0, %v1800
        %1802 = vmatmul.f32.gmra.mxu0 %v1356
        %v1803 = vpop.f32.mrf.mxu0
        %v1804 = vadd.f32 0.0, %v1803
        %1805 = vdwg.mxu0
        %1806 = vmatpush.msra.mxu0 %v1485
        %1807 = vmatpush.msra.mxu0 %v1481
        %1808 = vmatpush.msra.mxu0 %v1477
        %1809 = vmatpush.msra.mxu0 %v1473
        %1810 = vmatpush.msra.mxu0 %v1469
        %1811 = vmatpush.msra.mxu0 %v1465
        %1812 = vmatpush.msra.mxu0 %v1461
        %1813 = vmatpush.msra.mxu0 %v1457
        %1814 = vmatpush.msra.mxu0 %v1453
        %1815 = vmatpush.msra.mxu0 %v1449
        %1816 = vmatpush.msra.mxu0 %v1445
        %1817 = vmatpush.msra.mxu0 %v1441
        %1818 = vmatpush.msra.mxu0 %v1437
        %1819 = vmatpush.msra.mxu0 %v1433
        %1820 = vmatpush.msra.mxu0 %v1429
        %1821 = vmatpush.msra.mxu0 %v1425
        %1822 = vmatmul.f32.gmra.mxu0 %v1333
        %v1823 = vpop.f32.mrf.mxu0
        %v1824 = vadd.f32 %v1786, %v1823
        %1825 = vmatmul.f32.gmra.mxu0 %v1337
        %v1826 = vpop.f32.mrf.mxu0
        %v1827 = vadd.f32 %v1789, %v1826
        %1828 = vmatmul.f32.gmra.mxu0 %v1341
        %v1829 = vpop.f32.mrf.mxu0
        %v1830 = vadd.f32 %v1792, %v1829
        %1831 = vmatmul.f32.gmra.mxu0 %v1345
        %v1832 = vpop.f32.mrf.mxu0
        %v1833 = vadd.f32 %v1795, %v1832
        %1834 = vmatmul.f32.gmra.mxu0 %v1349
        %v1835 = vpop.f32.mrf.mxu0
        %v1836 = vadd.f32 %v1798, %v1835
        %1837 = vmatmul.f32.gmra.mxu0 %v1353
        %v1838 = vpop.f32.mrf.mxu0
        %v1839 = vadd.f32 %v1801, %v1838
        %1840 = vmatmul.f32.gmra.mxu0 %v1357
        %v1841 = vpop.f32.mrf.mxu0
        %v1842 = vadd.f32 %v1804, %v1841
        %1843 = vdwg.mxu0
        %1844 = vmatpush.msra.mxu0 %v1549
        %1845 = vmatpush.msra.mxu0 %v1545
        %1846 = vmatpush.msra.mxu0 %v1541
        %1847 = vmatpush.msra.mxu0 %v1537
        %1848 = vmatpush.msra.mxu0 %v1533
        %1849 = vmatpush.msra.mxu0 %v1529
        %1850 = vmatpush.msra.mxu0 %v1525
        %1851 = vmatpush.msra.mxu0 %v1521
        %1852 = vmatpush.msra.mxu0 %v1517
        %1853 = vmatpush.msra.mxu0 %v1513
        %1854 = vmatpush.msra.mxu0 %v1509
        %1855 = vmatpush.msra.mxu0 %v1505
        %1856 = vmatpush.msra.mxu0 %v1501
        %1857 = vmatpush.msra.mxu0 %v1497
        %1858 = vmatpush.msra.mxu0 %v1493
        %1859 = vmatpush.msra.mxu0 %v1489
        %1860 = vmatmul.f32.gmra.mxu0 %v1334
        %v1861 = vpop.f32.mrf.mxu0
        %v1862 = vadd.f32 %v1824, %v1861
        %1863 = vmatmul.f32.gmra.mxu0 %v1338
        %v1864 = vpop.f32.mrf.mxu0
        %v1865 = vadd.f32 %v1827, %v1864
        %1866 = vmatmul.f32.gmra.mxu0 %v1342
        %v1867 = vpop.f32.mrf.mxu0
        %v1868 = vadd.f32 %v1830, %v1867
        %1869 = vmatmul.f32.gmra.mxu0 %v1346
        %v1870 = vpop.f32.mrf.mxu0
        %v1871 = vadd.f32 %v1833, %v1870
        %1872 = vmatmul.f32.gmra.mxu0 %v1350
        %v1873 = vpop.f32.mrf.mxu0
        %v1874 = vadd.f32 %v1836, %v1873
        %1875 = vmatmul.f32.gmra.mxu0 %v1354
        %v1876 = vpop.f32.mrf.mxu0
        %v1877 = vadd.f32 %v1839, %v1876
        %1878 = vmatmul.f32.gmra.mxu0 %v1358
        %v1879 = vpop.f32.mrf.mxu0
        %v1880 = vadd.f32 %v1842, %v1879
        %1881 = vdwg.mxu0
        %1882 = vmatpush.msra.mxu0 %v1613
        %1883 = vmatpush.msra.mxu0 %v1609
        %1884 = vmatpush.msra.mxu0 %v1605
        %1885 = vmatpush.msra.mxu0 %v1601
        %1886 = vmatpush.msra.mxu0 %v1597
        %1887 = vmatpush.msra.mxu0 %v1593
        %1888 = vmatpush.msra.mxu0 %v1589
        %1889 = vmatpush.msra.mxu0 %v1585
        %1890 = vmatpush.msra.mxu0 %v1581
        %1891 = vmatpush.msra.mxu0 %v1577
        %1892 = vmatpush.msra.mxu0 %v1573
        %1893 = vmatpush.msra.mxu0 %v1569
        %1894 = vmatpush.msra.mxu0 %v1565
        %1895 = vmatpush.msra.mxu0 %v1561
        %1896 = vmatpush.msra.mxu0 %v1557
        %1897 = vmatpush.msra.mxu0 %v1553
        %1898 = vmatmul.f32.gmra.mxu0 %v1335
        %v1899 = vpop.f32.mrf.mxu0
        %v1900 = vadd.f32 %v1862, %v1899
        %1901 = vmatmul.f32.gmra.mxu0 %v1339
        %v1902 = vpop.f32.mrf.mxu0
        %v1903 = vadd.f32 %v1865, %v1902
        %1904 = vmatmul.f32.gmra.mxu0 %v1343
        %v1905 = vpop.f32.mrf.mxu0
        %v1906 = vadd.f32 %v1868, %v1905
        %1907 = vmatmul.f32.gmra.mxu0 %v1347
        %v1908 = vpop.f32.mrf.mxu0
        %v1909 = vadd.f32 %v1871, %v1908
        %1910 = vmatmul.f32.gmra.mxu0 %v1351
        %v1911 = vpop.f32.mrf.mxu0
        %v1912 = vadd.f32 %v1874, %v1911
        %1913 = vmatmul.f32.gmra.mxu0 %v1355
        %v1914 = vpop.f32.mrf.mxu0
        %v1915 = vadd.f32 %v1877, %v1914
        %1916 = vmatmul.f32.gmra.mxu0 %v1359
        %v1917 = vpop.f32.mrf.mxu0
        %v1918 = vadd.f32 %v1880, %v1917
        %1919 = vdwg.mxu0
        %1920 = vmatpush.msra.mxu0 %v1422
        %1921 = vmatpush.msra.mxu0 %v1418
        %1922 = vmatpush.msra.mxu0 %v1414
        %1923 = vmatpush.msra.mxu0 %v1410
        %1924 = vmatpush.msra.mxu0 %v1406
        %1925 = vmatpush.msra.mxu0 %v1402
        %1926 = vmatpush.msra.mxu0 %v1398
        %1927 = vmatpush.msra.mxu0 %v1394
        %1928 = vmatpush.msra.mxu0 %v1390
        %1929 = vmatpush.msra.mxu0 %v1386
        %1930 = vmatpush.msra.mxu0 %v1382
        %1931 = vmatpush.msra.mxu0 %v1378
        %1932 = vmatpush.msra.mxu0 %v1374
        %1933 = vmatpush.msra.mxu0 %v1370
        %1934 = vmatpush.msra.mxu0 %v1366
        %1935 = vmatpush.msra.mxu0 %v1362
        %1936 = vmatmul.f32.gmra.mxu0 %v1332
        %v1937 = vpop.f32.mrf.mxu0
        %v1938 = vadd.f32 0.0, %v1937
        %1939 = vmatmul.f32.gmra.mxu0 %v1336
        %v1940 = vpop.f32.mrf.mxu0
        %v1941 = vadd.f32 0.0, %v1940
        %1942 = vmatmul.f32.gmra.mxu0 %v1340
        %v1943 = vpop.f32.mrf.mxu0
        %v1944 = vadd.f32 0.0, %v1943
        %1945 = vmatmul.f32.gmra.mxu0 %v1344
        %v1946 = vpop.f32.mrf.mxu0
        %v1947 = vadd.f32 0.0, %v1946
        %1948 = vmatmul.f32.gmra.mxu0 %v1348
        %v1949 = vpop.f32.mrf.mxu0
        %v1950 = vadd.f32 0.0, %v1949
        %1951 = vmatmul.f32.gmra.mxu0 %v1352
        %v1952 = vpop.f32.mrf.mxu0
        %v1953 = vadd.f32 0.0, %v1952
        %1954 = vmatmul.f32.gmra.mxu0 %v1356
        %v1955 = vpop.f32.mrf.mxu0
        %v1956 = vadd.f32 0.0, %v1955
        %1957 = vdwg.mxu0
        %1958 = vmatpush.msra.mxu0 %v1486
        %1959 = vmatpush.msra.mxu0 %v1482
        %1960 = vmatpush.msra.mxu0 %v1478
        %1961 = vmatpush.msra.mxu0 %v1474
        %1962 = vmatpush.msra.mxu0 %v1470
        %1963 = vmatpush.msra.mxu0 %v1466
        %1964 = vmatpush.msra.mxu0 %v1462
        %1965 = vmatpush.msra.mxu0 %v1458
        %1966 = vmatpush.msra.mxu0 %v1454
        %1967 = vmatpush.msra.mxu0 %v1450
        %1968 = vmatpush.msra.mxu0 %v1446
        %1969 = vmatpush.msra.mxu0 %v1442
        %1970 = vmatpush.msra.mxu0 %v1438
        %1971 = vmatpush.msra.mxu0 %v1434
        %1972 = vmatpush.msra.mxu0 %v1430
        %1973 = vmatpush.msra.mxu0 %v1426
        %1974 = vmatmul.f32.gmra.mxu0 %v1333
        %v1975 = vpop.f32.mrf.mxu0
        %v1976 = vadd.f32 %v1938, %v1975
        %1977 = vmatmul.f32.gmra.mxu0 %v1337
        %v1978 = vpop.f32.mrf.mxu0
        %v1979 = vadd.f32 %v1941, %v1978
        %1980 = vmatmul.f32.gmra.mxu0 %v1341
        %v1981 = vpop.f32.mrf.mxu0
        %v1982 = vadd.f32 %v1944, %v1981
        %1983 = vmatmul.f32.gmra.mxu0 %v1345
        %v1984 = vpop.f32.mrf.mxu0
        %v1985 = vadd.f32 %v1947, %v1984
        %1986 = vmatmul.f32.gmra.mxu0 %v1349
        %v1987 = vpop.f32.mrf.mxu0
        %v1988 = vadd.f32 %v1950, %v1987
        %1989 = vmatmul.f32.gmra.mxu0 %v1353
        %v1990 = vpop.f32.mrf.mxu0
        %v1991 = vadd.f32 %v1953, %v1990
        %1992 = vmatmul.f32.gmra.mxu0 %v1357
        %v1993 = vpop.f32.mrf.mxu0
        %v1994 = vadd.f32 %v1956, %v1993
        %1995 = vdwg.mxu0
        %1996 = vmatpush.msra.mxu0 %v1550
        %1997 = vmatpush.msra.mxu0 %v1546
        %1998 = vmatpush.msra.mxu0 %v1542
        %1999 = vmatpush.msra.mxu0 %v1538
        %2000 = vmatpush.msra.mxu0 %v1534
        %2001 = vmatpush.msra.mxu0 %v1530
        %2002 = vmatpush.msra.mxu0 %v1526
        %2003 = vmatpush.msra.mxu0 %v1522
        %2004 = vmatpush.msra.mxu0 %v1518
        %2005 = vmatpush.msra.mxu0 %v1514
        %2006 = vmatpush.msra.mxu0 %v1510
        %2007 = vmatpush.msra.mxu0 %v1506
        %2008 = vmatpush.msra.mxu0 %v1502
        %2009 = vmatpush.msra.mxu0 %v1498
        %2010 = vmatpush.msra.mxu0 %v1494
        %2011 = vmatpush.msra.mxu0 %v1490
        %2012 = vmatmul.f32.gmra.mxu0 %v1334
        %v2013 = vpop.f32.mrf.mxu0
        %v2014 = vadd.f32 %v1976, %v2013
        %2015 = vmatmul.f32.gmra.mxu0 %v1338
        %v2016 = vpop.f32.mrf.mxu0
        %v2017 = vadd.f32 %v1979, %v2016
        %2018 = vmatmul.f32.gmra.mxu0 %v1342
        %v2019 = vpop.f32.mrf.mxu0
        %v2020 = vadd.f32 %v1982, %v2019
        %2021 = vmatmul.f32.gmra.mxu0 %v1346
        %v2022 = vpop.f32.mrf.mxu0
        %v2023 = vadd.f32 %v1985, %v2022
        %2024 = vmatmul.f32.gmra.mxu0 %v1350
        %v2025 = vpop.f32.mrf.mxu0
        %v2026 = vadd.f32 %v1988, %v2025
        %2027 = vmatmul.f32.gmra.mxu0 %v1354
        %v2028 = vpop.f32.mrf.mxu0
        %v2029 = vadd.f32 %v1991, %v2028
        %2030 = vmatmul.f32.gmra.mxu0 %v1358
        %v2031 = vpop.f32.mrf.mxu0
        %v2032 = vadd.f32 %v1994, %v2031
        %2033 = vdwg.mxu0
        %2034 = vmatpush.msra.mxu0 %v1614
        %2035 = vmatpush.msra.mxu0 %v1610
        %2036 = vmatpush.msra.mxu0 %v1606
        %2037 = vmatpush.msra.mxu0 %v1602
        %2038 = vmatpush.msra.mxu0 %v1598
        %2039 = vmatpush.msra.mxu0 %v1594
        %2040 = vmatpush.msra.mxu0 %v1590
        %2041 = vmatpush.msra.mxu0 %v1586
        %2042 = vmatpush.msra.mxu0 %v1582
        %2043 = vmatpush.msra.mxu0 %v1578
        %2044 = vmatpush.msra.mxu0 %v1574
        %2045 = vmatpush.msra.mxu0 %v1570
        %2046 = vmatpush.msra.mxu0 %v1566
        %2047 = vmatpush.msra.mxu0 %v1562
        %2048 = vmatpush.msra.mxu0 %v1558
        %2049 = vmatpush.msra.mxu0 %v1554
        %2050 = vmatmul.f32.gmra.mxu0 %v1335
        %v2051 = vpop.f32.mrf.mxu0
        %v2052 = vadd.f32 %v2014, %v2051
        %2053 = vmatmul.f32.gmra.mxu0 %v1339
        %v2054 = vpop.f32.mrf.mxu0
        %v2055 = vadd.f32 %v2017, %v2054
        %2056 = vmatmul.f32.gmra.mxu0 %v1343
        %v2057 = vpop.f32.mrf.mxu0
        %v2058 = vadd.f32 %v2020, %v2057
        %2059 = vmatmul.f32.gmra.mxu0 %v1347
        %v2060 = vpop.f32.mrf.mxu0
        %v2061 = vadd.f32 %v2023, %v2060
        %2062 = vmatmul.f32.gmra.mxu0 %v1351
        %v2063 = vpop.f32.mrf.mxu0
        %v2064 = vadd.f32 %v2026, %v2063
        %2065 = vmatmul.f32.gmra.mxu0 %v1355
        %v2066 = vpop.f32.mrf.mxu0
        %v2067 = vadd.f32 %v2029, %v2066
        %2068 = vmatmul.f32.gmra.mxu0 %v1359
        %v2069 = vpop.f32.mrf.mxu0
        %v2070 = vadd.f32 %v2032, %v2069
        %2071 = vdwg.mxu0
        %2072 = vmatpush.msra.mxu0 %v1423
        %2073 = vmatpush.msra.mxu0 %v1419
        %2074 = vmatpush.msra.mxu0 %v1415
        %2075 = vmatpush.msra.mxu0 %v1411
        %2076 = vmatpush.msra.mxu0 %v1407
        %2077 = vmatpush.msra.mxu0 %v1403
        %2078 = vmatpush.msra.mxu0 %v1399
        %2079 = vmatpush.msra.mxu0 %v1395
        %2080 = vmatpush.msra.mxu0 %v1391
        %2081 = vmatpush.msra.mxu0 %v1387
        %2082 = vmatpush.msra.mxu0 %v1383
        %2083 = vmatpush.msra.mxu0 %v1379
        %2084 = vmatpush.msra.mxu0 %v1375
        %2085 = vmatpush.msra.mxu0 %v1371
        %2086 = vmatpush.msra.mxu0 %v1367
        %2087 = vmatpush.msra.mxu0 %v1363
        %2088 = vmatmul.f32.gmra.mxu0 %v1332
        %v2089 = vpop.f32.mrf.mxu0
        %v2090 = vadd.f32 0.0, %v2089
        %2091 = vmatmul.f32.gmra.mxu0 %v1336
        %v2092 = vpop.f32.mrf.mxu0
        %v2093 = vadd.f32 0.0, %v2092
        %2094 = vmatmul.f32.gmra.mxu0 %v1340
        %v2095 = vpop.f32.mrf.mxu0
        %v2096 = vadd.f32 0.0, %v2095
        %2097 = vmatmul.f32.gmra.mxu0 %v1344
        %v2098 = vpop.f32.mrf.mxu0
        %v2099 = vadd.f32 0.0, %v2098
        %2100 = vmatmul.f32.gmra.mxu0 %v1348
        %v2101 = vpop.f32.mrf.mxu0
        %v2102 = vadd.f32 0.0, %v2101
        %2103 = vmatmul.f32.gmra.mxu0 %v1352
        %v2104 = vpop.f32.mrf.mxu0
        %v2105 = vadd.f32 0.0, %v2104
        %2106 = vmatmul.f32.gmra.mxu0 %v1356
        %v2107 = vpop.f32.mrf.mxu0
        %v2108 = vadd.f32 0.0, %v2107
        %2109 = vdwg.mxu0
        %2110 = vmatpush.msra.mxu0 %v1487
        %2111 = vmatpush.msra.mxu0 %v1483
        %2112 = vmatpush.msra.mxu0 %v1479
        %2113 = vmatpush.msra.mxu0 %v1475
        %2114 = vmatpush.msra.mxu0 %v1471
        %2115 = vmatpush.msra.mxu0 %v1467
        %2116 = vmatpush.msra.mxu0 %v1463
        %2117 = vmatpush.msra.mxu0 %v1459
        %2118 = vmatpush.msra.mxu0 %v1455
        %2119 = vmatpush.msra.mxu0 %v1451
        %2120 = vmatpush.msra.mxu0 %v1447
        %2121 = vmatpush.msra.mxu0 %v1443
        %2122 = vmatpush.msra.mxu0 %v1439
        %2123 = vmatpush.msra.mxu0 %v1435
        %2124 = vmatpush.msra.mxu0 %v1431
        %2125 = vmatpush.msra.mxu0 %v1427
        %2126 = vmatmul.f32.gmra.mxu0 %v1333
        %v2127 = vpop.f32.mrf.mxu0
        %v2128 = vadd.f32 %v2090, %v2127
        %2129 = vmatmul.f32.gmra.mxu0 %v1337
        %v2130 = vpop.f32.mrf.mxu0
        %v2131 = vadd.f32 %v2093, %v2130
        %2132 = vmatmul.f32.gmra.mxu0 %v1341
        %v2133 = vpop.f32.mrf.mxu0
        %v2134 = vadd.f32 %v2096, %v2133
        %2135 = vmatmul.f32.gmra.mxu0 %v1345
        %v2136 = vpop.f32.mrf.mxu0
        %v2137 = vadd.f32 %v2099, %v2136
        %2138 = vmatmul.f32.gmra.mxu0 %v1349
        %v2139 = vpop.f32.mrf.mxu0
        %v2140 = vadd.f32 %v2102, %v2139
        %2141 = vmatmul.f32.gmra.mxu0 %v1353
        %v2142 = vpop.f32.mrf.mxu0
        %v2143 = vadd.f32 %v2105, %v2142
        %2144 = vmatmul.f32.gmra.mxu0 %v1357
        %v2145 = vpop.f32.mrf.mxu0
        %v2146 = vadd.f32 %v2108, %v2145
        %2147 = vdwg.mxu0
        %2148 = vmatpush.msra.mxu0 %v1551
        %2149 = vmatpush.msra.mxu0 %v1547
        %2150 = vmatpush.msra.mxu0 %v1543
        %2151 = vmatpush.msra.mxu0 %v1539
        %2152 = vmatpush.msra.mxu0 %v1535
        %2153 = vmatpush.msra.mxu0 %v1531
        %2154 = vmatpush.msra.mxu0 %v1527
        %2155 = vmatpush.msra.mxu0 %v1523
        %2156 = vmatpush.msra.mxu0 %v1519
        %2157 = vmatpush.msra.mxu0 %v1515
        %2158 = vmatpush.msra.mxu0 %v1511
        %2159 = vmatpush.msra.mxu0 %v1507
        %2160 = vmatpush.msra.mxu0 %v1503
        %2161 = vmatpush.msra.mxu0 %v1499
        %2162 = vmatpush.msra.mxu0 %v1495
        %2163 = vmatpush.msra.mxu0 %v1491
        %2164 = vmatmul.f32.gmra.mxu0 %v1334
        %v2165 = vpop.f32.mrf.mxu0
        %v2166 = vadd.f32 %v2128, %v2165
        %2167 = vmatmul.f32.gmra.mxu0 %v1338
        %v2168 = vpop.f32.mrf.mxu0
        %v2169 = vadd.f32 %v2131, %v2168
        %2170 = vmatmul.f32.gmra.mxu0 %v1342
        %v2171 = vpop.f32.mrf.mxu0
        %v2172 = vadd.f32 %v2134, %v2171
        %2173 = vmatmul.f32.gmra.mxu0 %v1346
        %v2174 = vpop.f32.mrf.mxu0
        %v2175 = vadd.f32 %v2137, %v2174
        %2176 = vmatmul.f32.gmra.mxu0 %v1350
        %v2177 = vpop.f32.mrf.mxu0
        %v2178 = vadd.f32 %v2140, %v2177
        %2179 = vmatmul.f32.gmra.mxu0 %v1354
        %v2180 = vpop.f32.mrf.mxu0
        %v2181 = vadd.f32 %v2143, %v2180
        %2182 = vmatmul.f32.gmra.mxu0 %v1358
        %v2183 = vpop.f32.mrf.mxu0
        %v2184 = vadd.f32 %v2146, %v2183
        %2185 = vdwg.mxu0
        %2186 = vmatpush.msra.mxu0 %v1615
        %2187 = vmatpush.msra.mxu0 %v1611
        %2188 = vmatpush.msra.mxu0 %v1607
        %2189 = vmatpush.msra.mxu0 %v1603
        %2190 = vmatpush.msra.mxu0 %v1599
        %2191 = vmatpush.msra.mxu0 %v1595
        %2192 = vmatpush.msra.mxu0 %v1591
        %2193 = vmatpush.msra.mxu0 %v1587
        %2194 = vmatpush.msra.mxu0 %v1583
        %2195 = vmatpush.msra.mxu0 %v1579
        %2196 = vmatpush.msra.mxu0 %v1575
        %2197 = vmatpush.msra.mxu0 %v1571
        %2198 = vmatpush.msra.mxu0 %v1567
        %2199 = vmatpush.msra.mxu0 %v1563
        %2200 = vmatpush.msra.mxu0 %v1559
        %2201 = vmatpush.msra.mxu0 %v1555
        %2202 = vmatmul.f32.gmra.mxu0 %v1335
        %v2203 = vpop.f32.mrf.mxu0
        %v2204 = vadd.f32 %v2166, %v2203
        %2205 = vmatmul.f32.gmra.mxu0 %v1339
        %v2206 = vpop.f32.mrf.mxu0
        %v2207 = vadd.f32 %v2169, %v2206
        %2208 = vmatmul.f32.gmra.mxu0 %v1343
        %v2209 = vpop.f32.mrf.mxu0
        %v2210 = vadd.f32 %v2172, %v2209
        %2211 = vmatmul.f32.gmra.mxu0 %v1347
        %v2212 = vpop.f32.mrf.mxu0
        %v2213 = vadd.f32 %v2175, %v2212
        %2214 = vmatmul.f32.gmra.mxu0 %v1351
        %v2215 = vpop.f32.mrf.mxu0
        %v2216 = vadd.f32 %v2178, %v2215
        %2217 = vmatmul.f32.gmra.mxu0 %v1355
        %v2218 = vpop.f32.mrf.mxu0
        %v2219 = vadd.f32 %v2181, %v2218
        %2220 = vmatmul.f32.gmra.mxu0 %v1359
        %v2221 = vpop.f32.mrf.mxu0
        %v2222 = vadd.f32 %v2184, %v2221
        %2223 = vdwg.mxu0
        %v2224 = vmul.f32 %v1748, %v1332
        %v2225 = vmul.f32 %v1900, %v1333
        %v2226 = vmul.f32 %v2052, %v1334
        %v2227 = vmul.f32 %v2204, %v1335
        %v2228 = vmul.f32 %v1751, %v1336
        %v2229 = vmul.f32 %v1903, %v1337
        %v2230 = vmul.f32 %v2055, %v1338
        %v2231 = vmul.f32 %v2207, %v1339
        %v2232 = vmul.f32 %v1754, %v1340
        %v2233 = vmul.f32 %v1906, %v1341
        %v2234 = vmul.f32 %v2058, %v1342
        %v2235 = vmul.f32 %v2210, %v1343
        %v2236 = vmul.f32 %v1757, %v1344
        %v2237 = vmul.f32 %v1909, %v1345
        %v2238 = vmul.f32 %v2061, %v1346
        %v2239 = vmul.f32 %v2213, %v1347
        %v2240 = vmul.f32 %v1760, %v1348
        %v2241 = vmul.f32 %v1912, %v1349
        %v2242 = vmul.f32 %v2064, %v1350
        %v2243 = vmul.f32 %v2216, %v1351
        %v2244 = vmul.f32 %v1763, %v1352
        %v2245 = vmul.f32 %v1915, %v1353
        %v2246 = vmul.f32 %v2067, %v1354
        %v2247 = vmul.f32 %v2219, %v1355
        %v2248 = vmul.f32 %v1766, %v1356
        %v2249 = vmul.f32 %v1918, %v1357
        %v2250 = vmul.f32 %v2070, %v1358
        %v2251 = vmul.f32 %v2222, %v1359
        %v2252 = vadd.f32 %v2224, %v2225
        %v2253 = vadd.f32 %v2252, %v2226
        %v2254 = vadd.f32 %v2253, %v2227
        %2255 = vadd.xlane.f32.xlu0 %v2254
        %v2256 = vpop.xlane.xlu0 %2255
        %v2257 = vadd.f32 %v2228, %v2229
        %v2258 = vadd.f32 %v2257, %v2230
        %v2259 = vadd.f32 %v2258, %v2231
        %2260 = vadd.xlane.f32.xlu0 %v2259
        %v2261 = vpop.xlane.xlu0 %2260
        %v2262 = vadd.f32 %v2232, %v2233
        %v2263 = vadd.f32 %v2262, %v2234
        %v2264 = vadd.f32 %v2263, %v2235
        %2265 = vadd.xlane.f32.xlu0 %v2264
        %v2266 = vpop.xlane.xlu0 %2265
        %v2267 = vadd.f32 %v2236, %v2237
        %v2268 = vadd.f32 %v2267, %v2238
        %v2269 = vadd.f32 %v2268, %v2239
        %2270 = vadd.xlane.f32.xlu0 %v2269
        %v2271 = vpop.xlane.xlu0 %2270
        %v2272 = vadd.f32 %v2240, %v2241
        %v2273 = vadd.f32 %v2272, %v2242
        %v2274 = vadd.f32 %v2273, %v2243
        %2275 = vadd.xlane.f32.xlu0 %v2274
        %v2276 = vpop.xlane.xlu0 %2275
        %v2277 = vadd.f32 %v2244, %v2245
        %v2278 = vadd.f32 %v2277, %v2246
        %v2279 = vadd.f32 %v2278, %v2247
        %2280 = vadd.xlane.f32.xlu0 %v2279
        %v2281 = vpop.xlane.xlu0 %2280
        %v2282 = vadd.f32 %v2248, %v2249
        %v2283 = vadd.f32 %v2282, %v2250
        %v2284 = vadd.f32 %v2283, %v2251
        %2285 = vadd.xlane.f32.xlu0 %v2284
        %v2286 = vpop.xlane.xlu0 %2285
        %v2287 = vld [vmem:[%s5] sm:$0xf]
        %v2289 = vperm.slane %v2287, 0
        %v2290 = vperm.slane %v2287, 1
        %v2291 = vperm.slane %v2287, 2
        %v2292 = vperm.slane %v2287, 3
        %v2297 = vsub.f32 %v1294, %v2289
        %v2298 = vsub.f32 %v1295, %v2290
        %v2299 = vsub.f32 %v1308, %v2291
        %v2300 = vsub.f32 %v1309, %v2292
        %v2301 = vsub.f32 %v1296, %v2289
        %v2302 = vsub.f32 %v1297, %v2290
        %v2303 = vsub.f32 %v1310, %v2291
        %v2304 = vsub.f32 %v1311, %v2292
        %v2305 = vsub.f32 %v1298, %v2289
        %v2306 = vsub.f32 %v1299, %v2290
        %v2307 = vsub.f32 %v1312, %v2291
        %v2308 = vsub.f32 %v1313, %v2292
        %v2309 = vsub.f32 %v1300, %v2289
        %v2310 = vsub.f32 %v1301, %v2290
        %v2311 = vsub.f32 %v1314, %v2291
        %v2312 = vsub.f32 %v1315, %v2292
        %v2313 = vsub.f32 %v1302, %v2289
        %v2314 = vsub.f32 %v1303, %v2290
        %v2315 = vsub.f32 %v1316, %v2291
        %v2316 = vsub.f32 %v1317, %v2292
        %v2317 = vsub.f32 %v1304, %v2289
        %v2318 = vsub.f32 %v1305, %v2290
        %v2319 = vsub.f32 %v1318, %v2291
        %v2320 = vsub.f32 %v1319, %v2292
        %v2321 = vsub.f32 %v1306, %v2289
        %v2322 = vsub.f32 %v1307, %v2290
        %v2323 = vsub.f32 %v1320, %v2291
        %v2324 = vsub.f32 %v1321, %v2292
        %v2325 = vld [vmem:[#allocation10] sm:$0xff]
        %v2326 = vld [vmem:[#allocation10 + $0x8] sm:$0xff]
        %v2327 = vld [vmem:[#allocation10 + $0x10] sm:$0xff]
        %v2328 = vld [vmem:[#allocation10 + $0x18] sm:$0xff]
        %v2329 = vld [vmem:[#allocation10 + $0x20] sm:$0xff]
        %v2330 = vld [vmem:[#allocation10 + $0x28] sm:$0xff]
        %v2331 = vld [vmem:[#allocation10 + $0x30] sm:$0xff]
        %v2332 = vld [vmem:[#allocation10 + $0x38] sm:$0xff]
        %v2333 = vld [vmem:[#allocation10 + $0x40] sm:$0xff]
        %v2334 = vld [vmem:[#allocation10 + $0x48] sm:$0xff]
        %v2335 = vld [vmem:[#allocation10 + $0x50] sm:$0xff]
        %v2336 = vld [vmem:[#allocation10 + $0x58] sm:$0xff]
        %v2337 = vld [vmem:[#allocation10 + $0x60] sm:$0xff]
        %v2338 = vld [vmem:[#allocation10 + $0x68] sm:$0xff]
        %v2339 = vld [vmem:[#allocation10 + $0x70] sm:$0xff]
        %v2340 = vld [vmem:[#allocation10 + $0x78] sm:$0xff]
        %v2341 = vld [vmem:[#allocation10 + $0x80] sm:$0xff]
        %v2342 = vld [vmem:[#allocation10 + $0x88] sm:$0xff]
        %v2343 = vld [vmem:[#allocation10 + $0x90] sm:$0xff]
        %v2344 = vld [vmem:[#allocation10 + $0x98] sm:$0xff]
        %v2345 = vld [vmem:[#allocation10 + $0xa0] sm:$0xff]
        %v2346 = vld [vmem:[#allocation10 + $0xa8] sm:$0xff]
        %v2347 = vld [vmem:[#allocation10 + $0xb0] sm:$0xff]
        %v2348 = vld [vmem:[#allocation10 + $0xb8] sm:$0xff]
        %v2349 = vld [vmem:[#allocation10 + $0xc0] sm:$0xff]
        %v2350 = vld [vmem:[#allocation10 + $0xc8] sm:$0xff]
        %v2351 = vld [vmem:[#allocation10 + $0xd0] sm:$0xff]
        %v2352 = vld [vmem:[#allocation10 + $0xd8] sm:$0xff]
        %v2353 = vld [vmem:[#allocation10 + $0xe0] sm:$0xff]
        %v2354 = vld [vmem:[#allocation10 + $0xe8] sm:$0xff]
        %v2355 = vld [vmem:[#allocation10 + $0xf0] sm:$0xff]
        %v2356 = vld [vmem:[#allocation10 + $0xf8] sm:$0xff]
        %v2357 = vld [vmem:[#allocation10 + $0x100] sm:$0xff]
        %v2358 = vld [vmem:[#allocation10 + $0x108] sm:$0xff]
        %v2359 = vld [vmem:[#allocation10 + $0x110] sm:$0xff]
        %v2360 = vld [vmem:[#allocation10 + $0x118] sm:$0xff]
        %v2361 = vld [vmem:[#allocation10 + $0x120] sm:$0xff]
        %v2362 = vld [vmem:[#allocation10 + $0x128] sm:$0xff]
        %v2363 = vld [vmem:[#allocation10 + $0x130] sm:$0xff]
        %v2364 = vld [vmem:[#allocation10 + $0x138] sm:$0xff]
        %v2365 = vld [vmem:[#allocation10 + $0x140] sm:$0xff]
        %v2366 = vld [vmem:[#allocation10 + $0x148] sm:$0xff]
        %v2367 = vld [vmem:[#allocation10 + $0x150] sm:$0xff]
        %v2368 = vld [vmem:[#allocation10 + $0x158] sm:$0xff]
        %v2369 = vld [vmem:[#allocation10 + $0x160] sm:$0xff]
        %v2370 = vld [vmem:[#allocation10 + $0x168] sm:$0xff]
        %v2371 = vld [vmem:[#allocation10 + $0x170] sm:$0xff]
        %v2372 = vld [vmem:[#allocation10 + $0x178] sm:$0xff]
        %v2373 = vld [vmem:[#allocation10 + $0x180] sm:$0xff]
        %v2374 = vld [vmem:[#allocation10 + $0x188] sm:$0xff]
        %v2375 = vld [vmem:[#allocation10 + $0x190] sm:$0xff]
        %v2376 = vld [vmem:[#allocation10 + $0x198] sm:$0xff]
        %v2377 = vld [vmem:[#allocation10 + $0x1a0] sm:$0xff]
        %v2378 = vld [vmem:[#allocation10 + $0x1a8] sm:$0xff]
        %v2379 = vld [vmem:[#allocation10 + $0x1b0] sm:$0xff]
        %v2380 = vld [vmem:[#allocation10 + $0x1b8] sm:$0xff]
        %v2381 = vld [vmem:[#allocation10 + $0x1c0] sm:$0xff]
        %v2382 = vld [vmem:[#allocation10 + $0x1c8] sm:$0xff]
        %v2383 = vld [vmem:[#allocation10 + $0x1d0] sm:$0xff]
        %v2384 = vld [vmem:[#allocation10 + $0x1d8] sm:$0xff]
        %v2385 = vld [vmem:[#allocation10 + $0x1e0] sm:$0xff]
        %v2386 = vld [vmem:[#allocation10 + $0x1e8] sm:$0xff]
        %v2387 = vld [vmem:[#allocation10 + $0x1f0] sm:$0xff]
        %v2388 = vld [vmem:[#allocation10 + $0x1f8] sm:$0xff]
        %v2389 = vld [vmem:[#allocation10 + $0x200] sm:$0xff]
        %v2390 = vld [vmem:[#allocation10 + $0x208] sm:$0xff]
        %v2391 = vld [vmem:[#allocation10 + $0x210] sm:$0xff]
        %v2392 = vld [vmem:[#allocation10 + $0x218] sm:$0xff]
        %v2393 = vld [vmem:[#allocation10 + $0x220] sm:$0xff]
        %v2394 = vld [vmem:[#allocation10 + $0x228] sm:$0xff]
        %v2395 = vld [vmem:[#allocation10 + $0x230] sm:$0xff]
        %v2396 = vld [vmem:[#allocation10 + $0x238] sm:$0xff]
        %v2397 = vld [vmem:[#allocation10 + $0x240] sm:$0xff]
        %v2398 = vld [vmem:[#allocation10 + $0x248] sm:$0xff]
        %v2399 = vld [vmem:[#allocation10 + $0x250] sm:$0xff]
        %v2400 = vld [vmem:[#allocation10 + $0x258] sm:$0xff]
        %v2401 = vld [vmem:[#allocation10 + $0x260] sm:$0xff]
        %v2402 = vld [vmem:[#allocation10 + $0x268] sm:$0xff]
        %v2403 = vld [vmem:[#allocation10 + $0x270] sm:$0xff]
        %v2404 = vld [vmem:[#allocation10 + $0x278] sm:$0xff]
        %v2405 = vld [vmem:[#allocation10 + $0x280] sm:$0xff]
        %v2406 = vld [vmem:[#allocation10 + $0x288] sm:$0xff]
        %v2407 = vld [vmem:[#allocation10 + $0x290] sm:$0xff]
        %v2408 = vld [vmem:[#allocation10 + $0x298] sm:$0xff]
        %v2409 = vld [vmem:[#allocation10 + $0x2a0] sm:$0xff]
        %v2410 = vld [vmem:[#allocation10 + $0x2a8] sm:$0xff]
        %v2411 = vld [vmem:[#allocation10 + $0x2b0] sm:$0xff]
        %v2412 = vld [vmem:[#allocation10 + $0x2b8] sm:$0xff]
        %v2413 = vld [vmem:[#allocation10 + $0x2c0] sm:$0xff]
        %v2414 = vld [vmem:[#allocation10 + $0x2c8] sm:$0xff]
        %v2415 = vld [vmem:[#allocation10 + $0x2d0] sm:$0xff]
        %v2416 = vld [vmem:[#allocation10 + $0x2d8] sm:$0xff]
        %v2417 = vld [vmem:[#allocation10 + $0x2e0] sm:$0xff]
        %v2418 = vld [vmem:[#allocation10 + $0x2e8] sm:$0xff]
        %v2419 = vld [vmem:[#allocation10 + $0x2f0] sm:$0xff]
        %v2420 = vld [vmem:[#allocation10 + $0x2f8] sm:$0xff]
        %v2421 = vld [vmem:[#allocation10 + $0x300] sm:$0xff]
        %v2422 = vld [vmem:[#allocation10 + $0x308] sm:$0xff]
        %v2423 = vld [vmem:[#allocation10 + $0x310] sm:$0xff]
        %v2424 = vld [vmem:[#allocation10 + $0x318] sm:$0xff]
        %v2425 = vld [vmem:[#allocation10 + $0x320] sm:$0xff]
        %v2426 = vld [vmem:[#allocation10 + $0x328] sm:$0xff]
        %v2427 = vld [vmem:[#allocation10 + $0x330] sm:$0xff]
        %v2428 = vld [vmem:[#allocation10 + $0x338] sm:$0xff]
        %v2429 = vld [vmem:[#allocation10 + $0x340] sm:$0xff]
        %v2430 = vld [vmem:[#allocation10 + $0x348] sm:$0xff]
        %v2431 = vld [vmem:[#allocation10 + $0x350] sm:$0xff]
        %v2432 = vld [vmem:[#allocation10 + $0x358] sm:$0xff]
        %v2433 = vld [vmem:[#allocation10 + $0x360] sm:$0xff]
        %v2434 = vld [vmem:[#allocation10 + $0x368] sm:$0xff]
        %v2435 = vld [vmem:[#allocation10 + $0x370] sm:$0xff]
        %v2436 = vld [vmem:[#allocation10 + $0x378] sm:$0xff]
        %v2437 = vld [vmem:[#allocation10 + $0x380] sm:$0xff]
        %v2438 = vld [vmem:[#allocation10 + $0x388] sm:$0xff]
        %v2439 = vld [vmem:[#allocation10 + $0x390] sm:$0xff]
        %v2440 = vld [vmem:[#allocation10 + $0x398] sm:$0xff]
        %v2441 = vld [vmem:[#allocation10 + $0x3a0] sm:$0xff]
        %v2442 = vld [vmem:[#allocation10 + $0x3a8] sm:$0xff]
        %v2443 = vld [vmem:[#allocation10 + $0x3b0] sm:$0xff]
        %v2444 = vld [vmem:[#allocation10 + $0x3b8] sm:$0xff]
        %v2445 = vld [vmem:[#allocation10 + $0x3c0] sm:$0xff]
        %v2446 = vld [vmem:[#allocation10 + $0x3c8] sm:$0xff]
        %v2447 = vld [vmem:[#allocation10 + $0x3d0] sm:$0xff]
        %v2448 = vld [vmem:[#allocation10 + $0x3d8] sm:$0xff]
        %v2449 = vld [vmem:[#allocation10 + $0x3e0] sm:$0xff]
        %v2450 = vld [vmem:[#allocation10 + $0x3e8] sm:$0xff]
        %v2451 = vld [vmem:[#allocation10 + $0x3f0] sm:$0xff]
        %v2452 = vld [vmem:[#allocation10 + $0x3f8] sm:$0xff]
        %v2453 = vld [vmem:[#allocation10 + $0x400] sm:$0xff]
        %v2454 = vld [vmem:[#allocation10 + $0x408] sm:$0xff]
        %v2455 = vld [vmem:[#allocation10 + $0x410] sm:$0xff]
        %v2456 = vld [vmem:[#allocation10 + $0x418] sm:$0xff]
        %v2457 = vld [vmem:[#allocation10 + $0x420] sm:$0xff]
        %v2458 = vld [vmem:[#allocation10 + $0x428] sm:$0xff]
        %v2459 = vld [vmem:[#allocation10 + $0x430] sm:$0xff]
        %v2460 = vld [vmem:[#allocation10 + $0x438] sm:$0xff]
        %v2461 = vld [vmem:[#allocation10 + $0x440] sm:$0xff]
        %v2462 = vld [vmem:[#allocation10 + $0x448] sm:$0xff]
        %v2463 = vld [vmem:[#allocation10 + $0x450] sm:$0xff]
        %v2464 = vld [vmem:[#allocation10 + $0x458] sm:$0xff]
        %v2465 = vld [vmem:[#allocation10 + $0x460] sm:$0xff]
        %v2466 = vld [vmem:[#allocation10 + $0x468] sm:$0xff]
        %v2467 = vld [vmem:[#allocation10 + $0x470] sm:$0xff]
        %v2468 = vld [vmem:[#allocation10 + $0x478] sm:$0xff]
        %v2469 = vld [vmem:[#allocation10 + $0x480] sm:$0xff]
        %v2470 = vld [vmem:[#allocation10 + $0x488] sm:$0xff]
        %v2471 = vld [vmem:[#allocation10 + $0x490] sm:$0xff]
        %v2472 = vld [vmem:[#allocation10 + $0x498] sm:$0xff]
        %v2473 = vld [vmem:[#allocation10 + $0x4a0] sm:$0xff]
        %v2474 = vld [vmem:[#allocation10 + $0x4a8] sm:$0xff]
        %v2475 = vld [vmem:[#allocation10 + $0x4b0] sm:$0xff]
        %v2476 = vld [vmem:[#allocation10 + $0x4b8] sm:$0xff]
        %v2477 = vld [vmem:[#allocation10 + $0x4c0] sm:$0xff]
        %v2478 = vld [vmem:[#allocation10 + $0x4c8] sm:$0xff]
        %v2479 = vld [vmem:[#allocation10 + $0x4d0] sm:$0xff]
        %v2480 = vld [vmem:[#allocation10 + $0x4d8] sm:$0xff]
        %v2481 = vld [vmem:[#allocation10 + $0x4e0] sm:$0xff]
        %v2482 = vld [vmem:[#allocation10 + $0x4e8] sm:$0xff]
        %v2483 = vld [vmem:[#allocation10 + $0x4f0] sm:$0xff]
        %v2484 = vld [vmem:[#allocation10 + $0x4f8] sm:$0xff]
        %v2485 = vld [vmem:[#allocation10 + $0x500] sm:$0xff]
        %v2486 = vld [vmem:[#allocation10 + $0x508] sm:$0xff]
        %v2487 = vld [vmem:[#allocation10 + $0x510] sm:$0xff]
        %v2488 = vld [vmem:[#allocation10 + $0x518] sm:$0xff]
        %v2489 = vld [vmem:[#allocation10 + $0x520] sm:$0xff]
        %v2490 = vld [vmem:[#allocation10 + $0x528] sm:$0xff]
        %v2491 = vld [vmem:[#allocation10 + $0x530] sm:$0xff]
        %v2492 = vld [vmem:[#allocation10 + $0x538] sm:$0xff]
        %v2493 = vld [vmem:[#allocation10 + $0x540] sm:$0xff]
        %v2494 = vld [vmem:[#allocation10 + $0x548] sm:$0xff]
        %v2495 = vld [vmem:[#allocation10 + $0x550] sm:$0xff]
        %v2496 = vld [vmem:[#allocation10 + $0x558] sm:$0xff]
        %v2497 = vld [vmem:[#allocation10 + $0x560] sm:$0xff]
        %v2498 = vld [vmem:[#allocation10 + $0x568] sm:$0xff]
        %v2499 = vld [vmem:[#allocation10 + $0x570] sm:$0xff]
        %v2500 = vld [vmem:[#allocation10 + $0x578] sm:$0xff]
        %v2501 = vld [vmem:[#allocation10 + $0x580] sm:$0xff]
        %v2502 = vld [vmem:[#allocation10 + $0x588] sm:$0xff]
        %v2503 = vld [vmem:[#allocation10 + $0x590] sm:$0xff]
        %v2504 = vld [vmem:[#allocation10 + $0x598] sm:$0xff]
        %v2505 = vld [vmem:[#allocation10 + $0x5a0] sm:$0xff]
        %v2506 = vld [vmem:[#allocation10 + $0x5a8] sm:$0xff]
        %v2507 = vld [vmem:[#allocation10 + $0x5b0] sm:$0xff]
        %v2508 = vld [vmem:[#allocation10 + $0x5b8] sm:$0xff]
        %v2509 = vld [vmem:[#allocation10 + $0x5c0] sm:$0xff]
        %v2510 = vld [vmem:[#allocation10 + $0x5c8] sm:$0xff]
        %v2511 = vld [vmem:[#allocation10 + $0x5d0] sm:$0xff]
        %v2512 = vld [vmem:[#allocation10 + $0x5d8] sm:$0xff]
        %v2513 = vld [vmem:[#allocation10 + $0x5e0] sm:$0xff]
        %v2514 = vld [vmem:[#allocation10 + $0x5e8] sm:$0xff]
        %v2515 = vld [vmem:[#allocation10 + $0x5f0] sm:$0xff]
        %v2516 = vld [vmem:[#allocation10 + $0x5f8] sm:$0xff]
        %v2517 = vld [vmem:[#allocation10 + $0x600] sm:$0xff]
        %v2518 = vld [vmem:[#allocation10 + $0x608] sm:$0xff]
        %v2519 = vld [vmem:[#allocation10 + $0x610] sm:$0xff]
        %v2520 = vld [vmem:[#allocation10 + $0x618] sm:$0xff]
        %v2521 = vld [vmem:[#allocation10 + $0x620] sm:$0xff]
        %v2522 = vld [vmem:[#allocation10 + $0x628] sm:$0xff]
        %v2523 = vld [vmem:[#allocation10 + $0x630] sm:$0xff]
        %v2524 = vld [vmem:[#allocation10 + $0x638] sm:$0xff]
        %v2525 = vld [vmem:[#allocation10 + $0x640] sm:$0xff]
        %v2526 = vld [vmem:[#allocation10 + $0x648] sm:$0xff]
        %v2527 = vld [vmem:[#allocation10 + $0x650] sm:$0xff]
        %v2528 = vld [vmem:[#allocation10 + $0x658] sm:$0xff]
        %v2529 = vld [vmem:[#allocation10 + $0x660] sm:$0xff]
        %v2530 = vld [vmem:[#allocation10 + $0x668] sm:$0xff]
        %v2531 = vld [vmem:[#allocation10 + $0x670] sm:$0xff]
        %v2532 = vld [vmem:[#allocation10 + $0x678] sm:$0xff]
        %v2533 = vld [vmem:[#allocation10 + $0x680] sm:$0xff]
        %v2534 = vld [vmem:[#allocation10 + $0x688] sm:$0xff]
        %v2535 = vld [vmem:[#allocation10 + $0x690] sm:$0xff]
        %v2536 = vld [vmem:[#allocation10 + $0x698] sm:$0xff]
        %v2537 = vld [vmem:[#allocation10 + $0x6a0] sm:$0xff]
        %v2538 = vld [vmem:[#allocation10 + $0x6a8] sm:$0xff]
        %v2539 = vld [vmem:[#allocation10 + $0x6b0] sm:$0xff]
        %v2540 = vld [vmem:[#allocation10 + $0x6b8] sm:$0xff]
        %v2541 = vld [vmem:[#allocation10 + $0x6c0] sm:$0xff]
        %v2542 = vld [vmem:[#allocation10 + $0x6c8] sm:$0xff]
        %v2543 = vld [vmem:[#allocation10 + $0x6d0] sm:$0xff]
        %v2544 = vld [vmem:[#allocation10 + $0x6d8] sm:$0xff]
        %v2545 = vld [vmem:[#allocation10 + $0x6e0] sm:$0xff]
        %v2546 = vld [vmem:[#allocation10 + $0x6e8] sm:$0xff]
        %v2547 = vld [vmem:[#allocation10 + $0x6f0] sm:$0xff]
        %v2548 = vld [vmem:[#allocation10 + $0x6f8] sm:$0xff]
        %v2549 = vld [vmem:[#allocation10 + $0x700] sm:$0xff]
        %v2550 = vld [vmem:[#allocation10 + $0x708] sm:$0xff]
        %v2551 = vld [vmem:[#allocation10 + $0x710] sm:$0xff]
        %v2552 = vld [vmem:[#allocation10 + $0x718] sm:$0xff]
        %v2553 = vld [vmem:[#allocation10 + $0x720] sm:$0xff]
        %v2554 = vld [vmem:[#allocation10 + $0x728] sm:$0xff]
        %v2555 = vld [vmem:[#allocation10 + $0x730] sm:$0xff]
        %v2556 = vld [vmem:[#allocation10 + $0x738] sm:$0xff]
        %v2557 = vld [vmem:[#allocation10 + $0x740] sm:$0xff]
        %v2558 = vld [vmem:[#allocation10 + $0x748] sm:$0xff]
        %v2559 = vld [vmem:[#allocation10 + $0x750] sm:$0xff]
        %v2560 = vld [vmem:[#allocation10 + $0x758] sm:$0xff]
        %v2561 = vld [vmem:[#allocation10 + $0x760] sm:$0xff]
        %v2562 = vld [vmem:[#allocation10 + $0x768] sm:$0xff]
        %v2563 = vld [vmem:[#allocation10 + $0x770] sm:$0xff]
        %v2564 = vld [vmem:[#allocation10 + $0x778] sm:$0xff]
        %v2565 = vld [vmem:[#allocation10 + $0x780] sm:$0xff]
        %v2566 = vld [vmem:[#allocation10 + $0x788] sm:$0xff]
        %v2567 = vld [vmem:[#allocation10 + $0x790] sm:$0xff]
        %v2568 = vld [vmem:[#allocation10 + $0x798] sm:$0xff]
        %v2569 = vld [vmem:[#allocation10 + $0x7a0] sm:$0xff]
        %v2570 = vld [vmem:[#allocation10 + $0x7a8] sm:$0xff]
        %v2571 = vld [vmem:[#allocation10 + $0x7b0] sm:$0xff]
        %v2572 = vld [vmem:[#allocation10 + $0x7b8] sm:$0xff]
        %v2573 = vld [vmem:[#allocation10 + $0x7c0] sm:$0xff]
        %v2574 = vld [vmem:[#allocation10 + $0x7c8] sm:$0xff]
        %v2575 = vld [vmem:[#allocation10 + $0x7d0] sm:$0xff]
        %v2576 = vld [vmem:[#allocation10 + $0x7d8] sm:$0xff]
        %v2577 = vld [vmem:[#allocation10 + $0x7e0] sm:$0xff]
        %v2578 = vld [vmem:[#allocation10 + $0x7e8] sm:$0xff]
        %v2579 = vld [vmem:[#allocation10 + $0x7f0] sm:$0xff]
        %v2580 = vld [vmem:[#allocation10 + $0x7f8] sm:$0xff]
        %2581 = vmatpush.msra.mxu0 %v2385
        %2582 = vmatpush.msra.mxu0 %v2381
        %2583 = vmatpush.msra.mxu0 %v2377
        %2584 = vmatpush.msra.mxu0 %v2373
        %2585 = vmatpush.msra.mxu0 %v2369
        %2586 = vmatpush.msra.mxu0 %v2365
        %2587 = vmatpush.msra.mxu0 %v2361
        %2588 = vmatpush.msra.mxu0 %v2357
        %2589 = vmatpush.msra.mxu0 %v2353
        %2590 = vmatpush.msra.mxu0 %v2349
        %2591 = vmatpush.msra.mxu0 %v2345
        %2592 = vmatpush.msra.mxu0 %v2341
        %2593 = vmatpush.msra.mxu0 %v2337
        %2594 = vmatpush.msra.mxu0 %v2333
        %2595 = vmatpush.msra.mxu0 %v2329
        %2596 = vmatpush.msra.mxu0 %v2325
        %2597 = vmatmul.f32.gmra.mxu0 %v2297
        %v2598 = vpop.f32.mrf.mxu0
        %v2599 = vadd.f32 0.0, %v2598
        %2600 = vmatmul.f32.gmra.mxu0 %v2301
        %v2601 = vpop.f32.mrf.mxu0
        %v2602 = vadd.f32 0.0, %v2601
        %2603 = vmatmul.f32.gmra.mxu0 %v2305
        %v2604 = vpop.f32.mrf.mxu0
        %v2605 = vadd.f32 0.0, %v2604
        %2606 = vmatmul.f32.gmra.mxu0 %v2309
        %v2607 = vpop.f32.mrf.mxu0
        %v2608 = vadd.f32 0.0, %v2607
        %2609 = vmatmul.f32.gmra.mxu0 %v2313
        %v2610 = vpop.f32.mrf.mxu0
        %v2611 = vadd.f32 0.0, %v2610
        %2612 = vmatmul.f32.gmra.mxu0 %v2317
        %v2613 = vpop.f32.mrf.mxu0
        %v2614 = vadd.f32 0.0, %v2613
        %2615 = vmatmul.f32.gmra.mxu0 %v2321
        %v2616 = vpop.f32.mrf.mxu0
        %v2617 = vadd.f32 0.0, %v2616
        %2618 = vdwg.mxu0
        %2619 = vmatpush.msra.mxu0 %v2449
        %2620 = vmatpush.msra.mxu0 %v2445
        %2621 = vmatpush.msra.mxu0 %v2441
        %2622 = vmatpush.msra.mxu0 %v2437
        %2623 = vmatpush.msra.mxu0 %v2433
        %2624 = vmatpush.msra.mxu0 %v2429
        %2625 = vmatpush.msra.mxu0 %v2425
        %2626 = vmatpush.msra.mxu0 %v2421
        %2627 = vmatpush.msra.mxu0 %v2417
        %2628 = vmatpush.msra.mxu0 %v2413
        %2629 = vmatpush.msra.mxu0 %v2409
        %2630 = vmatpush.msra.mxu0 %v2405
        %2631 = vmatpush.msra.mxu0 %v2401
        %2632 = vmatpush.msra.mxu0 %v2397
        %2633 = vmatpush.msra.mxu0 %v2393
        %2634 = vmatpush.msra.mxu0 %v2389
        %2635 = vmatmul.f32.gmra.mxu0 %v2298
        %v2636 = vpop.f32.mrf.mxu0
        %v2637 = vadd.f32 %v2599, %v2636
        %2638 = vmatmul.f32.gmra.mxu0 %v2302
        %v2639 = vpop.f32.mrf.mxu0
        %v2640 = vadd.f32 %v2602, %v2639
        %2641 = vmatmul.f32.gmra.mxu0 %v2306
        %v2642 = vpop.f32.mrf.mxu0
        %v2643 = vadd.f32 %v2605, %v2642
        %2644 = vmatmul.f32.gmra.mxu0 %v2310
        %v2645 = vpop.f32.mrf.mxu0
        %v2646 = vadd.f32 %v2608, %v2645
        %2647 = vmatmul.f32.gmra.mxu0 %v2314
        %v2648 = vpop.f32.mrf.mxu0
        %v2649 = vadd.f32 %v2611, %v2648
        %2650 = vmatmul.f32.gmra.mxu0 %v2318
        %v2651 = vpop.f32.mrf.mxu0
        %v2652 = vadd.f32 %v2614, %v2651
        %2653 = vmatmul.f32.gmra.mxu0 %v2322
        %v2654 = vpop.f32.mrf.mxu0
        %v2655 = vadd.f32 %v2617, %v2654
        %2656 = vdwg.mxu0
        %2657 = vmatpush.msra.mxu0 %v2513
        %2658 = vmatpush.msra.mxu0 %v2509
        %2659 = vmatpush.msra.mxu0 %v2505
        %2660 = vmatpush.msra.mxu0 %v2501
        %2661 = vmatpush.msra.mxu0 %v2497
        %2662 = vmatpush.msra.mxu0 %v2493
        %2663 = vmatpush.msra.mxu0 %v2489
        %2664 = vmatpush.msra.mxu0 %v2485
        %2665 = vmatpush.msra.mxu0 %v2481
        %2666 = vmatpush.msra.mxu0 %v2477
        %2667 = vmatpush.msra.mxu0 %v2473
        %2668 = vmatpush.msra.mxu0 %v2469
        %2669 = vmatpush.msra.mxu0 %v2465
        %2670 = vmatpush.msra.mxu0 %v2461
        %2671 = vmatpush.msra.mxu0 %v2457
        %2672 = vmatpush.msra.mxu0 %v2453
        %2673 = vmatmul.f32.gmra.mxu0 %v2299
        %v2674 = vpop.f32.mrf.mxu0
        %v2675 = vadd.f32 %v2637, %v2674
        %2676 = vmatmul.f32.gmra.mxu0 %v2303
        %v2677 = vpop.f32.mrf.mxu0
        %v2678 = vadd.f32 %v2640, %v2677
        %2679 = vmatmul.f32.gmra.mxu0 %v2307
        %v2680 = vpop.f32.mrf.mxu0
        %v2681 = vadd.f32 %v2643, %v2680
        %2682 = vmatmul.f32.gmra.mxu0 %v2311
        %v2683 = vpop.f32.mrf.mxu0
        %v2684 = vadd.f32 %v2646, %v2683
        %2685 = vmatmul.f32.gmra.mxu0 %v2315
        %v2686 = vpop.f32.mrf.mxu0
        %v2687 = vadd.f32 %v2649, %v2686
        %2688 = vmatmul.f32.gmra.mxu0 %v2319
        %v2689 = vpop.f32.mrf.mxu0
        %v2690 = vadd.f32 %v2652, %v2689
        %2691 = vmatmul.f32.gmra.mxu0 %v2323
        %v2692 = vpop.f32.mrf.mxu0
        %v2693 = vadd.f32 %v2655, %v2692
        %2694 = vdwg.mxu0
        %2695 = vmatpush.msra.mxu0 %v2577
        %2696 = vmatpush.msra.mxu0 %v2573
        %2697 = vmatpush.msra.mxu0 %v2569
        %2698 = vmatpush.msra.mxu0 %v2565
        %2699 = vmatpush.msra.mxu0 %v2561
        %2700 = vmatpush.msra.mxu0 %v2557
        %2701 = vmatpush.msra.mxu0 %v2553
        %2702 = vmatpush.msra.mxu0 %v2549
        %2703 = vmatpush.msra.mxu0 %v2545
        %2704 = vmatpush.msra.mxu0 %v2541
        %2705 = vmatpush.msra.mxu0 %v2537
        %2706 = vmatpush.msra.mxu0 %v2533
        %2707 = vmatpush.msra.mxu0 %v2529
        %2708 = vmatpush.msra.mxu0 %v2525
        %2709 = vmatpush.msra.mxu0 %v2521
        %2710 = vmatpush.msra.mxu0 %v2517
        %2711 = vmatmul.f32.gmra.mxu0 %v2300
        %v2712 = vpop.f32.mrf.mxu0
        %v2713 = vadd.f32 %v2675, %v2712
        %2714 = vmatmul.f32.gmra.mxu0 %v2304
        %v2715 = vpop.f32.mrf.mxu0
        %v2716 = vadd.f32 %v2678, %v2715
        %2717 = vmatmul.f32.gmra.mxu0 %v2308
        %v2718 = vpop.f32.mrf.mxu0
        %v2719 = vadd.f32 %v2681, %v2718
        %2720 = vmatmul.f32.gmra.mxu0 %v2312
        %v2721 = vpop.f32.mrf.mxu0
        %v2722 = vadd.f32 %v2684, %v2721
        %2723 = vmatmul.f32.gmra.mxu0 %v2316
        %v2724 = vpop.f32.mrf.mxu0
        %v2725 = vadd.f32 %v2687, %v2724
        %2726 = vmatmul.f32.gmra.mxu0 %v2320
        %v2727 = vpop.f32.mrf.mxu0
        %v2728 = vadd.f32 %v2690, %v2727
        %2729 = vmatmul.f32.gmra.mxu0 %v2324
        %v2730 = vpop.f32.mrf.mxu0
        %v2731 = vadd.f32 %v2693, %v2730
        %2732 = vdwg.mxu0
        %2733 = vmatpush.msra.mxu0 %v2386
        %2734 = vmatpush.msra.mxu0 %v2382
        %2735 = vmatpush.msra.mxu0 %v2378
        %2736 = vmatpush.msra.mxu0 %v2374
        %2737 = vmatpush.msra.mxu0 %v2370
        %2738 = vmatpush.msra.mxu0 %v2366
        %2739 = vmatpush.msra.mxu0 %v2362
        %2740 = vmatpush.msra.mxu0 %v2358
        %2741 = vmatpush.msra.mxu0 %v2354
        %2742 = vmatpush.msra.mxu0 %v2350
        %2743 = vmatpush.msra.mxu0 %v2346
        %2744 = vmatpush.msra.mxu0 %v2342
        %2745 = vmatpush.msra.mxu0 %v2338
        %2746 = vmatpush.msra.mxu0 %v2334
        %2747 = vmatpush.msra.mxu0 %v2330
        %2748 = vmatpush.msra.mxu0 %v2326
        %2749 = vmatmul.f32.gmra.mxu0 %v2297
        %v2750 = vpop.f32.mrf.mxu0
        %v2751 = vadd.f32 0.0, %v2750
        %2752 = vmatmul.f32.gmra.mxu0 %v2301
        %v2753 = vpop.f32.mrf.mxu0
        %v2754 = vadd.f32 0.0, %v2753
        %2755 = vmatmul.f32.gmra.mxu0 %v2305
        %v2756 = vpop.f32.mrf.mxu0
        %v2757 = vadd.f32 0.0, %v2756
        %2758 = vmatmul.f32.gmra.mxu0 %v2309
        %v2759 = vpop.f32.mrf.mxu0
        %v2760 = vadd.f32 0.0, %v2759
        %2761 = vmatmul.f32.gmra.mxu0 %v2313
        %v2762 = vpop.f32.mrf.mxu0
        %v2763 = vadd.f32 0.0, %v2762
        %2764 = vmatmul.f32.gmra.mxu0 %v2317
        %v2765 = vpop.f32.mrf.mxu0
        %v2766 = vadd.f32 0.0, %v2765
        %2767 = vmatmul.f32.gmra.mxu0 %v2321
        %v2768 = vpop.f32.mrf.mxu0
        %v2769 = vadd.f32 0.0, %v2768
        %2770 = vdwg.mxu0
        %2771 = vmatpush.msra.mxu0 %v2450
        %2772 = vmatpush.msra.mxu0 %v2446
        %2773 = vmatpush.msra.mxu0 %v2442
        %2774 = vmatpush.msra.mxu0 %v2438
        %2775 = vmatpush.msra.mxu0 %v2434
        %2776 = vmatpush.msra.mxu0 %v2430
        %2777 = vmatpush.msra.mxu0 %v2426
        %2778 = vmatpush.msra.mxu0 %v2422
        %2779 = vmatpush.msra.mxu0 %v2418
        %2780 = vmatpush.msra.mxu0 %v2414
        %2781 = vmatpush.msra.mxu0 %v2410
        %2782 = vmatpush.msra.mxu0 %v2406
        %2783 = vmatpush.msra.mxu0 %v2402
        %2784 = vmatpush.msra.mxu0 %v2398
        %2785 = vmatpush.msra.mxu0 %v2394
        %2786 = vmatpush.msra.mxu0 %v2390
        %2787 = vmatmul.f32.gmra.mxu0 %v2298
        %v2788 = vpop.f32.mrf.mxu0
        %v2789 = vadd.f32 %v2751, %v2788
        %2790 = vmatmul.f32.gmra.mxu0 %v2302
        %v2791 = vpop.f32.mrf.mxu0
        %v2792 = vadd.f32 %v2754, %v2791
        %2793 = vmatmul.f32.gmra.mxu0 %v2306
        %v2794 = vpop.f32.mrf.mxu0
        %v2795 = vadd.f32 %v2757, %v2794
        %2796 = vmatmul.f32.gmra.mxu0 %v2310
        %v2797 = vpop.f32.mrf.mxu0
        %v2798 = vadd.f32 %v2760, %v2797
        %2799 = vmatmul.f32.gmra.mxu0 %v2314
        %v2800 = vpop.f32.mrf.mxu0
        %v2801 = vadd.f32 %v2763, %v2800
        %2802 = vmatmul.f32.gmra.mxu0 %v2318
        %v2803 = vpop.f32.mrf.mxu0
        %v2804 = vadd.f32 %v2766, %v2803
        %2805 = vmatmul.f32.gmra.mxu0 %v2322
        %v2806 = vpop.f32.mrf.mxu0
        %v2807 = vadd.f32 %v2769, %v2806
        %2808 = vdwg.mxu0
        %2809 = vmatpush.msra.mxu0 %v2514
        %2810 = vmatpush.msra.mxu0 %v2510
        %2811 = vmatpush.msra.mxu0 %v2506
        %2812 = vmatpush.msra.mxu0 %v2502
        %2813 = vmatpush.msra.mxu0 %v2498
        %2814 = vmatpush.msra.mxu0 %v2494
        %2815 = vmatpush.msra.mxu0 %v2490
        %2816 = vmatpush.msra.mxu0 %v2486
        %2817 = vmatpush.msra.mxu0 %v2482
        %2818 = vmatpush.msra.mxu0 %v2478
        %2819 = vmatpush.msra.mxu0 %v2474
        %2820 = vmatpush.msra.mxu0 %v2470
        %2821 = vmatpush.msra.mxu0 %v2466
        %2822 = vmatpush.msra.mxu0 %v2462
        %2823 = vmatpush.msra.mxu0 %v2458
        %2824 = vmatpush.msra.mxu0 %v2454
        %2825 = vmatmul.f32.gmra.mxu0 %v2299
        %v2826 = vpop.f32.mrf.mxu0
        %v2827 = vadd.f32 %v2789, %v2826
        %2828 = vmatmul.f32.gmra.mxu0 %v2303
        %v2829 = vpop.f32.mrf.mxu0
        %v2830 = vadd.f32 %v2792, %v2829
        %2831 = vmatmul.f32.gmra.mxu0 %v2307
        %v2832 = vpop.f32.mrf.mxu0
        %v2833 = vadd.f32 %v2795, %v2832
        %2834 = vmatmul.f32.gmra.mxu0 %v2311
        %v2835 = vpop.f32.mrf.mxu0
        %v2836 = vadd.f32 %v2798, %v2835
        %2837 = vmatmul.f32.gmra.mxu0 %v2315
        %v2838 = vpop.f32.mrf.mxu0
        %v2839 = vadd.f32 %v2801, %v2838
        %2840 = vmatmul.f32.gmra.mxu0 %v2319
        %v2841 = vpop.f32.mrf.mxu0
        %v2842 = vadd.f32 %v2804, %v2841
        %2843 = vmatmul.f32.gmra.mxu0 %v2323
        %v2844 = vpop.f32.mrf.mxu0
        %v2845 = vadd.f32 %v2807, %v2844
        %2846 = vdwg.mxu0
        %2847 = vmatpush.msra.mxu0 %v2578
        %2848 = vmatpush.msra.mxu0 %v2574
        %2849 = vmatpush.msra.mxu0 %v2570
        %2850 = vmatpush.msra.mxu0 %v2566
        %2851 = vmatpush.msra.mxu0 %v2562
        %2852 = vmatpush.msra.mxu0 %v2558
        %2853 = vmatpush.msra.mxu0 %v2554
        %2854 = vmatpush.msra.mxu0 %v2550
        %2855 = vmatpush.msra.mxu0 %v2546
        %2856 = vmatpush.msra.mxu0 %v2542
        %2857 = vmatpush.msra.mxu0 %v2538
        %2858 = vmatpush.msra.mxu0 %v2534
        %2859 = vmatpush.msra.mxu0 %v2530
        %2860 = vmatpush.msra.mxu0 %v2526
        %2861 = vmatpush.msra.mxu0 %v2522
        %2862 = vmatpush.msra.mxu0 %v2518
        %2863 = vmatmul.f32.gmra.mxu0 %v2300
        %v2864 = vpop.f32.mrf.mxu0
        %v2865 = vadd.f32 %v2827, %v2864
        %2866 = vmatmul.f32.gmra.mxu0 %v2304
        %v2867 = vpop.f32.mrf.mxu0
        %v2868 = vadd.f32 %v2830, %v2867
        %2869 = vmatmul.f32.gmra.mxu0 %v2308
        %v2870 = vpop.f32.mrf.mxu0
        %v2871 = vadd.f32 %v2833, %v2870
        %2872 = vmatmul.f32.gmra.mxu0 %v2312
        %v2873 = vpop.f32.mrf.mxu0
        %v2874 = vadd.f32 %v2836, %v2873
        %2875 = vmatmul.f32.gmra.mxu0 %v2316
        %v2876 = vpop.f32.mrf.mxu0
        %v2877 = vadd.f32 %v2839, %v2876
        %2878 = vmatmul.f32.gmra.mxu0 %v2320
        %v2879 = vpop.f32.mrf.mxu0
        %v2880 = vadd.f32 %v2842, %v2879
        %2881 = vmatmul.f32.gmra.mxu0 %v2324
        %v2882 = vpop.f32.mrf.mxu0
        %v2883 = vadd.f32 %v2845, %v2882
        %2884 = vdwg.mxu0
        %2885 = vmatpush.msra.mxu0 %v2387
        %2886 = vmatpush.msra.mxu0 %v2383
        %2887 = vmatpush.msra.mxu0 %v2379
        %2888 = vmatpush.msra.mxu0 %v2375
        %2889 = vmatpush.msra.mxu0 %v2371
        %2890 = vmatpush.msra.mxu0 %v2367
        %2891 = vmatpush.msra.mxu0 %v2363
        %2892 = vmatpush.msra.mxu0 %v2359
        %2893 = vmatpush.msra.mxu0 %v2355
        %2894 = vmatpush.msra.mxu0 %v2351
        %2895 = vmatpush.msra.mxu0 %v2347
        %2896 = vmatpush.msra.mxu0 %v2343
        %2897 = vmatpush.msra.mxu0 %v2339
        %2898 = vmatpush.msra.mxu0 %v2335
        %2899 = vmatpush.msra.mxu0 %v2331
        %2900 = vmatpush.msra.mxu0 %v2327
        %2901 = vmatmul.f32.gmra.mxu0 %v2297
        %v2902 = vpop.f32.mrf.mxu0
        %v2903 = vadd.f32 0.0, %v2902
        %2904 = vmatmul.f32.gmra.mxu0 %v2301
        %v2905 = vpop.f32.mrf.mxu0
        %v2906 = vadd.f32 0.0, %v2905
        %2907 = vmatmul.f32.gmra.mxu0 %v2305
        %v2908 = vpop.f32.mrf.mxu0
        %v2909 = vadd.f32 0.0, %v2908
        %2910 = vmatmul.f32.gmra.mxu0 %v2309
        %v2911 = vpop.f32.mrf.mxu0
        %v2912 = vadd.f32 0.0, %v2911
        %2913 = vmatmul.f32.gmra.mxu0 %v2313
        %v2914 = vpop.f32.mrf.mxu0
        %v2915 = vadd.f32 0.0, %v2914
        %2916 = vmatmul.f32.gmra.mxu0 %v2317
        %v2917 = vpop.f32.mrf.mxu0
        %v2918 = vadd.f32 0.0, %v2917
        %2919 = vmatmul.f32.gmra.mxu0 %v2321
        %v2920 = vpop.f32.mrf.mxu0
        %v2921 = vadd.f32 0.0, %v2920
        %2922 = vdwg.mxu0
        %2923 = vmatpush.msra.mxu0 %v2451
        %2924 = vmatpush.msra.mxu0 %v2447
        %2925 = vmatpush.msra.mxu0 %v2443
        %2926 = vmatpush.msra.mxu0 %v2439
        %2927 = vmatpush.msra.mxu0 %v2435
        %2928 = vmatpush.msra.mxu0 %v2431
        %2929 = vmatpush.msra.mxu0 %v2427
        %2930 = vmatpush.msra.mxu0 %v2423
        %2931 = vmatpush.msra.mxu0 %v2419
        %2932 = vmatpush.msra.mxu0 %v2415
        %2933 = vmatpush.msra.mxu0 %v2411
        %2934 = vmatpush.msra.mxu0 %v2407
        %2935 = vmatpush.msra.mxu0 %v2403
        %2936 = vmatpush.msra.mxu0 %v2399
        %2937 = vmatpush.msra.mxu0 %v2395
        %2938 = vmatpush.msra.mxu0 %v2391
        %2939 = vmatmul.f32.gmra.mxu0 %v2298
        %v2940 = vpop.f32.mrf.mxu0
        %v2941 = vadd.f32 %v2903, %v2940
        %2942 = vmatmul.f32.gmra.mxu0 %v2302
        %v2943 = vpop.f32.mrf.mxu0
        %v2944 = vadd.f32 %v2906, %v2943
        %2945 = vmatmul.f32.gmra.mxu0 %v2306
        %v2946 = vpop.f32.mrf.mxu0
        %v2947 = vadd.f32 %v2909, %v2946
        %2948 = vmatmul.f32.gmra.mxu0 %v2310
        %v2949 = vpop.f32.mrf.mxu0
        %v2950 = vadd.f32 %v2912, %v2949
        %2951 = vmatmul.f32.gmra.mxu0 %v2314
        %v2952 = vpop.f32.mrf.mxu0
        %v2953 = vadd.f32 %v2915, %v2952
        %2954 = vmatmul.f32.gmra.mxu0 %v2318
        %v2955 = vpop.f32.mrf.mxu0
        %v2956 = vadd.f32 %v2918, %v2955
        %2957 = vmatmul.f32.gmra.mxu0 %v2322
        %v2958 = vpop.f32.mrf.mxu0
        %v2959 = vadd.f32 %v2921, %v2958
        %2960 = vdwg.mxu0
        %2961 = vmatpush.msra.mxu0 %v2515
        %2962 = vmatpush.msra.mxu0 %v2511
        %2963 = vmatpush.msra.mxu0 %v2507
        %2964 = vmatpush.msra.mxu0 %v2503
        %2965 = vmatpush.msra.mxu0 %v2499
        %2966 = vmatpush.msra.mxu0 %v2495
        %2967 = vmatpush.msra.mxu0 %v2491
        %2968 = vmatpush.msra.mxu0 %v2487
        %2969 = vmatpush.msra.mxu0 %v2483
        %2970 = vmatpush.msra.mxu0 %v2479
        %2971 = vmatpush.msra.mxu0 %v2475
        %2972 = vmatpush.msra.mxu0 %v2471
        %2973 = vmatpush.msra.mxu0 %v2467
        %2974 = vmatpush.msra.mxu0 %v2463
        %2975 = vmatpush.msra.mxu0 %v2459
        %2976 = vmatpush.msra.mxu0 %v2455
        %2977 = vmatmul.f32.gmra.mxu0 %v2299
        %v2978 = vpop.f32.mrf.mxu0
        %v2979 = vadd.f32 %v2941, %v2978
        %2980 = vmatmul.f32.gmra.mxu0 %v2303
        %v2981 = vpop.f32.mrf.mxu0
        %v2982 = vadd.f32 %v2944, %v2981
        %2983 = vmatmul.f32.gmra.mxu0 %v2307
        %v2984 = vpop.f32.mrf.mxu0
        %v2985 = vadd.f32 %v2947, %v2984
        %2986 = vmatmul.f32.gmra.mxu0 %v2311
        %v2987 = vpop.f32.mrf.mxu0
        %v2988 = vadd.f32 %v2950, %v2987
        %2989 = vmatmul.f32.gmra.mxu0 %v2315
        %v2990 = vpop.f32.mrf.mxu0
        %v2991 = vadd.f32 %v2953, %v2990
        %2992 = vmatmul.f32.gmra.mxu0 %v2319
        %v2993 = vpop.f32.mrf.mxu0
        %v2994 = vadd.f32 %v2956, %v2993
        %2995 = vmatmul.f32.gmra.mxu0 %v2323
        %v2996 = vpop.f32.mrf.mxu0
        %v2997 = vadd.f32 %v2959, %v2996
        %2998 = vdwg.mxu0
        %2999 = vmatpush.msra.mxu0 %v2579
        %3000 = vmatpush.msra.mxu0 %v2575
        %3001 = vmatpush.msra.mxu0 %v2571
        %3002 = vmatpush.msra.mxu0 %v2567
        %3003 = vmatpush.msra.mxu0 %v2563
        %3004 = vmatpush.msra.mxu0 %v2559
        %3005 = vmatpush.msra.mxu0 %v2555
        %3006 = vmatpush.msra.mxu0 %v2551
        %3007 = vmatpush.msra.mxu0 %v2547
        %3008 = vmatpush.msra.mxu0 %v2543
        %3009 = vmatpush.msra.mxu0 %v2539
        %3010 = vmatpush.msra.mxu0 %v2535
        %3011 = vmatpush.msra.mxu0 %v2531
        %3012 = vmatpush.msra.mxu0 %v2527
        %3013 = vmatpush.msra.mxu0 %v2523
        %3014 = vmatpush.msra.mxu0 %v2519
        %3015 = vmatmul.f32.gmra.mxu0 %v2300
        %v3016 = vpop.f32.mrf.mxu0
        %v3017 = vadd.f32 %v2979, %v3016
        %3018 = vmatmul.f32.gmra.mxu0 %v2304
        %v3019 = vpop.f32.mrf.mxu0
        %v3020 = vadd.f32 %v2982, %v3019
        %3021 = vmatmul.f32.gmra.mxu0 %v2308
        %v3022 = vpop.f32.mrf.mxu0
        %v3023 = vadd.f32 %v2985, %v3022
        %3024 = vmatmul.f32.gmra.mxu0 %v2312
        %v3025 = vpop.f32.mrf.mxu0
        %v3026 = vadd.f32 %v2988, %v3025
        %3027 = vmatmul.f32.gmra.mxu0 %v2316
        %v3028 = vpop.f32.mrf.mxu0
        %v3029 = vadd.f32 %v2991, %v3028
        %3030 = vmatmul.f32.gmra.mxu0 %v2320
        %v3031 = vpop.f32.mrf.mxu0
        %v3032 = vadd.f32 %v2994, %v3031
        %3033 = vmatmul.f32.gmra.mxu0 %v2324
        %v3034 = vpop.f32.mrf.mxu0
        %v3035 = vadd.f32 %v2997, %v3034
        %3036 = vdwg.mxu0
        %3037 = vmatpush.msra.mxu0 %v2388
        %3038 = vmatpush.msra.mxu0 %v2384
        %3039 = vmatpush.msra.mxu0 %v2380
        %3040 = vmatpush.msra.mxu0 %v2376
        %3041 = vmatpush.msra.mxu0 %v2372
        %3042 = vmatpush.msra.mxu0 %v2368
        %3043 = vmatpush.msra.mxu0 %v2364
        %3044 = vmatpush.msra.mxu0 %v2360
        %3045 = vmatpush.msra.mxu0 %v2356
        %3046 = vmatpush.msra.mxu0 %v2352
        %3047 = vmatpush.msra.mxu0 %v2348
        %3048 = vmatpush.msra.mxu0 %v2344
        %3049 = vmatpush.msra.mxu0 %v2340
        %3050 = vmatpush.msra.mxu0 %v2336
        %3051 = vmatpush.msra.mxu0 %v2332
        %3052 = vmatpush.msra.mxu0 %v2328
        %3053 = vmatmul.f32.gmra.mxu0 %v2297
        %v3054 = vpop.f32.mrf.mxu0
        %v3055 = vadd.f32 0.0, %v3054
        %3056 = vmatmul.f32.gmra.mxu0 %v2301
        %v3057 = vpop.f32.mrf.mxu0
        %v3058 = vadd.f32 0.0, %v3057
        %3059 = vmatmul.f32.gmra.mxu0 %v2305
        %v3060 = vpop.f32.mrf.mxu0
        %v3061 = vadd.f32 0.0, %v3060
        %3062 = vmatmul.f32.gmra.mxu0 %v2309
        %v3063 = vpop.f32.mrf.mxu0
        %v3064 = vadd.f32 0.0, %v3063
        %3065 = vmatmul.f32.gmra.mxu0 %v2313
        %v3066 = vpop.f32.mrf.mxu0
        %v3067 = vadd.f32 0.0, %v3066
        %3068 = vmatmul.f32.gmra.mxu0 %v2317
        %v3069 = vpop.f32.mrf.mxu0
        %v3070 = vadd.f32 0.0, %v3069
        %3071 = vmatmul.f32.gmra.mxu0 %v2321
        %v3072 = vpop.f32.mrf.mxu0
        %v3073 = vadd.f32 0.0, %v3072
        %3074 = vdwg.mxu0
        %3075 = vmatpush.msra.mxu0 %v2452
        %3076 = vmatpush.msra.mxu0 %v2448
        %3077 = vmatpush.msra.mxu0 %v2444
        %3078 = vmatpush.msra.mxu0 %v2440
        %3079 = vmatpush.msra.mxu0 %v2436
        %3080 = vmatpush.msra.mxu0 %v2432
        %3081 = vmatpush.msra.mxu0 %v2428
        %3082 = vmatpush.msra.mxu0 %v2424
        %3083 = vmatpush.msra.mxu0 %v2420
        %3084 = vmatpush.msra.mxu0 %v2416
        %3085 = vmatpush.msra.mxu0 %v2412
        %3086 = vmatpush.msra.mxu0 %v2408
        %3087 = vmatpush.msra.mxu0 %v2404
        %3088 = vmatpush.msra.mxu0 %v2400
        %3089 = vmatpush.msra.mxu0 %v2396
        %3090 = vmatpush.msra.mxu0 %v2392
        %3091 = vmatmul.f32.gmra.mxu0 %v2298
        %v3092 = vpop.f32.mrf.mxu0
        %v3093 = vadd.f32 %v3055, %v3092
        %3094 = vmatmul.f32.gmra.mxu0 %v2302
        %v3095 = vpop.f32.mrf.mxu0
        %v3096 = vadd.f32 %v3058, %v3095
        %3097 = vmatmul.f32.gmra.mxu0 %v2306
        %v3098 = vpop.f32.mrf.mxu0
        %v3099 = vadd.f32 %v3061, %v3098
        %3100 = vmatmul.f32.gmra.mxu0 %v2310
        %v3101 = vpop.f32.mrf.mxu0
        %v3102 = vadd.f32 %v3064, %v3101
        %3103 = vmatmul.f32.gmra.mxu0 %v2314
        %v3104 = vpop.f32.mrf.mxu0
        %v3105 = vadd.f32 %v3067, %v3104
        %3106 = vmatmul.f32.gmra.mxu0 %v2318
        %v3107 = vpop.f32.mrf.mxu0
        %v3108 = vadd.f32 %v3070, %v3107
        %3109 = vmatmul.f32.gmra.mxu0 %v2322
        %v3110 = vpop.f32.mrf.mxu0
        %v3111 = vadd.f32 %v3073, %v3110
        %3112 = vdwg.mxu0
        %3113 = vmatpush.msra.mxu0 %v2516
        %3114 = vmatpush.msra.mxu0 %v2512
        %3115 = vmatpush.msra.mxu0 %v2508
        %3116 = vmatpush.msra.mxu0 %v2504
        %3117 = vmatpush.msra.mxu0 %v2500
        %3118 = vmatpush.msra.mxu0 %v2496
        %3119 = vmatpush.msra.mxu0 %v2492
        %3120 = vmatpush.msra.mxu0 %v2488
        %3121 = vmatpush.msra.mxu0 %v2484
        %3122 = vmatpush.msra.mxu0 %v2480
        %3123 = vmatpush.msra.mxu0 %v2476
        %3124 = vmatpush.msra.mxu0 %v2472
        %3125 = vmatpush.msra.mxu0 %v2468
        %3126 = vmatpush.msra.mxu0 %v2464
        %3127 = vmatpush.msra.mxu0 %v2460
        %3128 = vmatpush.msra.mxu0 %v2456
        %3129 = vmatmul.f32.gmra.mxu0 %v2299
        %v3130 = vpop.f32.mrf.mxu0
        %v3131 = vadd.f32 %v3093, %v3130
        %3132 = vmatmul.f32.gmra.mxu0 %v2303
        %v3133 = vpop.f32.mrf.mxu0
        %v3134 = vadd.f32 %v3096, %v3133
        %3135 = vmatmul.f32.gmra.mxu0 %v2307
        %v3136 = vpop.f32.mrf.mxu0
        %v3137 = vadd.f32 %v3099, %v3136
        %3138 = vmatmul.f32.gmra.mxu0 %v2311
        %v3139 = vpop.f32.mrf.mxu0
        %v3140 = vadd.f32 %v3102, %v3139
        %3141 = vmatmul.f32.gmra.mxu0 %v2315
        %v3142 = vpop.f32.mrf.mxu0
        %v3143 = vadd.f32 %v3105, %v3142
        %3144 = vmatmul.f32.gmra.mxu0 %v2319
        %v3145 = vpop.f32.mrf.mxu0
        %v3146 = vadd.f32 %v3108, %v3145
        %3147 = vmatmul.f32.gmra.mxu0 %v2323
        %v3148 = vpop.f32.mrf.mxu0
        %v3149 = vadd.f32 %v3111, %v3148
        %3150 = vdwg.mxu0
        %3151 = vmatpush.msra.mxu0 %v2580
        %3152 = vmatpush.msra.mxu0 %v2576
        %3153 = vmatpush.msra.mxu0 %v2572
        %3154 = vmatpush.msra.mxu0 %v2568
        %3155 = vmatpush.msra.mxu0 %v2564
        %3156 = vmatpush.msra.mxu0 %v2560
        %3157 = vmatpush.msra.mxu0 %v2556
        %3158 = vmatpush.msra.mxu0 %v2552
        %3159 = vmatpush.msra.mxu0 %v2548
        %3160 = vmatpush.msra.mxu0 %v2544
        %3161 = vmatpush.msra.mxu0 %v2540
        %3162 = vmatpush.msra.mxu0 %v2536
        %3163 = vmatpush.msra.mxu0 %v2532
        %3164 = vmatpush.msra.mxu0 %v2528
        %3165 = vmatpush.msra.mxu0 %v2524
        %3166 = vmatpush.msra.mxu0 %v2520
        %3167 = vmatmul.f32.gmra.mxu0 %v2300
        %v3168 = vpop.f32.mrf.mxu0
        %v3169 = vadd.f32 %v3131, %v3168
        %3170 = vmatmul.f32.gmra.mxu0 %v2304
        %v3171 = vpop.f32.mrf.mxu0
        %v3172 = vadd.f32 %v3134, %v3171
        %3173 = vmatmul.f32.gmra.mxu0 %v2308
        %v3174 = vpop.f32.mrf.mxu0
        %v3175 = vadd.f32 %v3137, %v3174
        %3176 = vmatmul.f32.gmra.mxu0 %v2312
        %v3177 = vpop.f32.mrf.mxu0
        %v3178 = vadd.f32 %v3140, %v3177
        %3179 = vmatmul.f32.gmra.mxu0 %v2316
        %v3180 = vpop.f32.mrf.mxu0
        %v3181 = vadd.f32 %v3143, %v3180
        %3182 = vmatmul.f32.gmra.mxu0 %v2320
        %v3183 = vpop.f32.mrf.mxu0
        %v3184 = vadd.f32 %v3146, %v3183
        %3185 = vmatmul.f32.gmra.mxu0 %v2324
        %v3186 = vpop.f32.mrf.mxu0
        %v3187 = vadd.f32 %v3149, %v3186
        %3188 = vdwg.mxu0
        %v3189 = vmul.f32 %v2713, %v2297
        %v3190 = vmul.f32 %v2865, %v2298
        %v3191 = vmul.f32 %v3017, %v2299
        %v3192 = vmul.f32 %v3169, %v2300
        %v3193 = vmul.f32 %v2716, %v2301
        %v3194 = vmul.f32 %v2868, %v2302
        %v3195 = vmul.f32 %v3020, %v2303
        %v3196 = vmul.f32 %v3172, %v2304
        %v3197 = vmul.f32 %v2719, %v2305
        %v3198 = vmul.f32 %v2871, %v2306
        %v3199 = vmul.f32 %v3023, %v2307
        %v3200 = vmul.f32 %v3175, %v2308
        %v3201 = vmul.f32 %v2722, %v2309
        %v3202 = vmul.f32 %v2874, %v2310
        %v3203 = vmul.f32 %v3026, %v2311
        %v3204 = vmul.f32 %v3178, %v2312
        %v3205 = vmul.f32 %v2725, %v2313
        %v3206 = vmul.f32 %v2877, %v2314
        %v3207 = vmul.f32 %v3029, %v2315
        %v3208 = vmul.f32 %v3181, %v2316
        %v3209 = vmul.f32 %v2728, %v2317
        %v3210 = vmul.f32 %v2880, %v2318
        %v3211 = vmul.f32 %v3032, %v2319
        %v3212 = vmul.f32 %v3184, %v2320
        %v3213 = vmul.f32 %v2731, %v2321
        %v3214 = vmul.f32 %v2883, %v2322
        %v3215 = vmul.f32 %v3035, %v2323
        %v3216 = vmul.f32 %v3187, %v2324
        %v3217 = vadd.f32 %v3189, %v3190
        %v3218 = vadd.f32 %v3217, %v3191
        %v3219 = vadd.f32 %v3218, %v3192
        %3220 = vadd.xlane.f32.xlu0 %v3219
        %v3221 = vpop.xlane.xlu0 %3220
        %v3222 = vadd.f32 %v3193, %v3194
        %v3223 = vadd.f32 %v3222, %v3195
        %v3224 = vadd.f32 %v3223, %v3196
        %3225 = vadd.xlane.f32.xlu0 %v3224
        %v3226 = vpop.xlane.xlu0 %3225
        %v3227 = vadd.f32 %v3197, %v3198
        %v3228 = vadd.f32 %v3227, %v3199
        %v3229 = vadd.f32 %v3228, %v3200
        %3230 = vadd.xlane.f32.xlu0 %v3229
        %v3231 = vpop.xlane.xlu0 %3230
        %v3232 = vadd.f32 %v3201, %v3202
        %v3233 = vadd.f32 %v3232, %v3203
        %v3234 = vadd.f32 %v3233, %v3204
        %3235 = vadd.xlane.f32.xlu0 %v3234
        %v3236 = vpop.xlane.xlu0 %3235
        %v3237 = vadd.f32 %v3205, %v3206
        %v3238 = vadd.f32 %v3237, %v3207
        %v3239 = vadd.f32 %v3238, %v3208
        %3240 = vadd.xlane.f32.xlu0 %v3239
        %v3241 = vpop.xlane.xlu0 %3240
        %v3242 = vadd.f32 %v3209, %v3210
        %v3243 = vadd.f32 %v3242, %v3211
        %v3244 = vadd.f32 %v3243, %v3212
        %3245 = vadd.xlane.f32.xlu0 %v3244
        %v3246 = vpop.xlane.xlu0 %3245
        %v3247 = vadd.f32 %v3213, %v3214
        %v3248 = vadd.f32 %v3247, %v3215
        %v3249 = vadd.f32 %v3248, %v3216
        %3250 = vadd.xlane.f32.xlu0 %v3249
        %v3251 = vpop.xlane.xlu0 %3250
        %v3252 = vsub.f32 %v3221, %v2256
        %v3253 = vsub.f32 %v3226, %v2261
        %v3254 = vsub.f32 %v3231, %v2266
        %v3255 = vsub.f32 %v3236, %v2271
        %v3256 = vsub.f32 %v3241, %v2276
        %v3257 = vsub.f32 %v3246, %v2281
        %v3258 = vsub.f32 %v3251, %v2286
        %vm3259 = vcmask 7168
        %3260 = vst.msk [vmem:[%s406] sm:$0xff] %vm3259, %v3252
        %3261 = vst.msk [vmem:[%s406 + $0x8] sm:$0xff] %vm3259, %v3253
        %3262 = vst.msk [vmem:[%s406 + $0x10] sm:$0xff] %vm3259, %v3254
        %3263 = vst.msk [vmem:[%s406 + $0x18] sm:$0xff] %vm3259, %v3255
        %3264 = vst.msk [vmem:[%s406 + $0x20] sm:$0xff] %vm3259, %v3256
        %3265 = vst.msk [vmem:[%s406 + $0x28] sm:$0xff] %vm3259, %v3257
        %3266 = vst.msk [vmem:[%s406 + $0x30] sm:$0xff] %vm3259, %v3258
        %s3267 = smul.u32 7, %s24
        %p3268 = scmp.lt.s32.totalorder %s3267, 13
        %s3269 = scalar_select %p3268, %s3267, 13
        %s3270 = smul.addr %s3269, 8
        %s3271 = scalar_lea.vmem %s7, %s3270
        // Predicated region
        $region73: #{tpu_custom_call.1} parent=47 // pred_check
          %p3272 = pneg %p194
        $region74: #{tpu_custom_call.1} parent=47 // pred_check_branch
          %3274 = sbr.rel (%p3272) target = $region76
        $region75: #{tpu_custom_call.1} parent=47 // pred_region
          %s3275 = smul.u32 7, %s24
        $region76: #{tpu_custom_call.1} parent=47 // pred_fallthru
          _
      $region48: #{tpu_custom_call.1} parent=5 // pred_fallthru
        _
      %p3276 = scmp.le.s32.totalorder 2, %s19
      // Predicated region
      $region77: #{tpu_custom_call.1} parent=5 // pred_check
        %p3277 = pneg %p3276
      $region78: #{tpu_custom_call.1} parent=5 // pred_check_branch
        %3279 = sbr.rel (%p3277) target = $region80
      $region79: #{tpu_custom_call.1} parent=5 // pred_region
        %s3280 = ssub.s32 %s19, 2
        // Predicated region
        $region81: #{tpu_custom_call.1} parent=79 // pred_check
          %p3281 = pneg %p200
        $region82: #{tpu_custom_call.1} parent=79 // pred_check_branch
          %3283 = sbr.rel (%p3281) target = $region84
        $region83: #{tpu_custom_call.1} parent=79 // pred_region
          %s3284 = smul.u32 7, %s25
          %p3285 = scmp.lt.s32.totalorder %s3284, 13
          %s3286 = scalar_select %p3285, %s3284, 13
          %s3287 = smul.addr %s3286, 8
          %s3288 = scalar_lea.vmem %s7, %s3287
        $region84: #{tpu_custom_call.1} parent=79 // pred_fallthru
          _
      $region80: #{tpu_custom_call.1} parent=5 // pred_fallthru
        _
    $region6: #{tpu_custom_call.1} parent=1 // loop_footer
      %s23 = sadd.s32 1, %s19
    $region7: #{tpu_custom_call.1} parent=1 // loop_footer_branch
      %18 = sbr.rel target = $region3
    $region8: #{tpu_custom_call.1} parent=1 // loop_exit
      _
    %3289 = vsyncpa [#allocation3], 1
    %s3290 = scalar_lea.sflag [#allocation3], 1
    %3291 = vsyncpa %s3290, 1
    %3292 = vsyncpa [#allocation5], 1
    %3293 = vsyncpa [#allocation8], 1
    %3294 = vsyncpa [#allocation11], 1

</llo_original>
